<compile_context>
chip_gen: v7x
topology: tpu7x:2x2x1
jax: 0.10.0
libtpu: 0.0.40
codegen_flags: <defaults>
</compile_context>

<pallas_src>
import math
import functools

import jax
import jax.numpy as jnp
from jax.experimental import pallas as pl
from jax.experimental.pallas import tpu as pltpu

F32 = jnp.float32
BF16 = jnp.bfloat16
LN_EPS = 1e-5
VMEM_LIMIT = 48 * 1024 * 1024   # fits v7x (64 MiB/TC) as well as v5e/v6e


# ----------------------------------------------------------------------------
# helpers
# ----------------------------------------------------------------------------

def _full_spec(shape):
    """Whole-array VMEM block (weights resident across the grid)."""
    zero = (0,) * len(shape)
    return pl.BlockSpec(shape, lambda *args: zero)


def _row_tile(m):
    for cand in (256, 128, 64, 32, 16, 8):
        if m % cand == 0:
            return cand
    return m


def _col_tile(n):
    for cand in (2048, 1024, 512, 256, 128):
        if n % cand == 0:
            return cand
    return n


def _layer_norm(x, g, b):
    # f32 statistics regardless of matmul precision.
    mu = jnp.mean(x, axis=-1, keepdims=True)
    d = x - mu
    var = jnp.mean(d * d, axis=-1, keepdims=True)
    inv = jax.lax.rsqrt(var + LN_EPS)
    return d * inv * g + b


def _dotf32(a, b):
    return jnp.dot(a, b, preferred_element_type=F32)


# ----------------------------------------------------------------------------
# fused transformer block kernel (one pallas_call per block, grid over batch):
#   LN1 -> [Q | latent-KV] proj -> latent -> [K | V] proj -> causal MHA
#   -> out-proj (folded per head) -> residual
#   -> LN2 -> shared-expert FFN + router softmax/top-k + routed experts
#   -> residual
# ----------------------------------------------------------------------------

def _block_kernel(x_ref,
                  ln1g_ref, ln1b_ref,
                  wqdkv_ref, bqdkv_ref, wukv_ref, bukv_ref,
                  wo_ref, bo_ref,
                  ln2g_ref, ln2b_ref,
                  wg_ref, bg_ref,
                  w1s_ref, b1s_ref, w2s_ref, b2s_ref,
                  w1r_ref, b1r_ref, w2r_ref, b2r_ref,
                  o_ref, *, n_heads, n_routed, top_k):
    x = x_ref[0]                                   # (T, D) f32, one batch row
    T, D = x.shape
    dh = D // n_heads
    scale = 1.0 / math.sqrt(dh)

    # ---------------- attention sub-block (MLA) ----------------
    h = _layer_norm(x, ln1g_ref[...], ln1b_ref[...]).astype(BF16)

    qc = _dotf32(h, wqdkv_ref[...]) + bqdkv_ref[...]         # (T, D + nl)
    q = qc[:, :D]                                            # (T, D) f32
    c = qc[:, D:].astype(BF16)                               # (T, nl) latent
    kv = _dotf32(c, wukv_ref[...]) + bukv_ref[...]           # (T, 2D)
    k = kv[:, :D]
    v = kv[:, D:]

    row = jax.lax.broadcasted_iota(jnp.int32, (T, T), 0)
    col = jax.lax.broadcasted_iota(jnp.int32, (T, T), 1)
    causal = col <= row

    wo = wo_ref[...]                                         # bf16 (D, D)
    y = jnp.zeros((T, D), F32)
    dn = (((1,), (1,)), ((), ()))                 # contract last dims (q·kᵀ)
    for hi in range(n_heads):                      # static unroll, small H
        sl = slice(hi * dh, (hi + 1) * dh)
        qh = q[:, sl].astype(BF16)
        kh = k[:, sl].astype(BF16)
        vh = v[:, sl].astype(BF16)
        s = jax.lax.dot_general(qh, kh, dn, preferred_element_type=F32) * scale
        s = jnp.where(causal, s, -1e30)            # mask in f32 (no overflow)
        p = jax.nn.softmax(s, axis=-1)
        oh = _dotf32(p.astype(BF16), vh)           # (T, dh)
        # fold the output projection per head: attn @ Wo == Σ_h oh @ Wo[h*dh:..]
        y = y + _dotf32(oh.astype(BF16), wo[sl, :])
    x = x + y + bo_ref[...]                        # residual, f32

    # ---------------- MoE sub-block ----------------
    h2 = _layer_norm(x, ln2g_ref[...], ln2b_ref[...]).astype(BF16)

    # shared experts fused into one FFN (W1/W2 concatenated along hidden dim)
    hs = _dotf32(h2, w1s_ref[...]) + b1s_ref[...]
    hs = jax.nn.gelu(hs, approximate=True)
    moe = _dotf32(hs.astype(BF16), w2s_ref[...]) + b2s_ref[...]

    # router: softmax over routed experts, in-kernel top-k + renormalization
    logits = _dotf32(h2, wg_ref[...]) + bg_ref[...]            # (T, Nr)
    probs = jax.nn.softmax(logits, axis=-1)
    idx = jax.lax.broadcasted_iota(jnp.int32, probs.shape, 1).astype(F32)
    remaining = probs
    gates = jnp.zeros_like(probs)
    for _ in range(top_k):                          # static unroll, small top_k
        m = jnp.max(remaining, axis=-1, keepdims=True)
        cand = jnp.where(remaining >= m, idx, float(n_routed))
        first = jnp.min(cand, axis=-1, keepdims=True)   # tie-break: lowest idx
        pick = idx == first
        gates = gates + jnp.where(pick, probs, 0.0)
        remaining = jnp.where(pick, -1e30, remaining)
    gates = gates / jnp.sum(gates, axis=-1, keepdims=True)

    # routed experts, gate-weighted, accumulated in registers.
    # TODO(synk): at production N_r (64-256) replace this dense loop with a
    # scalar-prefetch grouped matmul (sort tokens by expert, group offsets via
    # PrefetchScalarGridSpec) to avoid N_r/top_k redundant FLOPs.
    for ei in range(n_routed):
        he = _dotf32(h2, w1r_ref[ei]) + b1r_ref[ei]
        he = jax.nn.gelu(he, approximate=True)
        oe = _dotf32(he.astype(BF16), w2r_ref[ei]) + b2r_ref[ei]
        moe = moe + gates[:, ei:ei + 1] * oe

    o_ref[0] = x + moe                              # residual, f32


_BLOCK_PARAM_NAMES = ("ln1_g", "ln1_b", "wqdkv", "bqdkv", "wukv", "bukv",
                      "wo", "bo", "ln2_g", "ln2_b", "wg", "bg",
                      "w1s", "b1s", "w2s", "b2s", "w1r", "b1r", "w2r", "b2r")


def transformer_block(x, p, n_heads, n_routed, top_k):
    B, T, D = x.shape
    args = [x] + [p[n] for n in _BLOCK_PARAM_NAMES]
    specs = [pl.BlockSpec((1, T, D), lambda b: (b, 0, 0))] + \
            [_full_spec(p[n].shape) for n in _BLOCK_PARAM_NAMES]
    kern = functools.partial(_block_kernel, n_heads=n_heads,
                             n_routed=n_routed, top_k=top_k)
    return pl.pallas_call(
        kern,
        out_shape=jax.ShapeDtypeStruct((B, T, D), F32),
        grid=(B,),
        in_specs=specs,
        out_specs=pl.BlockSpec((1, T, D), lambda b: (b, 0, 0)),
        compiler_params=pltpu.CompilerParams(
            dimension_semantics=("parallel",),
            vmem_limit_bytes=VMEM_LIMIT),
    )(*args)


# ----------------------------------------------------------------------------
# fused final norm + LM head, tiled over (row tile, vocab tile).
# LayerNorm is computed once per row tile into VMEM scratch (vocab index 0)
# and reused across vocab tiles.
# ----------------------------------------------------------------------------

def _norm_head_kernel(x_ref, g_ref, b_ref, w_ref, hb_ref, o_ref, h_scr):
    @pl.when(pl.program_id(1) == 0)
    def _():
        h_scr[...] = _layer_norm(x_ref[...], g_ref[...],
                                 b_ref[...]).astype(BF16)
    o_ref[...] = _dotf32(h_scr[...], w_ref[...]) + hb_ref[...]


def norm_head(x2d, g, b, w, hbias):
    M, D = x2d.shape
    V = w.shape[1]
    tm, tv = _row_tile(M), _col_tile(V)
    return pl.pallas_call(
        _norm_head_kernel,
        out_shape=jax.ShapeDtypeStruct((M, V), F32),
        grid=(M // tm, V // tv),
        in_specs=[pl.BlockSpec((tm, D), lambda i, j: (i, 0)),
                  pl.BlockSpec((1, D), lambda i, j: (0, 0)),
                  pl.BlockSpec((1, D), lambda i, j: (0, 0)),
                  pl.BlockSpec((D, tv), lambda i, j: (0, j)),
                  pl.BlockSpec((1, tv), lambda i, j: (0, j))],
        out_specs=pl.BlockSpec((tm, tv), lambda i, j: (i, j)),
        scratch_shapes=[pltpu.VMEM((tm, D), BF16)],
        compiler_params=pltpu.CompilerParams(
            dimension_semantics=("parallel", "arbitrary"),
            vmem_limit_bytes=VMEM_LIMIT),
    )(x2d, g, b, w, hbias)


# ----------------------------------------------------------------------------
# parameters + forward
# ----------------------------------------------------------------------------

def init_params(key, cfg):
    D, V, Fh = cfg["d_model"], cfg["vocab"], cfg["d_ff"]
    nl, Nr, Ns = cfg["n_latents"], cfg["N_r"], cfg["N_s"]
    keys = iter(jax.random.split(key, 4 + cfg["num_layers"] * 32))

    def nrm(shape):                       # bf16 matmul weights
        return (0.02 * jax.random.normal(next(keys), shape,
                                         dtype=F32)).astype(BF16)

    def zeros(shape):
        return jnp.zeros(shape, F32)

    def ones(shape):
        return jnp.ones(shape, F32)

    blocks = []
    for _ in range(cfg["num_layers"]):
        # Q + latent-KV down-projection fused into one matmul; latent->K and
        # latent->V fused into one matmul.
        wqdkv = jnp.concatenate([nrm((D, D)), nrm((D, nl))], axis=1)
        wukv = jnp.concatenate([nrm((nl, D)), nrm((nl, D))], axis=1)
        # shared experts fused: concat W1 along out-dim, W2 along in-dim
        w1s = jnp.concatenate([nrm((D, Fh)) for _ in range(Ns)], axis=1)
        w2s = jnp.concatenate([nrm((Fh, D)) for _ in range(Ns)], axis=0)
        blocks.append(dict(
            ln1_g=ones((1, D)), ln1_b=zeros((1, D)),
            ln2_g=ones((1, D)), ln2_b=zeros((1, D)),
            wqdkv=wqdkv, bqdkv=zeros((1, D + nl)),
            wukv=wukv, bukv=zeros((1, 2 * D)),
            wo=nrm((D, D)), bo=zeros((1, D)),
            wg=nrm((D, Nr)), bg=zeros((1, Nr)),        # router
            w1s=w1s, b1s=zeros((1, Ns * Fh)),
            w2s=w2s, b2s=zeros((1, D)),                # sum of shared b2's
            w1r=jnp.stack([nrm((D, Fh)) for _ in range(Nr)]),
            b1r=jnp.zeros((Nr, 1, Fh), F32),
            w2r=jnp.stack([nrm((Fh, D)) for _ in range(Nr)]),
            b2r=jnp.zeros((Nr, 1, D), F32),
        ))
    return dict(
        emb=(0.02 * jax.random.normal(next(keys), (V, D), dtype=F32)),
        blocks=blocks,
        norm_g=ones((1, D)), norm_b=zeros((1, D)),
        head_w=nrm((D, V)), head_b=zeros((1, V)),
    )


def deepseek_forward(params, input_ids, cfg, targets=None):
    B, T = input_ids.shape
    D, V = cfg["d_model"], cfg["vocab"]
    x = jnp.take(params["emb"], input_ids, axis=0)   # embedding gather (glue)
    for p in params["blocks"]:
        x = transformer_block(x, p, cfg["n_heads"], cfg["N_r"], cfg["top_k"])
    logits = norm_head(x.reshape(B * T, D), params["norm_g"],
                       params["norm_b"], params["head_w"],
                       params["head_b"]).reshape(B, T, V)
    # TODO(synk): targets/training path (MTP modules + cross-entropy loss) not
    # implemented; reference forward returns loss=None when targets is None.
    total_loss = None
    return logits, total_loss


# ----------------------------------------------------------------------------
# main
# ----------------------------------------------------------------------------

if __name__ == "__main__":
    cfg = dict(
        vocab=64, d_model=32, n_heads=4,
        N_s=2, N_r=4, top_k=2,
        n_latents=16, num_layers=2, d_ff=64, seq_len=8,
    )
    key = jax.random.PRNGKey(0)
    pkey, dkey = jax.random.split(key)
    params = init_params(pkey, cfg)
    input_ids = jax.random.randint(dkey, (2, cfg["seq_len"]), 0, cfg["vocab"])

    logits, loss = deepseek_forward(params, input_ids, cfg)
    logits = jax.block_until_ready(logits)

    assert logits.shape == (2, cfg["seq_len"], cfg["vocab"]), logits.shape
    assert loss is None
    assert bool(jnp.all(jnp.isfinite(logits)))
    print("KERNEL_OK")
</pallas_src>

<mosaic_0001>
module attributes {stable_mosaic.version = 11 : i64} {
  func.func @_block_kernel(%arg0: i32, %arg1: memref<1x8x32xf32, #tpu.memory_space<vmem>>, %arg2: memref<1x32xf32, #tpu.memory_space<vmem>>, %arg3: memref<1x32xf32, #tpu.memory_space<vmem>>, %arg4: memref<32x48xbf16, #tpu.memory_space<vmem>>, %arg5: memref<1x48xf32, #tpu.memory_space<vmem>>, %arg6: memref<16x64xbf16, #tpu.memory_space<vmem>>, %arg7: memref<1x64xf32, #tpu.memory_space<vmem>>, %arg8: memref<32x32xbf16, #tpu.memory_space<vmem>>, %arg9: memref<1x32xf32, #tpu.memory_space<vmem>>, %arg10: memref<1x32xf32, #tpu.memory_space<vmem>>, %arg11: memref<1x32xf32, #tpu.memory_space<vmem>>, %arg12: memref<32x4xbf16, #tpu.memory_space<vmem>>, %arg13: memref<1x4xf32, #tpu.memory_space<vmem>>, %arg14: memref<32x128xbf16, #tpu.memory_space<vmem>>, %arg15: memref<1x128xf32, #tpu.memory_space<vmem>>, %arg16: memref<128x32xbf16, #tpu.memory_space<vmem>>, %arg17: memref<1x32xf32, #tpu.memory_space<vmem>>, %arg18: memref<4x32x64xbf16, #tpu.memory_space<vmem>>, %arg19: memref<4x1x64xf32, #tpu.memory_space<vmem>>, %arg20: memref<4x64x32xbf16, #tpu.memory_space<vmem>>, %arg21: memref<4x1x32xf32, #tpu.memory_space<vmem>>, %arg22: memref<1x8x32xf32, #tpu.memory_space<vmem>>) attributes {dimension_semantics = [#tpu.dimension_semantics<parallel>], iteration_bounds = array<i64: 2>, scalar_prefetch = 0 : i64, scratch_operands = 0 : i64, tpu.core_type = #tpu.core_type<tc>, window_params = [{transform_indices = @transform_0, window_bounds = array<i64: 1, 8, 32>}, {pipeline_mode = #tpu.pipeline_mode<synchronous>, transform_indices = @transform_1, window_bounds = array<i64: 1, 32>}, {pipeline_mode = #tpu.pipeline_mode<synchronous>, transform_indices = @transform_2, window_bounds = array<i64: 1, 32>}, {pipeline_mode = #tpu.pipeline_mode<synchronous>, transform_indices = @transform_3, window_bounds = array<i64: 32, 48>}, {pipeline_mode = #tpu.pipeline_mode<synchronous>, transform_indices = @transform_4, window_bounds = array<i64: 1, 48>}, {pipeline_mode = #tpu.pipeline_mode<synchronous>, transform_indices = @transform_5, window_bounds = array<i64: 16, 64>}, {pipeline_mode = #tpu.pipeline_mode<synchronous>, transform_indices = @transform_6, window_bounds = array<i64: 1, 64>}, {pipeline_mode = #tpu.pipeline_mode<synchronous>, transform_indices = @transform_7, window_bounds = array<i64: 32, 32>}, {pipeline_mode = #tpu.pipeline_mode<synchronous>, transform_indices = @transform_8, window_bounds = array<i64: 1, 32>}, {pipeline_mode = #tpu.pipeline_mode<synchronous>, transform_indices = @transform_9, window_bounds = array<i64: 1, 32>}, {pipeline_mode = #tpu.pipeline_mode<synchronous>, transform_indices = @transform_10, window_bounds = array<i64: 1, 32>}, {pipeline_mode = #tpu.pipeline_mode<synchronous>, transform_indices = @transform_11, window_bounds = array<i64: 32, 4>}, {pipeline_mode = #tpu.pipeline_mode<synchronous>, transform_indices = @transform_12, window_bounds = array<i64: 1, 4>}, {pipeline_mode = #tpu.pipeline_mode<synchronous>, transform_indices = @transform_13, window_bounds = array<i64: 32, 128>}, {pipeline_mode = #tpu.pipeline_mode<synchronous>, transform_indices = @transform_14, window_bounds = array<i64: 1, 128>}, {pipeline_mode = #tpu.pipeline_mode<synchronous>, transform_indices = @transform_15, window_bounds = array<i64: 128, 32>}, {pipeline_mode = #tpu.pipeline_mode<synchronous>, transform_indices = @transform_16, window_bounds = array<i64: 1, 32>}, {pipeline_mode = #tpu.pipeline_mode<synchronous>, transform_indices = @transform_17, window_bounds = array<i64: 4, 32, 64>}, {pipeline_mode = #tpu.pipeline_mode<synchronous>, transform_indices = @transform_18, window_bounds = array<i64: 4, 1, 64>}, {pipeline_mode = #tpu.pipeline_mode<synchronous>, transform_indices = @transform_19, window_bounds = array<i64: 4, 64, 32>}, {pipeline_mode = #tpu.pipeline_mode<synchronous>, transform_indices = @transform_20, window_bounds = array<i64: 4, 1, 32>}, {transform_indices = @transform_21, window_bounds = array<i64: 1, 8, 32>}]} {
    %c0 = arith.constant 0 : index
    %c0_0 = arith.constant 0 : index
    %c0_1 = arith.constant 0 : index
    %0 = vector.load %arg1[%c0, %c0_0, %c0_1] : memref<1x8x32xf32, #tpu.memory_space<vmem>>, vector<1x8x32xf32>
    %1 = vector.shape_cast %0 : vector<1x8x32xf32> to vector<8x32xf32>
    %c0_2 = arith.constant 0 : index
    %c0_3 = arith.constant 0 : index
    %2 = vector.load %arg2[%c0_2, %c0_3] : memref<1x32xf32, #tpu.memory_space<vmem>>, vector<1x32xf32>
    %c0_4 = arith.constant 0 : index
    %c0_5 = arith.constant 0 : index
    %3 = vector.load %arg3[%c0_4, %c0_5] : memref<1x32xf32, #tpu.memory_space<vmem>>, vector<1x32xf32>
    %cst = arith.constant dense<0.000000e+00> : vector<8xf32>
    %4 = vector.multi_reduction <add>, %1, %cst [1] : vector<8x32xf32> to vector<8xf32>
    %5 = vector.shape_cast %4 : vector<8xf32> to vector<8x1xf32>
    %cst_6 = arith.constant 3.200000e+01 : f32
    %6 = vector.broadcast %cst_6 : f32 to vector<8x1xf32>
    %7 = arith.divf %5, %6 : vector<8x1xf32>
    %8 = vector.broadcast %7 : vector<8x1xf32> to vector<8x32xf32>
    %9 = arith.subf %1, %8 : vector<8x32xf32>
    %10 = arith.mulf %9, %9 : vector<8x32xf32>
    %cst_7 = arith.constant dense<0.000000e+00> : vector<8xf32>
    %11 = vector.multi_reduction <add>, %10, %cst_7 [1] : vector<8x32xf32> to vector<8xf32>
    %12 = vector.shape_cast %11 : vector<8xf32> to vector<8x1xf32>
    %cst_8 = arith.constant 3.200000e+01 : f32
    %13 = vector.broadcast %cst_8 : f32 to vector<8x1xf32>
    %14 = arith.divf %12, %13 : vector<8x1xf32>
    %cst_9 = arith.constant 9.99999974E-6 : f32
    %15 = vector.broadcast %cst_9 : f32 to vector<8x1xf32>
    %16 = arith.addf %14, %15 : vector<8x1xf32>
    %17 = math.rsqrt %16 : vector<8x1xf32>
    %18 = vector.broadcast %17 : vector<8x1xf32> to vector<8x32xf32>
    %19 = arith.mulf %9, %18 : vector<8x32xf32>
    %20 = vector.broadcast %2 : vector<1x32xf32> to vector<8x32xf32>
    %21 = arith.mulf %19, %20 : vector<8x32xf32>
    %22 = vector.broadcast %3 : vector<1x32xf32> to vector<8x32xf32>
    %23 = arith.addf %21, %22 : vector<8x32xf32>
    %24 = arith.truncf %23 : vector<8x32xf32> to vector<8x32xbf16>
    %c0_10 = arith.constant 0 : index
    %c0_11 = arith.constant 0 : index
    %25 = vector.load %arg4[%c0_10, %c0_11] : memref<32x48xbf16, #tpu.memory_space<vmem>>, vector<32x48xbf16>
    %cst_12 = arith.constant dense<0.000000e+00> : vector<8x48xf32>
    %26 = tpu.matmul %24, %25, %cst_12 {dimension_numbers = #tpu.dot_dimension_numbers<[1], [0], [0], [1], [0, 0, 1, 1], [], []>} : vector<8x32xbf16>, vector<32x48xbf16>, vector<8x48xf32> -> vector<8x48xf32>
    %c0_13 = arith.constant 0 : index
    %c0_14 = arith.constant 0 : index
    %27 = vector.load %arg5[%c0_13, %c0_14] : memref<1x48xf32, #tpu.memory_space<vmem>>, vector<1x48xf32>
    %28 = vector.broadcast %27 : vector<1x48xf32> to vector<8x48xf32>
    %29 = arith.addf %26, %28 : vector<8x48xf32>
    %30 = vector.extract_strided_slice %29 {offsets = [0, 0], sizes = [8, 32], strides = [1, 1]} : vector<8x48xf32> to vector<8x32xf32>
    %31 = vector.extract_strided_slice %29 {offsets = [0, 32], sizes = [8, 16], strides = [1, 1]} : vector<8x48xf32> to vector<8x16xf32>
    %32 = arith.truncf %31 : vector<8x16xf32> to vector<8x16xbf16>
    %c0_15 = arith.constant 0 : index
    %c0_16 = arith.constant 0 : index
    %33 = vector.load %arg6[%c0_15, %c0_16] : memref<16x64xbf16, #tpu.memory_space<vmem>>, vector<16x64xbf16>
    %cst_17 = arith.constant dense<0.000000e+00> : vector<8x64xf32>
    %34 = tpu.matmul %32, %33, %cst_17 {dimension_numbers = #tpu.dot_dimension_numbers<[1], [0], [0], [1], [0, 0, 1, 1], [], []>} : vector<8x16xbf16>, vector<16x64xbf16>, vector<8x64xf32> -> vector<8x64xf32>
    %c0_18 = arith.constant 0 : index
    %c0_19 = arith.constant 0 : index
    %35 = vector.load %arg7[%c0_18, %c0_19] : memref<1x64xf32, #tpu.memory_space<vmem>>, vector<1x64xf32>
    %36 = vector.broadcast %35 : vector<1x64xf32> to vector<8x64xf32>
    %37 = arith.addf %34, %36 : vector<8x64xf32>
    %38 = vector.extract_strided_slice %37 {offsets = [0, 0], sizes = [8, 32], strides = [1, 1]} : vector<8x64xf32> to vector<8x32xf32>
    %39 = vector.extract_strided_slice %37 {offsets = [0, 32], sizes = [8, 32], strides = [1, 1]} : vector<8x64xf32> to vector<8x32xf32>
    %40 = tpu.iota {dimensions = array<i32: 0>} : vector<8x8xi32>
    %41 = tpu.iota {dimensions = array<i32: 1>} : vector<8x8xi32>
    %42 = arith.cmpi sle, %41, %40 : vector<8x8xi32>
    %c0_20 = arith.constant 0 : index
    %c0_21 = arith.constant 0 : index
    %43 = vector.load %arg8[%c0_20, %c0_21] : memref<32x32xbf16, #tpu.memory_space<vmem>>, vector<32x32xbf16>
    %cst_22 = arith.constant 0.000000e+00 : f32
    %44 = vector.broadcast %cst_22 : f32 to vector<8x32xf32>
    %45 = vector.extract_strided_slice %30 {offsets = [0, 0], sizes = [8, 8], strides = [1, 1]} : vector<8x32xf32> to vector<8x8xf32>
    %46 = arith.truncf %45 : vector<8x8xf32> to vector<8x8xbf16>
    %47 = vector.extract_strided_slice %38 {offsets = [0, 0], sizes = [8, 8], strides = [1, 1]} : vector<8x32xf32> to vector<8x8xf32>
    %48 = arith.truncf %47 : vector<8x8xf32> to vector<8x8xbf16>
    %49 = vector.extract_strided_slice %39 {offsets = [0, 0], sizes = [8, 8], strides = [1, 1]} : vector<8x32xf32> to vector<8x8xf32>
    %50 = arith.truncf %49 : vector<8x8xf32> to vector<8x8xbf16>
    %cst_23 = arith.constant dense<0.000000e+00> : vector<8x8xf32>
    %51 = tpu.matmul %46, %48, %cst_23 {dimension_numbers = #tpu.dot_dimension_numbers<[1], [1], [0], [0], [0, 0, 1, 0], [], []>} : vector<8x8xbf16>, vector<8x8xbf16>, vector<8x8xf32> -> vector<8x8xf32>
    %cst_24 = arith.constant 0.353553385 : f32
    %52 = vector.broadcast %cst_24 : f32 to vector<8x8xf32>
    %53 = arith.mulf %51, %52 : vector<8x8xf32>
    %cst_25 = arith.constant -1.000000e+30 : f32
    %54 = vector.broadcast %cst_25 : f32 to vector<8x8xf32>
    %55 = arith.select %42, %53, %54 : vector<8x8xi1>, vector<8x8xf32>
    %cst_26 = arith.constant dense<0xFF800000> : vector<8xf32>
    %56 = vector.multi_reduction <maximumf>, %55, %cst_26 [1] : vector<8x8xf32> to vector<8xf32>
    %cst_27 = arith.constant 0xFF800000 : f32
    %57 = vector.broadcast %cst_27 : f32 to vector<8xf32>
    %58 = arith.maximumf %57, %56 : vector<8xf32>
    %59 = vector.shape_cast %58 : vector<8xf32> to vector<8x1xf32>
    %60 = vector.broadcast %59 : vector<8x1xf32> to vector<8x8xf32>
    %61 = arith.subf %55, %60 : vector<8x8xf32>
    %62 = math.exp %61 : vector<8x8xf32>
    %cst_28 = arith.constant dense<0.000000e+00> : vector<8xf32>
    %63 = vector.multi_reduction <add>, %62, %cst_28 [1] : vector<8x8xf32> to vector<8xf32>
    %64 = vector.shape_cast %63 : vector<8xf32> to vector<8x1xf32>
    %65 = vector.broadcast %64 : vector<8x1xf32> to vector<8x8xf32>
    %66 = arith.divf %62, %65 : vector<8x8xf32>
    %67 = arith.truncf %66 : vector<8x8xf32> to vector<8x8xbf16>
    %cst_29 = arith.constant dense<0.000000e+00> : vector<8x8xf32>
    %68 = tpu.matmul %67, %50, %cst_29 {dimension_numbers = #tpu.dot_dimension_numbers<[1], [0], [0], [1], [0, 0, 1, 1], [], []>} : vector<8x8xbf16>, vector<8x8xbf16>, vector<8x8xf32> -> vector<8x8xf32>
    %69 = arith.truncf %68 : vector<8x8xf32> to vector<8x8xbf16>
    %70 = vector.extract_strided_slice %43 {offsets = [0, 0], sizes = [8, 32], strides = [1, 1]} : vector<32x32xbf16> to vector<8x32xbf16>
    %cst_30 = arith.constant dense<0.000000e+00> : vector<8x32xf32>
    %71 = tpu.matmul %69, %70, %cst_30 {dimension_numbers = #tpu.dot_dimension_numbers<[1], [0], [0], [1], [0, 0, 1, 1], [], []>} : vector<8x8xbf16>, vector<8x32xbf16>, vector<8x32xf32> -> vector<8x32xf32>
    %72 = arith.addf %44, %71 : vector<8x32xf32>
    %73 = vector.extract_strided_slice %30 {offsets = [0, 8], sizes = [8, 8], strides = [1, 1]} : vector<8x32xf32> to vector<8x8xf32>
    %74 = arith.truncf %73 : vector<8x8xf32> to vector<8x8xbf16>
    %75 = vector.extract_strided_slice %38 {offsets = [0, 8], sizes = [8, 8], strides = [1, 1]} : vector<8x32xf32> to vector<8x8xf32>
    %76 = arith.truncf %75 : vector<8x8xf32> to vector<8x8xbf16>
    %77 = vector.extract_strided_slice %39 {offsets = [0, 8], sizes = [8, 8], strides = [1, 1]} : vector<8x32xf32> to vector<8x8xf32>
    %78 = arith.truncf %77 : vector<8x8xf32> to vector<8x8xbf16>
    %cst_31 = arith.constant dense<0.000000e+00> : vector<8x8xf32>
    %79 = tpu.matmul %74, %76, %cst_31 {dimension_numbers = #tpu.dot_dimension_numbers<[1], [1], [0], [0], [0, 0, 1, 0], [], []>} : vector<8x8xbf16>, vector<8x8xbf16>, vector<8x8xf32> -> vector<8x8xf32>
    %cst_32 = arith.constant 0.353553385 : f32
    %80 = vector.broadcast %cst_32 : f32 to vector<8x8xf32>
    %81 = arith.mulf %79, %80 : vector<8x8xf32>
    %cst_33 = arith.constant -1.000000e+30 : f32
    %82 = vector.broadcast %cst_33 : f32 to vector<8x8xf32>
    %83 = arith.select %42, %81, %82 : vector<8x8xi1>, vector<8x8xf32>
    %cst_34 = arith.constant dense<0xFF800000> : vector<8xf32>
    %84 = vector.multi_reduction <maximumf>, %83, %cst_34 [1] : vector<8x8xf32> to vector<8xf32>
    %cst_35 = arith.constant 0xFF800000 : f32
    %85 = vector.broadcast %cst_35 : f32 to vector<8xf32>
    %86 = arith.maximumf %85, %84 : vector<8xf32>
    %87 = vector.shape_cast %86 : vector<8xf32> to vector<8x1xf32>
    %88 = vector.broadcast %87 : vector<8x1xf32> to vector<8x8xf32>
    %89 = arith.subf %83, %88 : vector<8x8xf32>
    %90 = math.exp %89 : vector<8x8xf32>
    %cst_36 = arith.constant dense<0.000000e+00> : vector<8xf32>
    %91 = vector.multi_reduction <add>, %90, %cst_36 [1] : vector<8x8xf32> to vector<8xf32>
    %92 = vector.shape_cast %91 : vector<8xf32> to vector<8x1xf32>
    %93 = vector.broadcast %92 : vector<8x1xf32> to vector<8x8xf32>
    %94 = arith.divf %90, %93 : vector<8x8xf32>
    %95 = arith.truncf %94 : vector<8x8xf32> to vector<8x8xbf16>
    %cst_37 = arith.constant dense<0.000000e+00> : vector<8x8xf32>
    %96 = tpu.matmul %95, %78, %cst_37 {dimension_numbers = #tpu.dot_dimension_numbers<[1], [0], [0], [1], [0, 0, 1, 1], [], []>} : vector<8x8xbf16>, vector<8x8xbf16>, vector<8x8xf32> -> vector<8x8xf32>
    %97 = arith.truncf %96 : vector<8x8xf32> to vector<8x8xbf16>
    %98 = vector.extract_strided_slice %43 {offsets = [8, 0], sizes = [8, 32], strides = [1, 1]} : vector<32x32xbf16> to vector<8x32xbf16>
    %cst_38 = arith.constant dense<0.000000e+00> : vector<8x32xf32>
    %99 = tpu.matmul %97, %98, %cst_38 {dimension_numbers = #tpu.dot_dimension_numbers<[1], [0], [0], [1], [0, 0, 1, 1], [], []>} : vector<8x8xbf16>, vector<8x32xbf16>, vector<8x32xf32> -> vector<8x32xf32>
    %100 = arith.addf %72, %99 : vector<8x32xf32>
    %101 = vector.extract_strided_slice %30 {offsets = [0, 16], sizes = [8, 8], strides = [1, 1]} : vector<8x32xf32> to vector<8x8xf32>
    %102 = arith.truncf %101 : vector<8x8xf32> to vector<8x8xbf16>
    %103 = vector.extract_strided_slice %38 {offsets = [0, 16], sizes = [8, 8], strides = [1, 1]} : vector<8x32xf32> to vector<8x8xf32>
    %104 = arith.truncf %103 : vector<8x8xf32> to vector<8x8xbf16>
    %105 = vector.extract_strided_slice %39 {offsets = [0, 16], sizes = [8, 8], strides = [1, 1]} : vector<8x32xf32> to vector<8x8xf32>
    %106 = arith.truncf %105 : vector<8x8xf32> to vector<8x8xbf16>
    %cst_39 = arith.constant dense<0.000000e+00> : vector<8x8xf32>
    %107 = tpu.matmul %102, %104, %cst_39 {dimension_numbers = #tpu.dot_dimension_numbers<[1], [1], [0], [0], [0, 0, 1, 0], [], []>} : vector<8x8xbf16>, vector<8x8xbf16>, vector<8x8xf32> -> vector<8x8xf32>
    %cst_40 = arith.constant 0.353553385 : f32
    %108 = vector.broadcast %cst_40 : f32 to vector<8x8xf32>
    %109 = arith.mulf %107, %108 : vector<8x8xf32>
    %cst_41 = arith.constant -1.000000e+30 : f32
    %110 = vector.broadcast %cst_41 : f32 to vector<8x8xf32>
    %111 = arith.select %42, %109, %110 : vector<8x8xi1>, vector<8x8xf32>
    %cst_42 = arith.constant dense<0xFF800000> : vector<8xf32>
    %112 = vector.multi_reduction <maximumf>, %111, %cst_42 [1] : vector<8x8xf32> to vector<8xf32>
    %cst_43 = arith.constant 0xFF800000 : f32
    %113 = vector.broadcast %cst_43 : f32 to vector<8xf32>
    %114 = arith.maximumf %113, %112 : vector<8xf32>
    %115 = vector.shape_cast %114 : vector<8xf32> to vector<8x1xf32>
    %116 = vector.broadcast %115 : vector<8x1xf32> to vector<8x8xf32>
    %117 = arith.subf %111, %116 : vector<8x8xf32>
    %118 = math.exp %117 : vector<8x8xf32>
    %cst_44 = arith.constant dense<0.000000e+00> : vector<8xf32>
    %119 = vector.multi_reduction <add>, %118, %cst_44 [1] : vector<8x8xf32> to vector<8xf32>
    %120 = vector.shape_cast %119 : vector<8xf32> to vector<8x1xf32>
    %121 = vector.broadcast %120 : vector<8x1xf32> to vector<8x8xf32>
    %122 = arith.divf %118, %121 : vector<8x8xf32>
    %123 = arith.truncf %122 : vector<8x8xf32> to vector<8x8xbf16>
    %cst_45 = arith.constant dense<0.000000e+00> : vector<8x8xf32>
    %124 = tpu.matmul %123, %106, %cst_45 {dimension_numbers = #tpu.dot_dimension_numbers<[1], [0], [0], [1], [0, 0, 1, 1], [], []>} : vector<8x8xbf16>, vector<8x8xbf16>, vector<8x8xf32> -> vector<8x8xf32>
    %125 = arith.truncf %124 : vector<8x8xf32> to vector<8x8xbf16>
    %126 = vector.extract_strided_slice %43 {offsets = [16, 0], sizes = [8, 32], strides = [1, 1]} : vector<32x32xbf16> to vector<8x32xbf16>
    %cst_46 = arith.constant dense<0.000000e+00> : vector<8x32xf32>
    %127 = tpu.matmul %125, %126, %cst_46 {dimension_numbers = #tpu.dot_dimension_numbers<[1], [0], [0], [1], [0, 0, 1, 1], [], []>} : vector<8x8xbf16>, vector<8x32xbf16>, vector<8x32xf32> -> vector<8x32xf32>
    %128 = arith.addf %100, %127 : vector<8x32xf32>
    %129 = vector.extract_strided_slice %30 {offsets = [0, 24], sizes = [8, 8], strides = [1, 1]} : vector<8x32xf32> to vector<8x8xf32>
    %130 = arith.truncf %129 : vector<8x8xf32> to vector<8x8xbf16>
    %131 = vector.extract_strided_slice %38 {offsets = [0, 24], sizes = [8, 8], strides = [1, 1]} : vector<8x32xf32> to vector<8x8xf32>
    %132 = arith.truncf %131 : vector<8x8xf32> to vector<8x8xbf16>
    %133 = vector.extract_strided_slice %39 {offsets = [0, 24], sizes = [8, 8], strides = [1, 1]} : vector<8x32xf32> to vector<8x8xf32>
    %134 = arith.truncf %133 : vector<8x8xf32> to vector<8x8xbf16>
    %cst_47 = arith.constant dense<0.000000e+00> : vector<8x8xf32>
    %135 = tpu.matmul %130, %132, %cst_47 {dimension_numbers = #tpu.dot_dimension_numbers<[1], [1], [0], [0], [0, 0, 1, 0], [], []>} : vector<8x8xbf16>, vector<8x8xbf16>, vector<8x8xf32> -> vector<8x8xf32>
    %cst_48 = arith.constant 0.353553385 : f32
    %136 = vector.broadcast %cst_48 : f32 to vector<8x8xf32>
    %137 = arith.mulf %135, %136 : vector<8x8xf32>
    %cst_49 = arith.constant -1.000000e+30 : f32
    %138 = vector.broadcast %cst_49 : f32 to vector<8x8xf32>
    %139 = arith.select %42, %137, %138 : vector<8x8xi1>, vector<8x8xf32>
    %cst_50 = arith.constant dense<0xFF800000> : vector<8xf32>
    %140 = vector.multi_reduction <maximumf>, %139, %cst_50 [1] : vector<8x8xf32> to vector<8xf32>
    %cst_51 = arith.constant 0xFF800000 : f32
    %141 = vector.broadcast %cst_51 : f32 to vector<8xf32>
    %142 = arith.maximumf %141, %140 : vector<8xf32>
    %143 = vector.shape_cast %142 : vector<8xf32> to vector<8x1xf32>
    %144 = vector.broadcast %143 : vector<8x1xf32> to vector<8x8xf32>
    %145 = arith.subf %139, %144 : vector<8x8xf32>
    %146 = math.exp %145 : vector<8x8xf32>
    %cst_52 = arith.constant dense<0.000000e+00> : vector<8xf32>
    %147 = vector.multi_reduction <add>, %146, %cst_52 [1] : vector<8x8xf32> to vector<8xf32>
    %148 = vector.shape_cast %147 : vector<8xf32> to vector<8x1xf32>
    %149 = vector.broadcast %148 : vector<8x1xf32> to vector<8x8xf32>
    %150 = arith.divf %146, %149 : vector<8x8xf32>
    %151 = arith.truncf %150 : vector<8x8xf32> to vector<8x8xbf16>
    %cst_53 = arith.constant dense<0.000000e+00> : vector<8x8xf32>
    %152 = tpu.matmul %151, %134, %cst_53 {dimension_numbers = #tpu.dot_dimension_numbers<[1], [0], [0], [1], [0, 0, 1, 1], [], []>} : vector<8x8xbf16>, vector<8x8xbf16>, vector<8x8xf32> -> vector<8x8xf32>
    %153 = arith.truncf %152 : vector<8x8xf32> to vector<8x8xbf16>
    %154 = vector.extract_strided_slice %43 {offsets = [24, 0], sizes = [8, 32], strides = [1, 1]} : vector<32x32xbf16> to vector<8x32xbf16>
    %cst_54 = arith.constant dense<0.000000e+00> : vector<8x32xf32>
    %155 = tpu.matmul %153, %154, %cst_54 {dimension_numbers = #tpu.dot_dimension_numbers<[1], [0], [0], [1], [0, 0, 1, 1], [], []>} : vector<8x8xbf16>, vector<8x32xbf16>, vector<8x32xf32> -> vector<8x32xf32>
    %156 = arith.addf %128, %155 : vector<8x32xf32>
    %157 = arith.addf %1, %156 : vector<8x32xf32>
    %c0_55 = arith.constant 0 : index
    %c0_56 = arith.constant 0 : index
    %158 = vector.load %arg9[%c0_55, %c0_56] : memref<1x32xf32, #tpu.memory_space<vmem>>, vector<1x32xf32>
    %159 = vector.broadcast %158 : vector<1x32xf32> to vector<8x32xf32>
    %160 = arith.addf %157, %159 : vector<8x32xf32>
    %c0_57 = arith.constant 0 : index
    %c0_58 = arith.constant 0 : index
    %161 = vector.load %arg10[%c0_57, %c0_58] : memref<1x32xf32, #tpu.memory_space<vmem>>, vector<1x32xf32>
    %c0_59 = arith.constant 0 : index
    %c0_60 = arith.constant 0 : index
    %162 = vector.load %arg11[%c0_59, %c0_60] : memref<1x32xf32, #tpu.memory_space<vmem>>, vector<1x32xf32>
    %cst_61 = arith.constant dense<0.000000e+00> : vector<8xf32>
    %163 = vector.multi_reduction <add>, %160, %cst_61 [1] : vector<8x32xf32> to vector<8xf32>
    %164 = vector.shape_cast %163 : vector<8xf32> to vector<8x1xf32>
    %cst_62 = arith.constant 3.200000e+01 : f32
    %165 = vector.broadcast %cst_62 : f32 to vector<8x1xf32>
    %166 = arith.divf %164, %165 : vector<8x1xf32>
    %167 = vector.broadcast %166 : vector<8x1xf32> to vector<8x32xf32>
    %168 = arith.subf %160, %167 : vector<8x32xf32>
    %169 = arith.mulf %168, %168 : vector<8x32xf32>
    %cst_63 = arith.constant dense<0.000000e+00> : vector<8xf32>
    %170 = vector.multi_reduction <add>, %169, %cst_63 [1] : vector<8x32xf32> to vector<8xf32>
    %171 = vector.shape_cast %170 : vector<8xf32> to vector<8x1xf32>
    %cst_64 = arith.constant 3.200000e+01 : f32
    %172 = vector.broadcast %cst_64 : f32 to vector<8x1xf32>
    %173 = arith.divf %171, %172 : vector<8x1xf32>
    %cst_65 = arith.constant 9.99999974E-6 : f32
    %174 = vector.broadcast %cst_65 : f32 to vector<8x1xf32>
    %175 = arith.addf %173, %174 : vector<8x1xf32>
    %176 = math.rsqrt %175 : vector<8x1xf32>
    %177 = vector.broadcast %176 : vector<8x1xf32> to vector<8x32xf32>
    %178 = arith.mulf %168, %177 : vector<8x32xf32>
    %179 = vector.broadcast %161 : vector<1x32xf32> to vector<8x32xf32>
    %180 = arith.mulf %178, %179 : vector<8x32xf32>
    %181 = vector.broadcast %162 : vector<1x32xf32> to vector<8x32xf32>
    %182 = arith.addf %180, %181 : vector<8x32xf32>
    %183 = arith.truncf %182 : vector<8x32xf32> to vector<8x32xbf16>
    %c0_66 = arith.constant 0 : index
    %c0_67 = arith.constant 0 : index
    %184 = vector.load %arg14[%c0_66, %c0_67] : memref<32x128xbf16, #tpu.memory_space<vmem>>, vector<32x128xbf16>
    %cst_68 = arith.constant dense<0.000000e+00> : vector<8x128xf32>
    %185 = tpu.matmul %183, %184, %cst_68 {dimension_numbers = #tpu.dot_dimension_numbers<[1], [0], [0], [1], [0, 0, 1, 1], [], []>} : vector<8x32xbf16>, vector<32x128xbf16>, vector<8x128xf32> -> vector<8x128xf32>
    %c0_69 = arith.constant 0 : index
    %c0_70 = arith.constant 0 : index
    %186 = vector.load %arg15[%c0_69, %c0_70] : memref<1x128xf32, #tpu.memory_space<vmem>>, vector<1x128xf32>
    %187 = vector.broadcast %186 : vector<1x128xf32> to vector<8x128xf32>
    %188 = arith.addf %185, %187 : vector<8x128xf32>
    %189 = arith.mulf %188, %188 : vector<8x128xf32>
    %190 = arith.mulf %188, %189 : vector<8x128xf32>
    %cst_71 = arith.constant 4.471500e-02 : f32
    %191 = vector.broadcast %cst_71 : f32 to vector<8x128xf32>
    %192 = arith.mulf %191, %190 : vector<8x128xf32>
    %193 = arith.addf %188, %192 : vector<8x128xf32>
    %cst_72 = arith.constant 0.797884583 : f32
    %194 = vector.broadcast %cst_72 : f32 to vector<8x128xf32>
    %195 = arith.mulf %194, %193 : vector<8x128xf32>
    %196 = math.tanh %195 : vector<8x128xf32>
    %cst_73 = arith.constant 1.000000e+00 : f32
    %197 = vector.broadcast %cst_73 : f32 to vector<8x128xf32>
    %198 = arith.addf %197, %196 : vector<8x128xf32>
    %cst_74 = arith.constant 5.000000e-01 : f32
    %199 = vector.broadcast %cst_74 : f32 to vector<8x128xf32>
    %200 = arith.mulf %199, %198 : vector<8x128xf32>
    %201 = arith.mulf %188, %200 : vector<8x128xf32>
    %202 = arith.truncf %201 : vector<8x128xf32> to vector<8x128xbf16>
    %c0_75 = arith.constant 0 : index
    %c0_76 = arith.constant 0 : index
    %203 = vector.load %arg16[%c0_75, %c0_76] : memref<128x32xbf16, #tpu.memory_space<vmem>>, vector<128x32xbf16>
    %cst_77 = arith.constant dense<0.000000e+00> : vector<8x32xf32>
    %204 = tpu.matmul %202, %203, %cst_77 {dimension_numbers = #tpu.dot_dimension_numbers<[1], [0], [0], [1], [0, 0, 1, 1], [], []>} : vector<8x128xbf16>, vector<128x32xbf16>, vector<8x32xf32> -> vector<8x32xf32>
    %c0_78 = arith.constant 0 : index
    %c0_79 = arith.constant 0 : index
    %205 = vector.load %arg17[%c0_78, %c0_79] : memref<1x32xf32, #tpu.memory_space<vmem>>, vector<1x32xf32>
    %206 = vector.broadcast %205 : vector<1x32xf32> to vector<8x32xf32>
    %207 = arith.addf %204, %206 : vector<8x32xf32>
    %c0_80 = arith.constant 0 : index
    %c0_81 = arith.constant 0 : index
    %208 = vector.load %arg12[%c0_80, %c0_81] : memref<32x4xbf16, #tpu.memory_space<vmem>>, vector<32x4xbf16>
    %cst_82 = arith.constant dense<0.000000e+00> : vector<8x4xf32>
    %209 = tpu.matmul %183, %208, %cst_82 {dimension_numbers = #tpu.dot_dimension_numbers<[1], [0], [0], [1], [0, 0, 1, 1], [], []>} : vector<8x32xbf16>, vector<32x4xbf16>, vector<8x4xf32> -> vector<8x4xf32>
    %c0_83 = arith.constant 0 : index
    %c0_84 = arith.constant 0 : index
    %210 = vector.load %arg13[%c0_83, %c0_84] : memref<1x4xf32, #tpu.memory_space<vmem>>, vector<1x4xf32>
    %211 = vector.broadcast %210 : vector<1x4xf32> to vector<8x4xf32>
    %212 = arith.addf %209, %211 : vector<8x4xf32>
    %cst_85 = arith.constant dense<0xFF800000> : vector<8xf32>
    %213 = vector.multi_reduction <maximumf>, %212, %cst_85 [1] : vector<8x4xf32> to vector<8xf32>
    %cst_86 = arith.constant 0xFF800000 : f32
    %214 = vector.broadcast %cst_86 : f32 to vector<8xf32>
    %215 = arith.maximumf %214, %213 : vector<8xf32>
    %216 = vector.shape_cast %215 : vector<8xf32> to vector<8x1xf32>
    %217 = vector.broadcast %216 : vector<8x1xf32> to vector<8x4xf32>
    %218 = arith.subf %212, %217 : vector<8x4xf32>
    %219 = math.exp %218 : vector<8x4xf32>
    %cst_87 = arith.constant dense<0.000000e+00> : vector<8xf32>
    %220 = vector.multi_reduction <add>, %219, %cst_87 [1] : vector<8x4xf32> to vector<8xf32>
    %221 = vector.shape_cast %220 : vector<8xf32> to vector<8x1xf32>
    %222 = vector.broadcast %221 : vector<8x1xf32> to vector<8x4xf32>
    %223 = arith.divf %219, %222 : vector<8x4xf32>
    %224 = tpu.iota {dimensions = array<i32: 1>} : vector<8x4xi32>
    %225 = arith.sitofp %224 : vector<8x4xi32> to vector<8x4xf32>
    %cst_88 = arith.constant 0.000000e+00 : f32
    %226 = vector.broadcast %cst_88 : f32 to vector<8x4xf32>
    %cst_89 = arith.constant dense<0xFF800000> : vector<8xf32>
    %227 = vector.multi_reduction <maximumf>, %223, %cst_89 [1] : vector<8x4xf32> to vector<8xf32>
    %228 = vector.shape_cast %227 : vector<8xf32> to vector<8x1xf32>
    %229 = vector.broadcast %228 : vector<8x1xf32> to vector<8x4xf32>
    %230 = arith.cmpf oge, %223, %229 : vector<8x4xf32>
    %cst_90 = arith.constant 4.000000e+00 : f32
    %231 = vector.broadcast %cst_90 : f32 to vector<8x4xf32>
    %232 = arith.select %230, %225, %231 : vector<8x4xi1>, vector<8x4xf32>
    %cst_91 = arith.constant dense<0x7F800000> : vector<8xf32>
    %233 = vector.multi_reduction <minimumf>, %232, %cst_91 [1] : vector<8x4xf32> to vector<8xf32>
    %234 = vector.shape_cast %233 : vector<8xf32> to vector<8x1xf32>
    %235 = vector.broadcast %234 : vector<8x1xf32> to vector<8x4xf32>
    %236 = arith.cmpf oeq, %225, %235 : vector<8x4xf32>
    %cst_92 = arith.constant 0.000000e+00 : f32
    %237 = vector.broadcast %cst_92 : f32 to vector<8x4xf32>
    %238 = arith.select %236, %223, %237 : vector<8x4xi1>, vector<8x4xf32>
    %239 = arith.addf %226, %238 : vector<8x4xf32>
    %cst_93 = arith.constant -1.000000e+30 : f32
    %240 = vector.broadcast %cst_93 : f32 to vector<8x4xf32>
    %241 = arith.select %236, %240, %223 : vector<8x4xi1>, vector<8x4xf32>
    %cst_94 = arith.constant dense<0xFF800000> : vector<8xf32>
    %242 = vector.multi_reduction <maximumf>, %241, %cst_94 [1] : vector<8x4xf32> to vector<8xf32>
    %243 = vector.shape_cast %242 : vector<8xf32> to vector<8x1xf32>
    %244 = vector.broadcast %243 : vector<8x1xf32> to vector<8x4xf32>
    %245 = arith.cmpf oge, %241, %244 : vector<8x4xf32>
    %cst_95 = arith.constant 4.000000e+00 : f32
    %246 = vector.broadcast %cst_95 : f32 to vector<8x4xf32>
    %247 = arith.select %245, %225, %246 : vector<8x4xi1>, vector<8x4xf32>
    %cst_96 = arith.constant dense<0x7F800000> : vector<8xf32>
    %248 = vector.multi_reduction <minimumf>, %247, %cst_96 [1] : vector<8x4xf32> to vector<8xf32>
    %249 = vector.shape_cast %248 : vector<8xf32> to vector<8x1xf32>
    %250 = vector.broadcast %249 : vector<8x1xf32> to vector<8x4xf32>
    %251 = arith.cmpf oeq, %225, %250 : vector<8x4xf32>
    %cst_97 = arith.constant 0.000000e+00 : f32
    %252 = vector.broadcast %cst_97 : f32 to vector<8x4xf32>
    %253 = arith.select %251, %223, %252 : vector<8x4xi1>, vector<8x4xf32>
    %254 = arith.addf %239, %253 : vector<8x4xf32>
    %cst_98 = arith.constant dense<0.000000e+00> : vector<8xf32>
    %255 = vector.multi_reduction <add>, %254, %cst_98 [1] : vector<8x4xf32> to vector<8xf32>
    %256 = vector.shape_cast %255 : vector<8xf32> to vector<8x1xf32>
    %257 = vector.broadcast %256 : vector<8x1xf32> to vector<8x4xf32>
    %258 = arith.divf %254, %257 : vector<8x4xf32>
    %c0_99 = arith.constant 0 : index
    %c0_100 = arith.constant 0 : index
    %c0_101 = arith.constant 0 : index
    %259 = vector.load %arg18[%c0_99, %c0_100, %c0_101] : memref<4x32x64xbf16, #tpu.memory_space<vmem>>, vector<1x32x64xbf16>
    %260 = vector.shape_cast %259 : vector<1x32x64xbf16> to vector<32x64xbf16>
    %cst_102 = arith.constant dense<0.000000e+00> : vector<8x64xf32>
    %261 = tpu.matmul %183, %260, %cst_102 {dimension_numbers = #tpu.dot_dimension_numbers<[1], [0], [0], [1], [0, 0, 1, 1], [], []>} : vector<8x32xbf16>, vector<32x64xbf16>, vector<8x64xf32> -> vector<8x64xf32>
    %c0_103 = arith.constant 0 : index
    %c0_104 = arith.constant 0 : index
    %c0_105 = arith.constant 0 : index
    %262 = vector.load %arg19[%c0_103, %c0_104, %c0_105] : memref<4x1x64xf32, #tpu.memory_space<vmem>>, vector<1x1x64xf32>
    %263 = vector.shape_cast %262 : vector<1x1x64xf32> to vector<1x64xf32>
    %264 = vector.broadcast %263 : vector<1x64xf32> to vector<8x64xf32>
    %265 = arith.addf %261, %264 : vector<8x64xf32>
    %266 = arith.mulf %265, %265 : vector<8x64xf32>
    %267 = arith.mulf %265, %266 : vector<8x64xf32>
    %cst_106 = arith.constant 4.471500e-02 : f32
    %268 = vector.broadcast %cst_106 : f32 to vector<8x64xf32>
    %269 = arith.mulf %268, %267 : vector<8x64xf32>
    %270 = arith.addf %265, %269 : vector<8x64xf32>
    %cst_107 = arith.constant 0.797884583 : f32
    %271 = vector.broadcast %cst_107 : f32 to vector<8x64xf32>
    %272 = arith.mulf %271, %270 : vector<8x64xf32>
    %273 = math.tanh %272 : vector<8x64xf32>
    %cst_108 = arith.constant 1.000000e+00 : f32
    %274 = vector.broadcast %cst_108 : f32 to vector<8x64xf32>
    %275 = arith.addf %274, %273 : vector<8x64xf32>
    %cst_109 = arith.constant 5.000000e-01 : f32
    %276 = vector.broadcast %cst_109 : f32 to vector<8x64xf32>
    %277 = arith.mulf %276, %275 : vector<8x64xf32>
    %278 = arith.mulf %265, %277 : vector<8x64xf32>
    %279 = arith.truncf %278 : vector<8x64xf32> to vector<8x64xbf16>
    %c0_110 = arith.constant 0 : index
    %c0_111 = arith.constant 0 : index
    %c0_112 = arith.constant 0 : index
    %280 = vector.load %arg20[%c0_110, %c0_111, %c0_112] : memref<4x64x32xbf16, #tpu.memory_space<vmem>>, vector<1x64x32xbf16>
    %281 = vector.shape_cast %280 : vector<1x64x32xbf16> to vector<64x32xbf16>
    %cst_113 = arith.constant dense<0.000000e+00> : vector<8x32xf32>
    %282 = tpu.matmul %279, %281, %cst_113 {dimension_numbers = #tpu.dot_dimension_numbers<[1], [0], [0], [1], [0, 0, 1, 1], [], []>} : vector<8x64xbf16>, vector<64x32xbf16>, vector<8x32xf32> -> vector<8x32xf32>
    %c0_114 = arith.constant 0 : index
    %c0_115 = arith.constant 0 : index
    %c0_116 = arith.constant 0 : index
    %283 = vector.load %arg21[%c0_114, %c0_115, %c0_116] : memref<4x1x32xf32, #tpu.memory_space<vmem>>, vector<1x1x32xf32>
    %284 = vector.shape_cast %283 : vector<1x1x32xf32> to vector<1x32xf32>
    %285 = vector.broadcast %284 : vector<1x32xf32> to vector<8x32xf32>
    %286 = arith.addf %282, %285 : vector<8x32xf32>
    %287 = vector.extract_strided_slice %258 {offsets = [0, 0], sizes = [8, 1], strides = [1, 1]} : vector<8x4xf32> to vector<8x1xf32>
    %288 = vector.broadcast %287 : vector<8x1xf32> to vector<8x32xf32>
    %289 = arith.mulf %288, %286 : vector<8x32xf32>
    %290 = arith.addf %207, %289 : vector<8x32xf32>
    %c1 = arith.constant 1 : index
    %c0_117 = arith.constant 0 : index
    %c0_118 = arith.constant 0 : index
    %291 = vector.load %arg18[%c1, %c0_117, %c0_118] : memref<4x32x64xbf16, #tpu.memory_space<vmem>>, vector<1x32x64xbf16>
    %292 = vector.shape_cast %291 : vector<1x32x64xbf16> to vector<32x64xbf16>
    %cst_119 = arith.constant dense<0.000000e+00> : vector<8x64xf32>
    %293 = tpu.matmul %183, %292, %cst_119 {dimension_numbers = #tpu.dot_dimension_numbers<[1], [0], [0], [1], [0, 0, 1, 1], [], []>} : vector<8x32xbf16>, vector<32x64xbf16>, vector<8x64xf32> -> vector<8x64xf32>
    %c1_120 = arith.constant 1 : index
    %c0_121 = arith.constant 0 : index
    %c0_122 = arith.constant 0 : index
    %294 = vector.load %arg19[%c1_120, %c0_121, %c0_122] : memref<4x1x64xf32, #tpu.memory_space<vmem>>, vector<1x1x64xf32>
    %295 = vector.shape_cast %294 : vector<1x1x64xf32> to vector<1x64xf32>
    %296 = vector.broadcast %295 : vector<1x64xf32> to vector<8x64xf32>
    %297 = arith.addf %293, %296 : vector<8x64xf32>
    %298 = arith.mulf %297, %297 : vector<8x64xf32>
    %299 = arith.mulf %297, %298 : vector<8x64xf32>
    %cst_123 = arith.constant 4.471500e-02 : f32
    %300 = vector.broadcast %cst_123 : f32 to vector<8x64xf32>
    %301 = arith.mulf %300, %299 : vector<8x64xf32>
    %302 = arith.addf %297, %301 : vector<8x64xf32>
    %cst_124 = arith.constant 0.797884583 : f32
    %303 = vector.broadcast %cst_124 : f32 to vector<8x64xf32>
    %304 = arith.mulf %303, %302 : vector<8x64xf32>
    %305 = math.tanh %304 : vector<8x64xf32>
    %cst_125 = arith.constant 1.000000e+00 : f32
    %306 = vector.broadcast %cst_125 : f32 to vector<8x64xf32>
    %307 = arith.addf %306, %305 : vector<8x64xf32>
    %cst_126 = arith.constant 5.000000e-01 : f32
    %308 = vector.broadcast %cst_126 : f32 to vector<8x64xf32>
    %309 = arith.mulf %308, %307 : vector<8x64xf32>
    %310 = arith.mulf %297, %309 : vector<8x64xf32>
    %311 = arith.truncf %310 : vector<8x64xf32> to vector<8x64xbf16>
    %c1_127 = arith.constant 1 : index
    %c0_128 = arith.constant 0 : index
    %c0_129 = arith.constant 0 : index
    %312 = vector.load %arg20[%c1_127, %c0_128, %c0_129] : memref<4x64x32xbf16, #tpu.memory_space<vmem>>, vector<1x64x32xbf16>
    %313 = vector.shape_cast %312 : vector<1x64x32xbf16> to vector<64x32xbf16>
    %cst_130 = arith.constant dense<0.000000e+00> : vector<8x32xf32>
    %314 = tpu.matmul %311, %313, %cst_130 {dimension_numbers = #tpu.dot_dimension_numbers<[1], [0], [0], [1], [0, 0, 1, 1], [], []>} : vector<8x64xbf16>, vector<64x32xbf16>, vector<8x32xf32> -> vector<8x32xf32>
    %c1_131 = arith.constant 1 : index
    %c0_132 = arith.constant 0 : index
    %c0_133 = arith.constant 0 : index
    %315 = vector.load %arg21[%c1_131, %c0_132, %c0_133] : memref<4x1x32xf32, #tpu.memory_space<vmem>>, vector<1x1x32xf32>
    %316 = vector.shape_cast %315 : vector<1x1x32xf32> to vector<1x32xf32>
    %317 = vector.broadcast %316 : vector<1x32xf32> to vector<8x32xf32>
    %318 = arith.addf %314, %317 : vector<8x32xf32>
    %319 = vector.extract_strided_slice %258 {offsets = [0, 1], sizes = [8, 1], strides = [1, 1]} : vector<8x4xf32> to vector<8x1xf32>
    %320 = vector.broadcast %319 : vector<8x1xf32> to vector<8x32xf32>
    %321 = arith.mulf %320, %318 : vector<8x32xf32>
    %322 = arith.addf %290, %321 : vector<8x32xf32>
    %c2 = arith.constant 2 : index
    %c0_134 = arith.constant 0 : index
    %c0_135 = arith.constant 0 : index
    %323 = vector.load %arg18[%c2, %c0_134, %c0_135] : memref<4x32x64xbf16, #tpu.memory_space<vmem>>, vector<1x32x64xbf16>
    %324 = vector.shape_cast %323 : vector<1x32x64xbf16> to vector<32x64xbf16>
    %cst_136 = arith.constant dense<0.000000e+00> : vector<8x64xf32>
    %325 = tpu.matmul %183, %324, %cst_136 {dimension_numbers = #tpu.dot_dimension_numbers<[1], [0], [0], [1], [0, 0, 1, 1], [], []>} : vector<8x32xbf16>, vector<32x64xbf16>, vector<8x64xf32> -> vector<8x64xf32>
    %c2_137 = arith.constant 2 : index
    %c0_138 = arith.constant 0 : index
    %c0_139 = arith.constant 0 : index
    %326 = vector.load %arg19[%c2_137, %c0_138, %c0_139] : memref<4x1x64xf32, #tpu.memory_space<vmem>>, vector<1x1x64xf32>
    %327 = vector.shape_cast %326 : vector<1x1x64xf32> to vector<1x64xf32>
    %328 = vector.broadcast %327 : vector<1x64xf32> to vector<8x64xf32>
    %329 = arith.addf %325, %328 : vector<8x64xf32>
    %330 = arith.mulf %329, %329 : vector<8x64xf32>
    %331 = arith.mulf %329, %330 : vector<8x64xf32>
    %cst_140 = arith.constant 4.471500e-02 : f32
    %332 = vector.broadcast %cst_140 : f32 to vector<8x64xf32>
    %333 = arith.mulf %332, %331 : vector<8x64xf32>
    %334 = arith.addf %329, %333 : vector<8x64xf32>
    %cst_141 = arith.constant 0.797884583 : f32
    %335 = vector.broadcast %cst_141 : f32 to vector<8x64xf32>
    %336 = arith.mulf %335, %334 : vector<8x64xf32>
    %337 = math.tanh %336 : vector<8x64xf32>
    %cst_142 = arith.constant 1.000000e+00 : f32
    %338 = vector.broadcast %cst_142 : f32 to vector<8x64xf32>
    %339 = arith.addf %338, %337 : vector<8x64xf32>
    %cst_143 = arith.constant 5.000000e-01 : f32
    %340 = vector.broadcast %cst_143 : f32 to vector<8x64xf32>
    %341 = arith.mulf %340, %339 : vector<8x64xf32>
    %342 = arith.mulf %329, %341 : vector<8x64xf32>
    %343 = arith.truncf %342 : vector<8x64xf32> to vector<8x64xbf16>
    %c2_144 = arith.constant 2 : index
    %c0_145 = arith.constant 0 : index
    %c0_146 = arith.constant 0 : index
    %344 = vector.load %arg20[%c2_144, %c0_145, %c0_146] : memref<4x64x32xbf16, #tpu.memory_space<vmem>>, vector<1x64x32xbf16>
    %345 = vector.shape_cast %344 : vector<1x64x32xbf16> to vector<64x32xbf16>
    %cst_147 = arith.constant dense<0.000000e+00> : vector<8x32xf32>
    %346 = tpu.matmul %343, %345, %cst_147 {dimension_numbers = #tpu.dot_dimension_numbers<[1], [0], [0], [1], [0, 0, 1, 1], [], []>} : vector<8x64xbf16>, vector<64x32xbf16>, vector<8x32xf32> -> vector<8x32xf32>
    %c2_148 = arith.constant 2 : index
    %c0_149 = arith.constant 0 : index
    %c0_150 = arith.constant 0 : index
    %347 = vector.load %arg21[%c2_148, %c0_149, %c0_150] : memref<4x1x32xf32, #tpu.memory_space<vmem>>, vector<1x1x32xf32>
    %348 = vector.shape_cast %347 : vector<1x1x32xf32> to vector<1x32xf32>
    %349 = vector.broadcast %348 : vector<1x32xf32> to vector<8x32xf32>
    %350 = arith.addf %346, %349 : vector<8x32xf32>
    %351 = vector.extract_strided_slice %258 {offsets = [0, 2], sizes = [8, 1], strides = [1, 1]} : vector<8x4xf32> to vector<8x1xf32>
    %352 = vector.broadcast %351 : vector<8x1xf32> to vector<8x32xf32>
    %353 = arith.mulf %352, %350 : vector<8x32xf32>
    %354 = arith.addf %322, %353 : vector<8x32xf32>
    %c3 = arith.constant 3 : index
    %c0_151 = arith.constant 0 : index
    %c0_152 = arith.constant 0 : index
    %355 = vector.load %arg18[%c3, %c0_151, %c0_152] : memref<4x32x64xbf16, #tpu.memory_space<vmem>>, vector<1x32x64xbf16>
    %356 = vector.shape_cast %355 : vector<1x32x64xbf16> to vector<32x64xbf16>
    %cst_153 = arith.constant dense<0.000000e+00> : vector<8x64xf32>
    %357 = tpu.matmul %183, %356, %cst_153 {dimension_numbers = #tpu.dot_dimension_numbers<[1], [0], [0], [1], [0, 0, 1, 1], [], []>} : vector<8x32xbf16>, vector<32x64xbf16>, vector<8x64xf32> -> vector<8x64xf32>
    %c3_154 = arith.constant 3 : index
    %c0_155 = arith.constant 0 : index
    %c0_156 = arith.constant 0 : index
    %358 = vector.load %arg19[%c3_154, %c0_155, %c0_156] : memref<4x1x64xf32, #tpu.memory_space<vmem>>, vector<1x1x64xf32>
    %359 = vector.shape_cast %358 : vector<1x1x64xf32> to vector<1x64xf32>
    %360 = vector.broadcast %359 : vector<1x64xf32> to vector<8x64xf32>
    %361 = arith.addf %357, %360 : vector<8x64xf32>
    %362 = arith.mulf %361, %361 : vector<8x64xf32>
    %363 = arith.mulf %361, %362 : vector<8x64xf32>
    %cst_157 = arith.constant 4.471500e-02 : f32
    %364 = vector.broadcast %cst_157 : f32 to vector<8x64xf32>
    %365 = arith.mulf %364, %363 : vector<8x64xf32>
    %366 = arith.addf %361, %365 : vector<8x64xf32>
    %cst_158 = arith.constant 0.797884583 : f32
    %367 = vector.broadcast %cst_158 : f32 to vector<8x64xf32>
    %368 = arith.mulf %367, %366 : vector<8x64xf32>
    %369 = math.tanh %368 : vector<8x64xf32>
    %cst_159 = arith.constant 1.000000e+00 : f32
    %370 = vector.broadcast %cst_159 : f32 to vector<8x64xf32>
    %371 = arith.addf %370, %369 : vector<8x64xf32>
    %cst_160 = arith.constant 5.000000e-01 : f32
    %372 = vector.broadcast %cst_160 : f32 to vector<8x64xf32>
    %373 = arith.mulf %372, %371 : vector<8x64xf32>
    %374 = arith.mulf %361, %373 : vector<8x64xf32>
    %375 = arith.truncf %374 : vector<8x64xf32> to vector<8x64xbf16>
    %c3_161 = arith.constant 3 : index
    %c0_162 = arith.constant 0 : index
    %c0_163 = arith.constant 0 : index
    %376 = vector.load %arg20[%c3_161, %c0_162, %c0_163] : memref<4x64x32xbf16, #tpu.memory_space<vmem>>, vector<1x64x32xbf16>
    %377 = vector.shape_cast %376 : vector<1x64x32xbf16> to vector<64x32xbf16>
    %cst_164 = arith.constant dense<0.000000e+00> : vector<8x32xf32>
    %378 = tpu.matmul %375, %377, %cst_164 {dimension_numbers = #tpu.dot_dimension_numbers<[1], [0], [0], [1], [0, 0, 1, 1], [], []>} : vector<8x64xbf16>, vector<64x32xbf16>, vector<8x32xf32> -> vector<8x32xf32>
    %c3_165 = arith.constant 3 : index
    %c0_166 = arith.constant 0 : index
    %c0_167 = arith.constant 0 : index
    %379 = vector.load %arg21[%c3_165, %c0_166, %c0_167] : memref<4x1x32xf32, #tpu.memory_space<vmem>>, vector<1x1x32xf32>
    %380 = vector.shape_cast %379 : vector<1x1x32xf32> to vector<1x32xf32>
    %381 = vector.broadcast %380 : vector<1x32xf32> to vector<8x32xf32>
    %382 = arith.addf %378, %381 : vector<8x32xf32>
    %383 = vector.extract_strided_slice %258 {offsets = [0, 3], sizes = [8, 1], strides = [1, 1]} : vector<8x4xf32> to vector<8x1xf32>
    %384 = vector.broadcast %383 : vector<8x1xf32> to vector<8x32xf32>
    %385 = arith.mulf %384, %382 : vector<8x32xf32>
    %386 = arith.addf %354, %385 : vector<8x32xf32>
    %387 = arith.addf %160, %386 : vector<8x32xf32>
    %c0_168 = arith.constant 0 : index
    %c0_169 = arith.constant 0 : index
    %c0_170 = arith.constant 0 : index
    %388 = vector.load %arg22[%c0_168, %c0_169, %c0_170] : memref<1x8x32xf32, #tpu.memory_space<vmem>>, vector<1x8x32xf32>
    %389 = vector.shape_cast %388 : vector<1x8x32xf32> to vector<8x32xf32>
    %390 = vector.shape_cast %387 : vector<8x32xf32> to vector<1x8x32xf32>
    tpu.vector_store %arg22[%c0_168, %c0_169, %c0_170], %390 {strides = array<i32>} : memref<1x8x32xf32, #tpu.memory_space<vmem>>, vector<1x8x32xf32>,
    return
  }
  func.func @transform_0(%arg0: i32) -> (i32, i32, i32) {
    %c0_i32 = arith.constant 0 : i32
    %c0_i32_0 = arith.constant 0 : i32
    %c0_i32_1 = arith.constant 0 : i32
    return %arg0, %c0_i32, %c0_i32_0 : i32, i32, i32
  }
  func.func @transform_1(%arg0: i32) -> (i32, i32) {
    %c0_i32 = arith.constant 0 : i32
    %c0_i32_0 = arith.constant 0 : i32
    %c0_i32_1 = arith.constant 0 : i32
    return %c0_i32, %c0_i32_0 : i32, i32
  }
  func.func @transform_2(%arg0: i32) -> (i32, i32) {
    %c0_i32 = arith.constant 0 : i32
    %c0_i32_0 = arith.constant 0 : i32
    %c0_i32_1 = arith.constant 0 : i32
    return %c0_i32, %c0_i32_0 : i32, i32
  }
  func.func @transform_3(%arg0: i32) -> (i32, i32) {
    %c0_i32 = arith.constant 0 : i32
    %c0_i32_0 = arith.constant 0 : i32
    %c0_i32_1 = arith.constant 0 : i32
    return %c0_i32, %c0_i32_0 : i32, i32
  }
  func.func @transform_4(%arg0: i32) -> (i32, i32) {
    %c0_i32 = arith.constant 0 : i32
    %c0_i32_0 = arith.constant 0 : i32
    %c0_i32_1 = arith.constant 0 : i32
    return %c0_i32, %c0_i32_0 : i32, i32
  }
  func.func @transform_5(%arg0: i32) -> (i32, i32) {
    %c0_i32 = arith.constant 0 : i32
    %c0_i32_0 = arith.constant 0 : i32
    %c0_i32_1 = arith.constant 0 : i32
    return %c0_i32, %c0_i32_0 : i32, i32
  }
  func.func @transform_6(%arg0: i32) -> (i32, i32) {
    %c0_i32 = arith.constant 0 : i32
    %c0_i32_0 = arith.constant 0 : i32
    %c0_i32_1 = arith.constant 0 : i32
    return %c0_i32, %c0_i32_0 : i32, i32
  }
  func.func @transform_7(%arg0: i32) -> (i32, i32) {
    %c0_i32 = arith.constant 0 : i32
    %c0_i32_0 = arith.constant 0 : i32
    %c0_i32_1 = arith.constant 0 : i32
    return %c0_i32, %c0_i32_0 : i32, i32
  }
  func.func @transform_8(%arg0: i32) -> (i32, i32) {
    %c0_i32 = arith.constant 0 : i32
    %c0_i32_0 = arith.constant 0 : i32
    %c0_i32_1 = arith.constant 0 : i32
    return %c0_i32, %c0_i32_0 : i32, i32
  }
  func.func @transform_9(%arg0: i32) -> (i32, i32) {
    %c0_i32 = arith.constant 0 : i32
    %c0_i32_0 = arith.constant 0 : i32
    %c0_i32_1 = arith.constant 0 : i32
    return %c0_i32, %c0_i32_0 : i32, i32
  }
  func.func @transform_10(%arg0: i32) -> (i32, i32) {
    %c0_i32 = arith.constant 0 : i32
    %c0_i32_0 = arith.constant 0 : i32
    %c0_i32_1 = arith.constant 0 : i32
    return %c0_i32, %c0_i32_0 : i32, i32
  }
  func.func @transform_11(%arg0: i32) -> (i32, i32) {
    %c0_i32 = arith.constant 0 : i32
    %c0_i32_0 = arith.constant 0 : i32
    %c0_i32_1 = arith.constant 0 : i32
    return %c0_i32, %c0_i32_0 : i32, i32
  }
  func.func @transform_12(%arg0: i32) -> (i32, i32) {
    %c0_i32 = arith.constant 0 : i32
    %c0_i32_0 = arith.constant 0 : i32
    %c0_i32_1 = arith.constant 0 : i32
    return %c0_i32, %c0_i32_0 : i32, i32
  }
  func.func @transform_13(%arg0: i32) -> (i32, i32) {
    %c0_i32 = arith.constant 0 : i32
    %c0_i32_0 = arith.constant 0 : i32
    %c0_i32_1 = arith.constant 0 : i32
    return %c0_i32, %c0_i32_0 : i32, i32
  }
  func.func @transform_14(%arg0: i32) -> (i32, i32) {
    %c0_i32 = arith.constant 0 : i32
    %c0_i32_0 = arith.constant 0 : i32
    %c0_i32_1 = arith.constant 0 : i32
    return %c0_i32, %c0_i32_0 : i32, i32
  }
  func.func @transform_15(%arg0: i32) -> (i32, i32) {
    %c0_i32 = arith.constant 0 : i32
    %c0_i32_0 = arith.constant 0 : i32
    %c0_i32_1 = arith.constant 0 : i32
    return %c0_i32, %c0_i32_0 : i32, i32
  }
  func.func @transform_16(%arg0: i32) -> (i32, i32) {
    %c0_i32 = arith.constant 0 : i32
    %c0_i32_0 = arith.constant 0 : i32
    %c0_i32_1 = arith.constant 0 : i32
    return %c0_i32, %c0_i32_0 : i32, i32
  }
  func.func @transform_17(%arg0: i32) -> (i32, i32, i32) {
    %c0_i32 = arith.constant 0 : i32
    %c0_i32_0 = arith.constant 0 : i32
    %c0_i32_1 = arith.constant 0 : i32
    %c0_i32_2 = arith.constant 0 : i32
    return %c0_i32, %c0_i32_0, %c0_i32_1 : i32, i32, i32
  }
  func.func @transform_18(%arg0: i32) -> (i32, i32, i32) {
    %c0_i32 = arith.constant 0 : i32
    %c0_i32_0 = arith.constant 0 : i32
    %c0_i32_1 = arith.constant 0 : i32
    %c0_i32_2 = arith.constant 0 : i32
    return %c0_i32, %c0_i32_0, %c0_i32_1 : i32, i32, i32
  }
  func.func @transform_19(%arg0: i32) -> (i32, i32, i32) {
    %c0_i32 = arith.constant 0 : i32
    %c0_i32_0 = arith.constant 0 : i32
    %c0_i32_1 = arith.constant 0 : i32
    %c0_i32_2 = arith.constant 0 : i32
    return %c0_i32, %c0_i32_0, %c0_i32_1 : i32, i32, i32
  }
  func.func @transform_20(%arg0: i32) -> (i32, i32, i32) {
    %c0_i32 = arith.constant 0 : i32
    %c0_i32_0 = arith.constant 0 : i32
    %c0_i32_1 = arith.constant 0 : i32
    %c0_i32_2 = arith.constant 0 : i32
    return %c0_i32, %c0_i32_0, %c0_i32_1 : i32, i32, i32
  }
  func.func @transform_21(%arg0: i32) -> (i32, i32, i32) {
    %c0_i32 = arith.constant 0 : i32
    %c0_i32_0 = arith.constant 0 : i32
    %c0_i32_1 = arith.constant 0 : i32
    return %arg0, %c0_i32, %c0_i32_0 : i32, i32, i32
  }
}

</mosaic_0001>

<llo_original>
// kernel: tpu_custom_call.1
$region0: #{tpu_custom_call.1}
  #allocation0 [shape = 'u32[]', space=smem, size = 0x4, offset = 0x4, fixed_abs, tag = 'smem constant byte address 0x4 - core index']
  #allocation1 [shape = 'u32[144,128]{1,0:T(1,128)}', space=vmem, size = 0x12000, scoped, tag = 'internal scratch']
  %s0 = inlined_call_operand.vmem [shape: f32[2,8,32], index: 0, kind: input, shape index: {}]
  %s1 = inlined_call_operand.vmem [shape: f32[1,32], index: 1, kind: input, shape index: {}]
  %s2 = inlined_call_operand.vmem [shape: f32[1,32], index: 2, kind: input, shape index: {}]
  %s3 = inlined_call_operand.vmem [shape: bf16[32,48], index: 3, kind: input, shape index: {}]
  %s4 = inlined_call_operand.vmem [shape: f32[1,48], index: 4, kind: input, shape index: {}]
  %s5 = inlined_call_operand.vmem [shape: bf16[16,64], index: 5, kind: input, shape index: {}]
  %s6 = inlined_call_operand.vmem [shape: f32[1,64], index: 6, kind: input, shape index: {}]
  %s7 = inlined_call_operand.vmem [shape: bf16[32,32], index: 7, kind: input, shape index: {}]
  %s8 = inlined_call_operand.vmem [shape: f32[1,32], index: 8, kind: input, shape index: {}]
  %s9 = inlined_call_operand.vmem [shape: f32[1,32], index: 9, kind: input, shape index: {}]
  %s10 = inlined_call_operand.vmem [shape: f32[1,32], index: 10, kind: input, shape index: {}]
  %s11 = inlined_call_operand.vmem [shape: bf16[32,4], index: 11, kind: input, shape index: {}]
  %s12 = inlined_call_operand.vmem [shape: f32[1,4], index: 12, kind: input, shape index: {}]
  %s13 = inlined_call_operand.vmem [shape: bf16[32,128], index: 13, kind: input, shape index: {}]
  %s14 = inlined_call_operand.vmem [shape: f32[1,128], index: 14, kind: input, shape index: {}]
  %s15 = inlined_call_operand.vmem [shape: bf16[128,32], index: 15, kind: input, shape index: {}]
  %s16 = inlined_call_operand.vmem [shape: f32[1,32], index: 16, kind: input, shape index: {}]
  %s17 = inlined_call_operand.vmem [shape: bf16[4,32,64], index: 17, kind: input, shape index: {}]
  %s18 = inlined_call_operand.vmem [shape: f32[4,1,64], index: 18, kind: input, shape index: {}]
  %s19 = inlined_call_operand.vmem [shape: bf16[4,64,32], index: 19, kind: input, shape index: {}]
  %s20 = inlined_call_operand.vmem [shape: f32[4,1,32], index: 20, kind: input, shape index: {}]
  %s21 = inlined_call_operand.hbm [shape: f32[2,8,32], index: 21, kind: output, shape index: {}]
  %s22 = sld [smem:[#allocation0]]
  $region117: #{tpu_custom_call.1} parent=0
    _
  %s24 = ssub.s32 1, %s22
  %s25 = scalar_select 0, %s24, %s22
  $region1: #{tpu_custom_call.1} parent=0
    #allocation2 [shape = 'u8[8192]{0}', space=vmem, size = 0x2000, scoped, tag = 'output window, operand 0']
    #allocation3 [shape = 's32[2]{0}', space=sflag, size = 0x8, scoped, tag = 'scoped memory for tpu_custom_call.1']
    %26 = vsyncpa [#allocation3], 0
    %s27 = scalar_lea.sflag [#allocation3], 1
    %28 = vsyncpa %s27, 0
    loop: start=0, step=1, limit=4
    $region2: #{tpu_custom_call.1} parent=1 // loop_pre_header
      _
    $region3: #{tpu_custom_call.1} parent=1 // loop_header
      %s30 = sphi 0, %s34
      %p31 = scmp.ge.s32.totalorder %s30, 4
      %s40 = sphi 0, %s42
      %s43 = sphi 0, %s40
      %s44 = sphi 0, %s43
      %s60 = sphi 0, %s44
      %s64 = sphi 0, %s64
      %s66 = sphi 0, %s64
      %s67 = sphi 0, %s66
      %s81 = sphi 0, %s67
      %s85 = sphi 0, %s85
      %s87 = sphi 0, %s85
      %s88 = sphi 0, %s87
      %s102 = sphi 0, %s88
      %s106 = sphi 0, %s106
      %s108 = sphi 0, %s106
      %s109 = sphi 0, %s108
      %s123 = sphi 0, %s109
      %s127 = sphi 0, %s127
      %s129 = sphi 0, %s127
      %s130 = sphi 0, %s129
      %s144 = sphi 0, %s130
      %s148 = sphi 0, %s148
      %s150 = sphi 0, %s148
      %s151 = sphi 0, %s150
      %s165 = sphi 0, %s151
      %s169 = sphi 0, %s169
      %s171 = sphi 0, %s169
      %s172 = sphi 0, %s171
      %s186 = sphi 0, %s172
      %s190 = sphi 0, %s190
      %s192 = sphi 0, %s190
      %s193 = sphi 0, %s192
      %s207 = sphi 0, %s193
      %s211 = sphi 0, %s211
      %s213 = sphi 0, %s211
      %s214 = sphi 0, %s213
      %s228 = sphi 0, %s214
      %s232 = sphi 0, %s232
      %s234 = sphi 0, %s232
      %s235 = sphi 0, %s234
      %s249 = sphi 0, %s235
      %s253 = sphi 0, %s253
      %s255 = sphi 0, %s253
      %s256 = sphi 0, %s255
      %s270 = sphi 0, %s256
      %s274 = sphi 0, %s274
      %s276 = sphi 0, %s274
      %s277 = sphi 0, %s276
      %s291 = sphi 0, %s277
      %s295 = sphi 0, %s295
      %s297 = sphi 0, %s295
      %s298 = sphi 0, %s297
      %s312 = sphi 0, %s298
      %s316 = sphi 0, %s316
      %s318 = sphi 0, %s316
      %s319 = sphi 0, %s318
      %s333 = sphi 0, %s319
      %s337 = sphi 0, %s337
      %s339 = sphi 0, %s337
      %s340 = sphi 0, %s339
      %s354 = sphi 0, %s340
      %s358 = sphi 0, %s358
      %s360 = sphi 0, %s358
      %s361 = sphi 0, %s360
      %s375 = sphi 0, %s361
      %s379 = sphi 0, %s379
      %s381 = sphi 0, %s379
      %s382 = sphi 0, %s381
      %s396 = sphi 0, %s382
      %s400 = sphi 0, %s400
      %s402 = sphi 0, %s400
      %s403 = sphi 0, %s402
      %s417 = sphi 0, %s403
      %s421 = sphi 0, %s421
      %s423 = sphi 0, %s421
      %s424 = sphi 0, %s423
      %s438 = sphi 0, %s424
      %s442 = sphi 0, %s442
      %s444 = sphi 0, %s442
      %s445 = sphi 0, %s444
      %s459 = sphi 0, %s445
      %s463 = sphi 0, %s463
      %s465 = sphi 0, %s463
      %s466 = sphi 0, %s465
      %s480 = sphi 0, %s466
      %s486 = sphi 0, %s488
      %s489 = sphi 0, %s486
      %s490 = sphi 0, %s489
      %s506 = sphi 0, %s490
    $region4: #{tpu_custom_call.1} parent=1 // loop_header_branch
      %33 = sbr.rel (%p31) target = $region8
    $region5: #{tpu_custom_call.1} parent=1 // loop_body
      %s35 = ssub.s32 %s30, 1
      %s36 = ssub.s32 %s30, 2
      %s37 = sadd.s32 %s30, 1
      %s38 = ssub.s32 %s30, %s37
      %p39 = scmp.eq.s32.totalorder %s38, 0
      %s41 = sadd.s32 %s40, 1
      %s42 = scalar_select %p39, %s40, %s41
      %p45 = pneg %p39
      %p46 = scmp.eq.s32.totalorder %s30, 1
      %p47 = por %p45, %p46
      %p48 = scmp.ne.s32.totalorder %s40, %s43
      %p49 = scmp.eq.s32.totalorder %s30, 0
      %p50 = por %p48, %p49
      %p51 = scmp.ne.s32.totalorder %s40, %s43
      %p52 = scmp.eq.s32.totalorder %s35, 1
      %p53 = por %p51, %p52
      %p54 = scmp.ne.s32.totalorder %s43, %s44
      %p55 = scmp.eq.s32.totalorder %s35, 0
      %p56 = por %p54, %p55
      %p57 = scmp.ne.s32.totalorder %s43, %s44
      %p58 = scmp.eq.s32.totalorder %s36, 1
      %p59 = por %p57, %p58
      %p61 = scmp.ne.s32.totalorder %s44, %s60
      %p62 = scmp.eq.s32.totalorder %s36, 0
      %p63 = por %p61, %p62
      %s65 = sadd.s32 %s64, 1
      %p68 = scmp.eq.s32.totalorder %s30, 1
      %p69 = scmp.ne.s32.totalorder %s64, %s66
      %p70 = scmp.eq.s32.totalorder %s30, 0
      %p71 = por %p69, %p70
      %p72 = scmp.ne.s32.totalorder %s64, %s66
      %p73 = scmp.eq.s32.totalorder %s35, 1
      %p74 = por %p72, %p73
      %p75 = scmp.ne.s32.totalorder %s66, %s67
      %p76 = scmp.eq.s32.totalorder %s35, 0
      %p77 = por %p75, %p76
      %p78 = scmp.ne.s32.totalorder %s66, %s67
      %p79 = scmp.eq.s32.totalorder %s36, 1
      %p80 = por %p78, %p79
      %p82 = scmp.ne.s32.totalorder %s67, %s81
      %p83 = scmp.eq.s32.totalorder %s36, 0
      %p84 = por %p82, %p83
      %s86 = sadd.s32 %s85, 1
      %p89 = scmp.eq.s32.totalorder %s30, 1
      %p90 = scmp.ne.s32.totalorder %s85, %s87
      %p91 = scmp.eq.s32.totalorder %s30, 0
      %p92 = por %p90, %p91
      %p93 = scmp.ne.s32.totalorder %s85, %s87
      %p94 = scmp.eq.s32.totalorder %s35, 1
      %p95 = por %p93, %p94
      %p96 = scmp.ne.s32.totalorder %s87, %s88
      %p97 = scmp.eq.s32.totalorder %s35, 0
      %p98 = por %p96, %p97
      %p99 = scmp.ne.s32.totalorder %s87, %s88
      %p100 = scmp.eq.s32.totalorder %s36, 1
      %p101 = por %p99, %p100
      %p103 = scmp.ne.s32.totalorder %s88, %s102
      %p104 = scmp.eq.s32.totalorder %s36, 0
      %p105 = por %p103, %p104
      %s107 = sadd.s32 %s106, 1
      %p110 = scmp.eq.s32.totalorder %s30, 1
      %p111 = scmp.ne.s32.totalorder %s106, %s108
      %p112 = scmp.eq.s32.totalorder %s30, 0
      %p113 = por %p111, %p112
      %p114 = scmp.ne.s32.totalorder %s106, %s108
      %p115 = scmp.eq.s32.totalorder %s35, 1
      %p116 = por %p114, %p115
      %p117 = scmp.ne.s32.totalorder %s108, %s109
      %p118 = scmp.eq.s32.totalorder %s35, 0
      %p119 = por %p117, %p118
      %p120 = scmp.ne.s32.totalorder %s108, %s109
      %p121 = scmp.eq.s32.totalorder %s36, 1
      %p122 = por %p120, %p121
      %p124 = scmp.ne.s32.totalorder %s109, %s123
      %p125 = scmp.eq.s32.totalorder %s36, 0
      %p126 = por %p124, %p125
      %s128 = sadd.s32 %s127, 1
      %p131 = scmp.eq.s32.totalorder %s30, 1
      %p132 = scmp.ne.s32.totalorder %s127, %s129
      %p133 = scmp.eq.s32.totalorder %s30, 0
      %p134 = por %p132, %p133
      %p135 = scmp.ne.s32.totalorder %s127, %s129
      %p136 = scmp.eq.s32.totalorder %s35, 1
      %p137 = por %p135, %p136
      %p138 = scmp.ne.s32.totalorder %s129, %s130
      %p139 = scmp.eq.s32.totalorder %s35, 0
      %p140 = por %p138, %p139
      %p141 = scmp.ne.s32.totalorder %s129, %s130
      %p142 = scmp.eq.s32.totalorder %s36, 1
      %p143 = por %p141, %p142
      %p145 = scmp.ne.s32.totalorder %s130, %s144
      %p146 = scmp.eq.s32.totalorder %s36, 0
      %p147 = por %p145, %p146
      %s149 = sadd.s32 %s148, 1
      %p152 = scmp.eq.s32.totalorder %s30, 1
      %p153 = scmp.ne.s32.totalorder %s148, %s150
      %p154 = scmp.eq.s32.totalorder %s30, 0
      %p155 = por %p153, %p154
      %p156 = scmp.ne.s32.totalorder %s148, %s150
      %p157 = scmp.eq.s32.totalorder %s35, 1
      %p158 = por %p156, %p157
      %p159 = scmp.ne.s32.totalorder %s150, %s151
      %p160 = scmp.eq.s32.totalorder %s35, 0
      %p161 = por %p159, %p160
      %p162 = scmp.ne.s32.totalorder %s150, %s151
      %p163 = scmp.eq.s32.totalorder %s36, 1
      %p164 = por %p162, %p163
      %p166 = scmp.ne.s32.totalorder %s151, %s165
      %p167 = scmp.eq.s32.totalorder %s36, 0
      %p168 = por %p166, %p167
      %s170 = sadd.s32 %s169, 1
      %p173 = scmp.eq.s32.totalorder %s30, 1
      %p174 = scmp.ne.s32.totalorder %s169, %s171
      %p175 = scmp.eq.s32.totalorder %s30, 0
      %p176 = por %p174, %p175
      %p177 = scmp.ne.s32.totalorder %s169, %s171
      %p178 = scmp.eq.s32.totalorder %s35, 1
      %p179 = por %p177, %p178
      %p180 = scmp.ne.s32.totalorder %s171, %s172
      %p181 = scmp.eq.s32.totalorder %s35, 0
      %p182 = por %p180, %p181
      %p183 = scmp.ne.s32.totalorder %s171, %s172
      %p184 = scmp.eq.s32.totalorder %s36, 1
      %p185 = por %p183, %p184
      %p187 = scmp.ne.s32.totalorder %s172, %s186
      %p188 = scmp.eq.s32.totalorder %s36, 0
      %p189 = por %p187, %p188
      %s191 = sadd.s32 %s190, 1
      %p194 = scmp.eq.s32.totalorder %s30, 1
      %p195 = scmp.ne.s32.totalorder %s190, %s192
      %p196 = scmp.eq.s32.totalorder %s30, 0
      %p197 = por %p195, %p196
      %p198 = scmp.ne.s32.totalorder %s190, %s192
      %p199 = scmp.eq.s32.totalorder %s35, 1
      %p200 = por %p198, %p199
      %p201 = scmp.ne.s32.totalorder %s192, %s193
      %p202 = scmp.eq.s32.totalorder %s35, 0
      %p203 = por %p201, %p202
      %p204 = scmp.ne.s32.totalorder %s192, %s193
      %p205 = scmp.eq.s32.totalorder %s36, 1
      %p206 = por %p204, %p205
      %p208 = scmp.ne.s32.totalorder %s193, %s207
      %p209 = scmp.eq.s32.totalorder %s36, 0
      %p210 = por %p208, %p209
      %s212 = sadd.s32 %s211, 1
      %p215 = scmp.eq.s32.totalorder %s30, 1
      %p216 = scmp.ne.s32.totalorder %s211, %s213
      %p217 = scmp.eq.s32.totalorder %s30, 0
      %p218 = por %p216, %p217
      %p219 = scmp.ne.s32.totalorder %s211, %s213
      %p220 = scmp.eq.s32.totalorder %s35, 1
      %p221 = por %p219, %p220
      %p222 = scmp.ne.s32.totalorder %s213, %s214
      %p223 = scmp.eq.s32.totalorder %s35, 0
      %p224 = por %p222, %p223
      %p225 = scmp.ne.s32.totalorder %s213, %s214
      %p226 = scmp.eq.s32.totalorder %s36, 1
      %p227 = por %p225, %p226
      %p229 = scmp.ne.s32.totalorder %s214, %s228
      %p230 = scmp.eq.s32.totalorder %s36, 0
      %p231 = por %p229, %p230
      %s233 = sadd.s32 %s232, 1
      %p236 = scmp.eq.s32.totalorder %s30, 1
      %p237 = scmp.ne.s32.totalorder %s232, %s234
      %p238 = scmp.eq.s32.totalorder %s30, 0
      %p239 = por %p237, %p238
      %p240 = scmp.ne.s32.totalorder %s232, %s234
      %p241 = scmp.eq.s32.totalorder %s35, 1
      %p242 = por %p240, %p241
      %p243 = scmp.ne.s32.totalorder %s234, %s235
      %p244 = scmp.eq.s32.totalorder %s35, 0
      %p245 = por %p243, %p244
      %p246 = scmp.ne.s32.totalorder %s234, %s235
      %p247 = scmp.eq.s32.totalorder %s36, 1
      %p248 = por %p246, %p247
      %p250 = scmp.ne.s32.totalorder %s235, %s249
      %p251 = scmp.eq.s32.totalorder %s36, 0
      %p252 = por %p250, %p251
      %s254 = sadd.s32 %s253, 1
      %p257 = scmp.eq.s32.totalorder %s30, 1
      %p258 = scmp.ne.s32.totalorder %s253, %s255
      %p259 = scmp.eq.s32.totalorder %s30, 0
      %p260 = por %p258, %p259
      %p261 = scmp.ne.s32.totalorder %s253, %s255
      %p262 = scmp.eq.s32.totalorder %s35, 1
      %p263 = por %p261, %p262
      %p264 = scmp.ne.s32.totalorder %s255, %s256
      %p265 = scmp.eq.s32.totalorder %s35, 0
      %p266 = por %p264, %p265
      %p267 = scmp.ne.s32.totalorder %s255, %s256
      %p268 = scmp.eq.s32.totalorder %s36, 1
      %p269 = por %p267, %p268
      %p271 = scmp.ne.s32.totalorder %s256, %s270
      %p272 = scmp.eq.s32.totalorder %s36, 0
      %p273 = por %p271, %p272
      %s275 = sadd.s32 %s274, 1
      %p278 = scmp.eq.s32.totalorder %s30, 1
      %p279 = scmp.ne.s32.totalorder %s274, %s276
      %p280 = scmp.eq.s32.totalorder %s30, 0
      %p281 = por %p279, %p280
      %p282 = scmp.ne.s32.totalorder %s274, %s276
      %p283 = scmp.eq.s32.totalorder %s35, 1
      %p284 = por %p282, %p283
      %p285 = scmp.ne.s32.totalorder %s276, %s277
      %p286 = scmp.eq.s32.totalorder %s35, 0
      %p287 = por %p285, %p286
      %p288 = scmp.ne.s32.totalorder %s276, %s277
      %p289 = scmp.eq.s32.totalorder %s36, 1
      %p290 = por %p288, %p289
      %p292 = scmp.ne.s32.totalorder %s277, %s291
      %p293 = scmp.eq.s32.totalorder %s36, 0
      %p294 = por %p292, %p293
      %s296 = sadd.s32 %s295, 1
      %p299 = scmp.eq.s32.totalorder %s30, 1
      %p300 = scmp.ne.s32.totalorder %s295, %s297
      %p301 = scmp.eq.s32.totalorder %s30, 0
      %p302 = por %p300, %p301
      %p303 = scmp.ne.s32.totalorder %s295, %s297
      %p304 = scmp.eq.s32.totalorder %s35, 1
      %p305 = por %p303, %p304
      %p306 = scmp.ne.s32.totalorder %s297, %s298
      %p307 = scmp.eq.s32.totalorder %s35, 0
      %p308 = por %p306, %p307
      %p309 = scmp.ne.s32.totalorder %s297, %s298
      %p310 = scmp.eq.s32.totalorder %s36, 1
      %p311 = por %p309, %p310
      %p313 = scmp.ne.s32.totalorder %s298, %s312
      %p314 = scmp.eq.s32.totalorder %s36, 0
      %p315 = por %p313, %p314
      %s317 = sadd.s32 %s316, 1
      %p320 = scmp.eq.s32.totalorder %s30, 1
      %p321 = scmp.ne.s32.totalorder %s316, %s318
      %p322 = scmp.eq.s32.totalorder %s30, 0
      %p323 = por %p321, %p322
      %p324 = scmp.ne.s32.totalorder %s316, %s318
      %p325 = scmp.eq.s32.totalorder %s35, 1
      %p326 = por %p324, %p325
      %p327 = scmp.ne.s32.totalorder %s318, %s319
      %p328 = scmp.eq.s32.totalorder %s35, 0
      %p329 = por %p327, %p328
      %p330 = scmp.ne.s32.totalorder %s318, %s319
      %p331 = scmp.eq.s32.totalorder %s36, 1
      %p332 = por %p330, %p331
      %p334 = scmp.ne.s32.totalorder %s319, %s333
      %p335 = scmp.eq.s32.totalorder %s36, 0
      %p336 = por %p334, %p335
      %s338 = sadd.s32 %s337, 1
      %p341 = scmp.eq.s32.totalorder %s30, 1
      %p342 = scmp.ne.s32.totalorder %s337, %s339
      %p343 = scmp.eq.s32.totalorder %s30, 0
      %p344 = por %p342, %p343
      %p345 = scmp.ne.s32.totalorder %s337, %s339
      %p346 = scmp.eq.s32.totalorder %s35, 1
      %p347 = por %p345, %p346
      %p348 = scmp.ne.s32.totalorder %s339, %s340
      %p349 = scmp.eq.s32.totalorder %s35, 0
      %p350 = por %p348, %p349
      %p351 = scmp.ne.s32.totalorder %s339, %s340
      %p352 = scmp.eq.s32.totalorder %s36, 1
      %p353 = por %p351, %p352
      %p355 = scmp.ne.s32.totalorder %s340, %s354
      %p356 = scmp.eq.s32.totalorder %s36, 0
      %p357 = por %p355, %p356
      %s359 = sadd.s32 %s358, 1
      %p362 = scmp.eq.s32.totalorder %s30, 1
      %p363 = scmp.ne.s32.totalorder %s358, %s360
      %p364 = scmp.eq.s32.totalorder %s30, 0
      %p365 = por %p363, %p364
      %p366 = scmp.ne.s32.totalorder %s358, %s360
      %p367 = scmp.eq.s32.totalorder %s35, 1
      %p368 = por %p366, %p367
      %p369 = scmp.ne.s32.totalorder %s360, %s361
      %p370 = scmp.eq.s32.totalorder %s35, 0
      %p371 = por %p369, %p370
      %p372 = scmp.ne.s32.totalorder %s360, %s361
      %p373 = scmp.eq.s32.totalorder %s36, 1
      %p374 = por %p372, %p373
      %p376 = scmp.ne.s32.totalorder %s361, %s375
      %p377 = scmp.eq.s32.totalorder %s36, 0
      %p378 = por %p376, %p377
      %s380 = sadd.s32 %s379, 1
      %p383 = scmp.eq.s32.totalorder %s30, 1
      %p384 = scmp.ne.s32.totalorder %s379, %s381
      %p385 = scmp.eq.s32.totalorder %s30, 0
      %p386 = por %p384, %p385
      %p387 = scmp.ne.s32.totalorder %s379, %s381
      %p388 = scmp.eq.s32.totalorder %s35, 1
      %p389 = por %p387, %p388
      %p390 = scmp.ne.s32.totalorder %s381, %s382
      %p391 = scmp.eq.s32.totalorder %s35, 0
      %p392 = por %p390, %p391
      %p393 = scmp.ne.s32.totalorder %s381, %s382
      %p394 = scmp.eq.s32.totalorder %s36, 1
      %p395 = por %p393, %p394
      %p397 = scmp.ne.s32.totalorder %s382, %s396
      %p398 = scmp.eq.s32.totalorder %s36, 0
      %p399 = por %p397, %p398
      %s401 = sadd.s32 %s400, 1
      %p404 = scmp.eq.s32.totalorder %s30, 1
      %p405 = scmp.ne.s32.totalorder %s400, %s402
      %p406 = scmp.eq.s32.totalorder %s30, 0
      %p407 = por %p405, %p406
      %p408 = scmp.ne.s32.totalorder %s400, %s402
      %p409 = scmp.eq.s32.totalorder %s35, 1
      %p410 = por %p408, %p409
      %p411 = scmp.ne.s32.totalorder %s402, %s403
      %p412 = scmp.eq.s32.totalorder %s35, 0
      %p413 = por %p411, %p412
      %p414 = scmp.ne.s32.totalorder %s402, %s403
      %p415 = scmp.eq.s32.totalorder %s36, 1
      %p416 = por %p414, %p415
      %p418 = scmp.ne.s32.totalorder %s403, %s417
      %p419 = scmp.eq.s32.totalorder %s36, 0
      %p420 = por %p418, %p419
      %s422 = sadd.s32 %s421, 1
      %p425 = scmp.eq.s32.totalorder %s30, 1
      %p426 = scmp.ne.s32.totalorder %s421, %s423
      %p427 = scmp.eq.s32.totalorder %s30, 0
      %p428 = por %p426, %p427
      %p429 = scmp.ne.s32.totalorder %s421, %s423
      %p430 = scmp.eq.s32.totalorder %s35, 1
      %p431 = por %p429, %p430
      %p432 = scmp.ne.s32.totalorder %s423, %s424
      %p433 = scmp.eq.s32.totalorder %s35, 0
      %p434 = por %p432, %p433
      %p435 = scmp.ne.s32.totalorder %s423, %s424
      %p436 = scmp.eq.s32.totalorder %s36, 1
      %p437 = por %p435, %p436
      %p439 = scmp.ne.s32.totalorder %s424, %s438
      %p440 = scmp.eq.s32.totalorder %s36, 0
      %p441 = por %p439, %p440
      %s443 = sadd.s32 %s442, 1
      %p446 = scmp.eq.s32.totalorder %s30, 1
      %p447 = scmp.ne.s32.totalorder %s442, %s444
      %p448 = scmp.eq.s32.totalorder %s30, 0
      %p449 = por %p447, %p448
      %p450 = scmp.ne.s32.totalorder %s442, %s444
      %p451 = scmp.eq.s32.totalorder %s35, 1
      %p452 = por %p450, %p451
      %p453 = scmp.ne.s32.totalorder %s444, %s445
      %p454 = scmp.eq.s32.totalorder %s35, 0
      %p455 = por %p453, %p454
      %p456 = scmp.ne.s32.totalorder %s444, %s445
      %p457 = scmp.eq.s32.totalorder %s36, 1
      %p458 = por %p456, %p457
      %p460 = scmp.ne.s32.totalorder %s445, %s459
      %p461 = scmp.eq.s32.totalorder %s36, 0
      %p462 = por %p460, %p461
      %s464 = sadd.s32 %s463, 1
      %p467 = scmp.eq.s32.totalorder %s30, 1
      %p468 = scmp.ne.s32.totalorder %s463, %s465
      %p469 = scmp.eq.s32.totalorder %s30, 0
      %p470 = por %p468, %p469
      %p471 = scmp.ne.s32.totalorder %s463, %s465
      %p472 = scmp.eq.s32.totalorder %s35, 1
      %p473 = por %p471, %p472
      %p474 = scmp.ne.s32.totalorder %s465, %s466
      %p475 = scmp.eq.s32.totalorder %s35, 0
      %p476 = por %p474, %p475
      %p477 = scmp.ne.s32.totalorder %s465, %s466
      %p478 = scmp.eq.s32.totalorder %s36, 1
      %p479 = por %p477, %p478
      %p481 = scmp.ne.s32.totalorder %s466, %s480
      %p482 = scmp.eq.s32.totalorder %s36, 0
      %p483 = por %p481, %p482
      %s484 = ssub.s32 %s30, %s37
      %p485 = scmp.eq.s32.totalorder %s484, 0
      %s487 = sadd.s32 %s486, 1
      %s488 = scalar_select %p485, %s486, %s487
      %p491 = pneg %p485
      %p492 = scmp.eq.s32.totalorder %s30, 1
      %p493 = por %p491, %p492
      %p494 = scmp.ne.s32.totalorder %s486, %s489
      %p495 = scmp.eq.s32.totalorder %s30, 0
      %p496 = por %p494, %p495
      %p497 = scmp.ne.s32.totalorder %s486, %s489
      %p498 = scmp.eq.s32.totalorder %s35, 1
      %p499 = por %p497, %p498
      %p500 = scmp.ne.s32.totalorder %s489, %s490
      %p501 = scmp.eq.s32.totalorder %s35, 0
      %p502 = por %p500, %p501
      %p503 = scmp.ne.s32.totalorder %s489, %s490
      %p504 = scmp.eq.s32.totalorder %s36, 1
      %p505 = por %p503, %p504
      %p507 = scmp.ne.s32.totalorder %s490, %s506
      %p508 = scmp.eq.s32.totalorder %s36, 0
      %p509 = por %p507, %p508
      %p510 = scmp.le.s32.totalorder 1, %s30
      %p511 = scmp.lt.s32.totalorder %s30, 3
      %p512 = pnand %p510, %p511
      %p513 = pneg %p512
      // Predicated region
      $region9: #{tpu_custom_call.1} parent=5 // pred_check
        _
      $region10: #{tpu_custom_call.1} parent=5 // pred_check_branch
        %515 = sbr.rel (%p512) target = $region12
      $region11: #{tpu_custom_call.1} parent=5 // pred_region
        %s516 = ssub.s32 %s30, 1
        // Predicated region
        $region13: #{tpu_custom_call.1} parent=11 // pred_check
          %p517 = pneg %p77
        $region14: #{tpu_custom_call.1} parent=11 // pred_check_branch
          %519 = sbr.rel (%p517) target = $region16
        $region15: #{tpu_custom_call.1} parent=11 // pred_region
          _
        $region16: #{tpu_custom_call.1} parent=11 // pred_fallthru
          _
        // Predicated region
        $region17: #{tpu_custom_call.1} parent=11 // pred_check
          %p520 = pneg %p98
        $region18: #{tpu_custom_call.1} parent=11 // pred_check_branch
          %522 = sbr.rel (%p520) target = $region20
        $region19: #{tpu_custom_call.1} parent=11 // pred_region
          _
        $region20: #{tpu_custom_call.1} parent=11 // pred_fallthru
          _
        // Predicated region
        $region21: #{tpu_custom_call.1} parent=11 // pred_check
          %p523 = pneg %p119
        $region22: #{tpu_custom_call.1} parent=11 // pred_check_branch
          %525 = sbr.rel (%p523) target = $region24
        $region23: #{tpu_custom_call.1} parent=11 // pred_region
          _
        $region24: #{tpu_custom_call.1} parent=11 // pred_fallthru
          _
        // Predicated region
        $region25: #{tpu_custom_call.1} parent=11 // pred_check
          %p526 = pneg %p140
        $region26: #{tpu_custom_call.1} parent=11 // pred_check_branch
          %528 = sbr.rel (%p526) target = $region28
        $region27: #{tpu_custom_call.1} parent=11 // pred_region
          _
        $region28: #{tpu_custom_call.1} parent=11 // pred_fallthru
          _
        // Predicated region
        $region29: #{tpu_custom_call.1} parent=11 // pred_check
          %p529 = pneg %p161
        $region30: #{tpu_custom_call.1} parent=11 // pred_check_branch
          %531 = sbr.rel (%p529) target = $region32
        $region31: #{tpu_custom_call.1} parent=11 // pred_region
          _
        $region32: #{tpu_custom_call.1} parent=11 // pred_fallthru
          _
        // Predicated region
        $region33: #{tpu_custom_call.1} parent=11 // pred_check
          %p532 = pneg %p182
        $region34: #{tpu_custom_call.1} parent=11 // pred_check_branch
          %534 = sbr.rel (%p532) target = $region36
        $region35: #{tpu_custom_call.1} parent=11 // pred_region
          _
        $region36: #{tpu_custom_call.1} parent=11 // pred_fallthru
          _
        // Predicated region
        $region37: #{tpu_custom_call.1} parent=11 // pred_check
          %p535 = pneg %p203
        $region38: #{tpu_custom_call.1} parent=11 // pred_check_branch
          %537 = sbr.rel (%p535) target = $region40
        $region39: #{tpu_custom_call.1} parent=11 // pred_region
          _
        $region40: #{tpu_custom_call.1} parent=11 // pred_fallthru
          _
        // Predicated region
        $region41: #{tpu_custom_call.1} parent=11 // pred_check
          %p538 = pneg %p224
        $region42: #{tpu_custom_call.1} parent=11 // pred_check_branch
          %540 = sbr.rel (%p538) target = $region44
        $region43: #{tpu_custom_call.1} parent=11 // pred_region
          _
        $region44: #{tpu_custom_call.1} parent=11 // pred_fallthru
          _
        // Predicated region
        $region45: #{tpu_custom_call.1} parent=11 // pred_check
          %p541 = pneg %p245
        $region46: #{tpu_custom_call.1} parent=11 // pred_check_branch
          %543 = sbr.rel (%p541) target = $region48
        $region47: #{tpu_custom_call.1} parent=11 // pred_region
          _
        $region48: #{tpu_custom_call.1} parent=11 // pred_fallthru
          _
        // Predicated region
        $region49: #{tpu_custom_call.1} parent=11 // pred_check
          %p544 = pneg %p266
        $region50: #{tpu_custom_call.1} parent=11 // pred_check_branch
          %546 = sbr.rel (%p544) target = $region52
        $region51: #{tpu_custom_call.1} parent=11 // pred_region
          _
        $region52: #{tpu_custom_call.1} parent=11 // pred_fallthru
          _
        // Predicated region
        $region53: #{tpu_custom_call.1} parent=11 // pred_check
          %p547 = pneg %p287
        $region54: #{tpu_custom_call.1} parent=11 // pred_check_branch
          %549 = sbr.rel (%p547) target = $region56
        $region55: #{tpu_custom_call.1} parent=11 // pred_region
          _
        $region56: #{tpu_custom_call.1} parent=11 // pred_fallthru
          _
        // Predicated region
        $region57: #{tpu_custom_call.1} parent=11 // pred_check
          %p550 = pneg %p308
        $region58: #{tpu_custom_call.1} parent=11 // pred_check_branch
          %552 = sbr.rel (%p550) target = $region60
        $region59: #{tpu_custom_call.1} parent=11 // pred_region
          _
        $region60: #{tpu_custom_call.1} parent=11 // pred_fallthru
          _
        // Predicated region
        $region61: #{tpu_custom_call.1} parent=11 // pred_check
          %p553 = pneg %p329
        $region62: #{tpu_custom_call.1} parent=11 // pred_check_branch
          %555 = sbr.rel (%p553) target = $region64
        $region63: #{tpu_custom_call.1} parent=11 // pred_region
          _
        $region64: #{tpu_custom_call.1} parent=11 // pred_fallthru
          _
        // Predicated region
        $region65: #{tpu_custom_call.1} parent=11 // pred_check
          %p556 = pneg %p350
        $region66: #{tpu_custom_call.1} parent=11 // pred_check_branch
          %558 = sbr.rel (%p556) target = $region68
        $region67: #{tpu_custom_call.1} parent=11 // pred_region
          _
        $region68: #{tpu_custom_call.1} parent=11 // pred_fallthru
          _
        // Predicated region
        $region69: #{tpu_custom_call.1} parent=11 // pred_check
          %p559 = pneg %p371
        $region70: #{tpu_custom_call.1} parent=11 // pred_check_branch
          %561 = sbr.rel (%p559) target = $region72
        $region71: #{tpu_custom_call.1} parent=11 // pred_region
          _
        $region72: #{tpu_custom_call.1} parent=11 // pred_fallthru
          _
        // Predicated region
        $region73: #{tpu_custom_call.1} parent=11 // pred_check
          %p562 = pneg %p392
        $region74: #{tpu_custom_call.1} parent=11 // pred_check_branch
          %564 = sbr.rel (%p562) target = $region76
        $region75: #{tpu_custom_call.1} parent=11 // pred_region
          _
        $region76: #{tpu_custom_call.1} parent=11 // pred_fallthru
          _
        // Predicated region
        $region77: #{tpu_custom_call.1} parent=11 // pred_check
          %p565 = pneg %p413
        $region78: #{tpu_custom_call.1} parent=11 // pred_check_branch
          %567 = sbr.rel (%p565) target = $region80
        $region79: #{tpu_custom_call.1} parent=11 // pred_region
          _
        $region80: #{tpu_custom_call.1} parent=11 // pred_fallthru
          _
        // Predicated region
        $region81: #{tpu_custom_call.1} parent=11 // pred_check
          %p568 = pneg %p434
        $region82: #{tpu_custom_call.1} parent=11 // pred_check_branch
          %570 = sbr.rel (%p568) target = $region84
        $region83: #{tpu_custom_call.1} parent=11 // pred_region
          _
        $region84: #{tpu_custom_call.1} parent=11 // pred_fallthru
          _
        // Predicated region
        $region85: #{tpu_custom_call.1} parent=11 // pred_check
          %p571 = pneg %p455
        $region86: #{tpu_custom_call.1} parent=11 // pred_check_branch
          %573 = sbr.rel (%p571) target = $region88
        $region87: #{tpu_custom_call.1} parent=11 // pred_region
          _
        $region88: #{tpu_custom_call.1} parent=11 // pred_fallthru
          _
        // Predicated region
        $region89: #{tpu_custom_call.1} parent=11 // pred_check
          %p574 = pneg %p476
        $region90: #{tpu_custom_call.1} parent=11 // pred_check_branch
          %576 = sbr.rel (%p574) target = $region92
        $region91: #{tpu_custom_call.1} parent=11 // pred_region
          _
        $region92: #{tpu_custom_call.1} parent=11 // pred_fallthru
          _
      $region12: #{tpu_custom_call.1} parent=5 // pred_fallthru
        _
      %p577 = scmp.lt.s32.totalorder %s30, 2
      // Predicated region
      $region93: #{tpu_custom_call.1} parent=5 // pred_check
        %p578 = pneg %p577
      $region94: #{tpu_custom_call.1} parent=5 // pred_check_branch
        %580 = sbr.rel (%p578) target = $region96
      $region95: #{tpu_custom_call.1} parent=5 // pred_region
        // Predicated region
        $region97: #{tpu_custom_call.1} parent=95 // pred_check
          %p581 = pneg %p50
        $region98: #{tpu_custom_call.1} parent=95 // pred_check_branch
          %583 = sbr.rel (%p581) target = $region100
        $region99: #{tpu_custom_call.1} parent=95 // pred_region
          %p584 = scmp.lt.s32.totalorder %s30, 1
          %s585 = scalar_select %p584, %s30, 1
          %s586 = smul.addr %s585, 8
          %s587 = scalar_lea.vmem %s0, %s586
        $region100: #{tpu_custom_call.1} parent=95 // pred_fallthru
          _
      $region96: #{tpu_custom_call.1} parent=5 // pred_fallthru
        _
      %p588 = scmp.le.s32.totalorder 1, %s30
      %p589 = scmp.lt.s32.totalorder %s30, 3
      %p590 = pnand %p588, %p589
      %p591 = pneg %p590
      // Predicated region
      $region101: #{tpu_custom_call.1} parent=5 // pred_check
        _
      $region102: #{tpu_custom_call.1} parent=5 // pred_check_branch
        %593 = sbr.rel (%p590) target = $region104
      $region103: #{tpu_custom_call.1} parent=5 // pred_region
        %s594 = ssub.s32 %s30, 1
        %p595 = scmp.lt.s32.totalorder %s35, 1
        %s596 = scalar_select %p595, %s35, 1
        %s597 = smul.addr %s596, 8
        %s598 = scalar_lea.vmem %s0, %s597
        %p599 = pneg %p56
        %p600 = pneg %p53
        %p601 = pneg %p77
        %p602 = pneg %p74
        %p603 = pneg %p98
        %p604 = pneg %p95
        %p605 = pneg %p119
        %p606 = pneg %p116
        %p607 = pneg %p140
        %p608 = pneg %p137
        %p609 = pneg %p161
        %p610 = pneg %p158
        %p611 = pneg %p182
        %p612 = pneg %p179
        %p613 = pneg %p203
        %p614 = pneg %p200
        %p615 = pneg %p224
        %p616 = pneg %p221
        %p617 = pneg %p245
        %p618 = pneg %p242
        %p619 = pneg %p266
        %p620 = pneg %p263
        %p621 = pneg %p287
        %p622 = pneg %p284
        %p623 = pneg %p308
        %p624 = pneg %p305
        %p625 = pneg %p329
        %p626 = pneg %p326
        %p627 = pneg %p350
        %p628 = pneg %p347
        %p629 = pneg %p371
        %p630 = pneg %p368
        %p631 = pneg %p392
        %p632 = pneg %p389
        %p633 = pneg %p413
        %p634 = pneg %p410
        %p635 = pneg %p434
        %p636 = pneg %p431
        %p637 = pneg %p455
        %p638 = pneg %p452
        %p639 = pneg %p476
        %p640 = pneg %p473
        %p641 = pneg %p502
        %p642 = pneg %p499
        %s643 = sand.u32 %s489, 1
        %s644 = scalar_lea.sflag [#allocation3], %s643
        %s645 = sand.u32 %s489, 1
        %s646 = smul.addr %s645, 8
        %s647 = scalar_lea.vmem [#allocation2], %s646
        %p648 = scmp.lt.s32.totalorder %s35, 1
        %s649 = scalar_select %p648, %s35, 1
        %s650 = smul.addr %s649, 8
        %s651 = scalar_lea.vmem %s0, %s650
        %v653 = vld [vmem:[%s651] sm:$0xff]
        %v654 = vld [vmem:[%s1] sm:$0x1]
        %v655 = vld [vmem:[%s2] sm:$0x1]
        %vm656 = vcmask 261120
        %v657 = vsel %vm656, %v653, 0.0
        %658 = vadd.xlane.f32.xlu0 %v657
        %v659 = vpop.xlane.xlu0 %658
        %v660 = vrcp.pop 32.0
        %v661 = vmul.f32 %v659, %v660
        %v662 = vsub.f32 %v653, %v661
        %v663 = vmul.f32 %v662, %v662
        %v664 = vsel %vm656, %v663, 0.0
        %665 = vadd.xlane.f32.xlu0 %v664
        %v666 = vpop.xlane.xlu0 %665
        %v667 = vmul.f32 %v666, %v660
        %v668 = vadd.f32 %v667, 1e-05
        %v669 = vrsqrt.pop %v668
        %v670 = vmul.f32 %v662, %v669
        %v672 = vlaneseq
        %v673 = vshrl.u32 %v672, 7
        %v674 = vsub.s32 0, %v673
        %v675 = vrot.slane %v654, %v674
        %v677 = vmul.f32 %v670, %v675
        %v679 = vlaneseq
        %v680 = vshrl.u32 %v679, 7
        %v681 = vsub.s32 0, %v680
        %v682 = vrot.slane %v655, %v681
        %v684 = vadd.f32 %v677, %v682
        %v685 = vpack.c.bf16 %v684, %v684
        %v686 = vld [vmem:[%s3] sm:$0xf]
        %v687 = vld [vmem:[%s3 + $0x4] sm:$0xf]
        %v688 = vld [vmem:[%s3 + $0x8] sm:$0xf]
        %v689 = vld [vmem:[%s3 + $0xc] sm:$0xf]
        %v690 = vld [vmem:[%s4] sm:$0x1]
        %v692 = vlaneseq
        %v693 = vshrl.u32 %v692, 7
        %v694 = vsub.s32 0, %v693
        %v695 = vrot.slane %v690, %v694
        %v701 = vunpack.c.l.b16 %v686
        %v702 = vunpack.c.l.b16 %v687
        %v703 = vunpack.c.l.b16 %v688
        %v704 = vunpack.c.l.b16 %v689
        %v705 = vpack.c.b16 %v702, %v701
        %v706 = vpack.c.b16 %v704, %v703
        %v710 = vsel %vm656, %v685, 0
        %712 = vmatprep.subr.bf16.mxu0 0
        %713 = vmatpush1.bf16.msra.mxu0 %v705
        %714 = vmatprep.subr.bf16.mxu0 0
        %715 = vmatpush1.bf16.msra.mxu0 %v706
        %716 = vmatprep.subr.bf16.mxu0 0
        %717 = vmatpush1.bf16.msra.mxu0 0
        %718 = vmatprep.subr.bf16.mxu0 0
        %719 = vmatpush1.bf16.msra.mxu0 0
        %720 = vmatprep.subr.bf16.mxu0 0
        %721 = vmatpush1.bf16.msra.mxu0 0
        %722 = vmatprep.subr.bf16.mxu0 0
        %723 = vmatpush1.bf16.msra.mxu0 0
        %724 = vmatprep.subr.bf16.mxu0 0
        %725 = vmatpush1.bf16.msra.mxu0 0
        %726 = vmatprep.subr.bf16.mxu0 0
        %727 = vmatpush1.bf16.msra.mxu0 0
        %728 = vmatprep.subr.bf16.mxu0 0
        %729 = vmatpush1.bf16.msra.mxu0 0
        %730 = vmatprep.subr.bf16.mxu0 0
        %731 = vmatpush1.bf16.msra.mxu0 0
        %732 = vmatprep.subr.bf16.mxu0 0
        %733 = vmatpush1.bf16.msra.mxu0 0
        %734 = vmatprep.subr.bf16.mxu0 0
        %735 = vmatpush1.bf16.msra.mxu0 0
        %736 = vmatprep.subr.bf16.mxu0 0
        %737 = vmatpush1.bf16.msra.mxu0 0
        %738 = vmatprep.subr.bf16.mxu0 0
        %739 = vmatpush1.bf16.msra.mxu0 0
        %740 = vmatprep.subr.bf16.mxu0 0
        %741 = vmatpush1.bf16.msra.mxu0 0
        %742 = vmatprep.subr.bf16.mxu0 0
        %743 = vmatpush1.bf16.msra.mxu0 0
        %744 = vmatprep.mubr.bf16.mxu0 0
        %745 = vmatmul.mubr.bf16.gmra.mrb[0].mxu0 %v710
        %v746 = vpop.f32.mrb[0].mxu0
        %v747 = vadd.f32 %v695, %v746
        %v748 = vpop.f32.mrb[0].mxu0
        %v749 = vpop.f32.mrb[0].mxu0
        %v750 = vpop.f32.mrb[0].mxu0
        %751 = vdwg.mxu0
        %v752 = vpack.c.bf16 %v747, %v747
        %v753 = vld [vmem:[%s5] sm:$0xf]
        %v754 = vld [vmem:[%s5 + $0x4] sm:$0xf]
        %v755 = vld [vmem:[%s6] sm:$0x1]
        %v757 = vlaneseq
        %v758 = vshrl.u32 %v757, 7
        %v759 = vsub.s32 0, %v758
        %v760 = vrot.slane %v755, %v759
        %763 = vrot.lane.b32.xlu0 %v752, 96
        %v764 = vpop.permute.xlu0 %763
        %v767 = vunpack.c.l.b16 %v753
        %v768 = vunpack.c.l.b16 %v754
        %v769 = vpack.c.b16 %v768, %v767
        %vm771 = vcmask 130048
        %v773 = vsel %vm771, %v764, 0
        %775 = vmatprep.subr.bf16.mxu0 0
        %776 = vmatpush1.bf16.msra.mxu0 %v769
        %777 = vmatprep.subr.bf16.mxu0 0
        %778 = vmatpush1.bf16.msra.mxu0 0
        %779 = vmatprep.subr.bf16.mxu0 0
        %780 = vmatpush1.bf16.msra.mxu0 0
        %781 = vmatprep.subr.bf16.mxu0 0
        %782 = vmatpush1.bf16.msra.mxu0 0
        %783 = vmatprep.subr.bf16.mxu0 0
        %784 = vmatpush1.bf16.msra.mxu0 0
        %785 = vmatprep.subr.bf16.mxu0 0
        %786 = vmatpush1.bf16.msra.mxu0 0
        %787 = vmatprep.subr.bf16.mxu0 0
        %788 = vmatpush1.bf16.msra.mxu0 0
        %789 = vmatprep.subr.bf16.mxu0 0
        %790 = vmatpush1.bf16.msra.mxu0 0
        %791 = vmatprep.subr.bf16.mxu0 0
        %792 = vmatpush1.bf16.msra.mxu0 0
        %793 = vmatprep.subr.bf16.mxu0 0
        %794 = vmatpush1.bf16.msra.mxu0 0
        %795 = vmatprep.subr.bf16.mxu0 0
        %796 = vmatpush1.bf16.msra.mxu0 0
        %797 = vmatprep.subr.bf16.mxu0 0
        %798 = vmatpush1.bf16.msra.mxu0 0
        %799 = vmatprep.subr.bf16.mxu0 0
        %800 = vmatpush1.bf16.msra.mxu0 0
        %801 = vmatprep.subr.bf16.mxu0 0
        %802 = vmatpush1.bf16.msra.mxu0 0
        %803 = vmatprep.subr.bf16.mxu0 0
        %804 = vmatpush1.bf16.msra.mxu0 0
        %805 = vmatprep.subr.bf16.mxu0 0
        %806 = vmatpush1.bf16.msra.mxu0 0
        %807 = vmatprep.mubr.bf16.mxu0 0
        %808 = vmatmul.mubr.bf16.gmra.mrb[0].mxu0 %v773
        %v809 = vpop.f32.mrb[0].mxu0
        %v810 = vadd.f32 %v760, %v809
        %v811 = vpop.f32.mrb[0].mxu0
        %v812 = vpop.f32.mrb[0].mxu0
        %v813 = vpop.f32.mrb[0].mxu0
        %814 = vdwg.mxu0
        %v815 = vlaneseq
        %v816 = vshrl.u32 %v815, 7
        %v817 = vlaneseq
        %v818 = vand.u32 %v817, 127
        %vm819 = vcmp.le.s32.totalorder %v818, %v816
        %v820 = vld [vmem:[%s7] sm:$0xf]
        %v821 = vld [vmem:[%s7 + $0x4] sm:$0xf]
        %v822 = vld [vmem:[%s7 + $0x8] sm:$0xf]
        %v823 = vld [vmem:[%s7 + $0xc] sm:$0xf]
        %v824 = vpack.c.bf16 %v810, %v810
        %vm825 = vcmask 64512
        %v827 = vsel %vm825, %v752, 0
        %v830 = vsel %vm825, %v824, 0
        %832 = vmatprep.subr.bf16.mxu0 0
        %833 = vmatpush1.bf16.xpose.msra.mxu0 %v830
        %834 = vmatprep.subr.bf16.mxu0 0
        %835 = vmatpush1.bf16.xpose.msra.mxu0 0
        %836 = vmatprep.subr.bf16.mxu0 0
        %837 = vmatpush1.bf16.xpose.msra.mxu0 0
        %838 = vmatprep.subr.bf16.mxu0 0
        %839 = vmatpush1.bf16.xpose.msra.mxu0 0
        %840 = vmatprep.subr.bf16.mxu0 0
        %841 = vmatpush1.bf16.xpose.msra.mxu0 0
        %842 = vmatprep.subr.bf16.mxu0 0
        %843 = vmatpush1.bf16.xpose.msra.mxu0 0
        %844 = vmatprep.subr.bf16.mxu0 0
        %845 = vmatpush1.bf16.xpose.msra.mxu0 0
        %846 = vmatprep.subr.bf16.mxu0 0
        %847 = vmatpush1.bf16.xpose.msra.mxu0 0
        %848 = vmatprep.subr.bf16.mxu0 0
        %849 = vmatpush1.bf16.xpose.msra.mxu0 0
        %850 = vmatprep.subr.bf16.mxu0 0
        %851 = vmatpush1.bf16.xpose.msra.mxu0 0
        %852 = vmatprep.subr.bf16.mxu0 0
        %853 = vmatpush1.bf16.xpose.msra.mxu0 0
        %854 = vmatprep.subr.bf16.mxu0 0
        %855 = vmatpush1.bf16.xpose.msra.mxu0 0
        %856 = vmatprep.subr.bf16.mxu0 0
        %857 = vmatpush1.bf16.xpose.msra.mxu0 0
        %858 = vmatprep.subr.bf16.mxu0 0
        %859 = vmatpush1.bf16.xpose.msra.mxu0 0
        %860 = vmatprep.subr.bf16.mxu0 0
        %861 = vmatpush1.bf16.xpose.msra.mxu0 0
        %862 = vmatprep.subr.bf16.mxu0 0
        %863 = vmatpush1.bf16.xpose.msra.mxu0 0
        %864 = vmatprep.mubr.bf16.mxu0 0
        %865 = vmatmul.mubr.bf16.gmra.mrb[0].mxu0 %v827
        %v866 = vpop.f32.mrb[0].mxu0
        %v867 = vadd.f32 0.0, %v866
        %v868 = vpop.f32.mrb[0].mxu0
        %v869 = vpop.f32.mrb[0].mxu0
        %v870 = vpop.f32.mrb[0].mxu0
        %871 = vdwg.mxu0
        %v872 = vmul.f32 %v867, 0.35355338
        %v873 = vsel %vm819, %v872, -1e+30
        %v874 = vsel %vm825, %v873, -inf
        %875 = vmax.xlane.f32.xlu0 %v874
        %v876 = vpop.xlane.xlu0 %875
        %v877 = vsub.f32 %v873, %v876
        %v878 = vmul.f32 %v877, 1.442695
        %v879 = vpow.pop %v878
        %v880 = vsel %vm825, %v879, 0.0
        %881 = vadd.xlane.f32.xlu0 %v880
        %v882 = vpop.xlane.xlu0 %881
        %v883 = vrcp.pop %v882
        %v884 = vmul.f32 %v879, %v883
        %v885 = vpack.c.bf16 %v884, %v884
        %887 = vrot.lane.b32.xlu0 %v824, 96
        %v888 = vpop.permute.xlu0 %887
        %v890 = vsel %vm825, %v885, 0
        %vm892 = vcmask 1043456
        %v894 = vsel %vm892, %v888, 0
        %896 = vmatprep.subr.bf16.mxu0 0
        %897 = vmatpush1.bf16.msra.mxu0 %v894
        %898 = vmatprep.subr.bf16.mxu0 0
        %899 = vmatpush1.bf16.msra.mxu0 0
        %900 = vmatprep.subr.bf16.mxu0 0
        %901 = vmatpush1.bf16.msra.mxu0 0
        %902 = vmatprep.subr.bf16.mxu0 0
        %903 = vmatpush1.bf16.msra.mxu0 0
        %904 = vmatprep.subr.bf16.mxu0 0
        %905 = vmatpush1.bf16.msra.mxu0 0
        %906 = vmatprep.subr.bf16.mxu0 0
        %907 = vmatpush1.bf16.msra.mxu0 0
        %908 = vmatprep.subr.bf16.mxu0 0
        %909 = vmatpush1.bf16.msra.mxu0 0
        %910 = vmatprep.subr.bf16.mxu0 0
        %911 = vmatpush1.bf16.msra.mxu0 0
        %912 = vmatprep.subr.bf16.mxu0 0
        %913 = vmatpush1.bf16.msra.mxu0 0
        %914 = vmatprep.subr.bf16.mxu0 0
        %915 = vmatpush1.bf16.msra.mxu0 0
        %916 = vmatprep.subr.bf16.mxu0 0
        %917 = vmatpush1.bf16.msra.mxu0 0
        %918 = vmatprep.subr.bf16.mxu0 0
        %919 = vmatpush1.bf16.msra.mxu0 0
        %920 = vmatprep.subr.bf16.mxu0 0
        %921 = vmatpush1.bf16.msra.mxu0 0
        %922 = vmatprep.subr.bf16.mxu0 0
        %923 = vmatpush1.bf16.msra.mxu0 0
        %924 = vmatprep.subr.bf16.mxu0 0
        %925 = vmatpush1.bf16.msra.mxu0 0
        %926 = vmatprep.subr.bf16.mxu0 0
        %927 = vmatpush1.bf16.msra.mxu0 0
        %928 = vmatprep.mubr.bf16.mxu0 0
        %929 = vmatmul.mubr.bf16.gmra.mrb[0].mxu0 %v890
        %v930 = vpop.f32.mrb[0].mxu0
        %v931 = vadd.f32 0.0, %v930
        %v932 = vpop.f32.mrb[0].mxu0
        %v933 = vpop.f32.mrb[0].mxu0
        %v934 = vpop.f32.mrb[0].mxu0
        %935 = vdwg.mxu0
        %v936 = vpack.c.bf16 %v931, %v931
        %937 = vrot.lane.b32.xlu0 %v752, 120
        %v938 = vpop.permute.xlu0 %937
        %939 = vrot.lane.b32.xlu0 %v824, 120
        %v940 = vpop.permute.xlu0 %939
        %v942 = vsel %vm825, %v938, 0
        %v945 = vsel %vm825, %v940, 0
        %947 = vmatprep.subr.bf16.mxu0 0
        %948 = vmatpush1.bf16.xpose.msra.mxu0 %v945
        %949 = vmatprep.subr.bf16.mxu0 0
        %950 = vmatpush1.bf16.xpose.msra.mxu0 0
        %951 = vmatprep.subr.bf16.mxu0 0
        %952 = vmatpush1.bf16.xpose.msra.mxu0 0
        %953 = vmatprep.subr.bf16.mxu0 0
        %954 = vmatpush1.bf16.xpose.msra.mxu0 0
        %955 = vmatprep.subr.bf16.mxu0 0
        %956 = vmatpush1.bf16.xpose.msra.mxu0 0
        %957 = vmatprep.subr.bf16.mxu0 0
        %958 = vmatpush1.bf16.xpose.msra.mxu0 0
        %959 = vmatprep.subr.bf16.mxu0 0
        %960 = vmatpush1.bf16.xpose.msra.mxu0 0
        %961 = vmatprep.subr.bf16.mxu0 0
        %962 = vmatpush1.bf16.xpose.msra.mxu0 0
        %963 = vmatprep.subr.bf16.mxu0 0
        %964 = vmatpush1.bf16.xpose.msra.mxu0 0
        %965 = vmatprep.subr.bf16.mxu0 0
        %966 = vmatpush1.bf16.xpose.msra.mxu0 0
        %967 = vmatprep.subr.bf16.mxu0 0
        %968 = vmatpush1.bf16.xpose.msra.mxu0 0
        %969 = vmatprep.subr.bf16.mxu0 0
        %970 = vmatpush1.bf16.xpose.msra.mxu0 0
        %971 = vmatprep.subr.bf16.mxu0 0
        %972 = vmatpush1.bf16.xpose.msra.mxu0 0
        %973 = vmatprep.subr.bf16.mxu0 0
        %974 = vmatpush1.bf16.xpose.msra.mxu0 0
        %975 = vmatprep.subr.bf16.mxu0 0
        %976 = vmatpush1.bf16.xpose.msra.mxu0 0
        %977 = vmatprep.subr.bf16.mxu0 0
        %978 = vmatpush1.bf16.xpose.msra.mxu0 0
        %979 = vmatprep.mubr.bf16.mxu0 0
        %980 = vmatmul.mubr.bf16.gmra.mrb[0].mxu0 %v942
        %v981 = vpop.f32.mrb[0].mxu0
        %v982 = vadd.f32 0.0, %v981
        %v983 = vpop.f32.mrb[0].mxu0
        %v984 = vpop.f32.mrb[0].mxu0
        %v985 = vpop.f32.mrb[0].mxu0
        %986 = vdwg.mxu0
        %v987 = vmul.f32 %v982, 0.35355338
        %v988 = vsel %vm819, %v987, -1e+30
        %v989 = vsel %vm825, %v988, -inf
        %990 = vmax.xlane.f32.xlu0 %v989
        %v991 = vpop.xlane.xlu0 %990
        %v992 = vsub.f32 %v988, %v991
        %v993 = vmul.f32 %v992, 1.442695
        %v994 = vpow.pop %v993
        %v995 = vsel %vm825, %v994, 0.0
        %996 = vadd.xlane.f32.xlu0 %v995
        %v997 = vpop.xlane.xlu0 %996
        %v998 = vrcp.pop %v997
        %v999 = vmul.f32 %v994, %v998
        %v1000 = vpack.c.bf16 %v999, %v999
        %1001 = vrot.lane.b32.xlu0 %v824, 88
        %v1002 = vpop.permute.xlu0 %1001
        %v1004 = vsel %vm825, %v1000, 0
        %v1007 = vsel %vm892, %v1002, 0
        %1009 = vmatprep.subr.bf16.mxu0 0
        %1010 = vmatpush1.bf16.msra.mxu0 %v1007
        %1011 = vmatprep.subr.bf16.mxu0 0
        %1012 = vmatpush1.bf16.msra.mxu0 0
        %1013 = vmatprep.subr.bf16.mxu0 0
        %1014 = vmatpush1.bf16.msra.mxu0 0
        %1015 = vmatprep.subr.bf16.mxu0 0
        %1016 = vmatpush1.bf16.msra.mxu0 0
        %1017 = vmatprep.subr.bf16.mxu0 0
        %1018 = vmatpush1.bf16.msra.mxu0 0
        %1019 = vmatprep.subr.bf16.mxu0 0
        %1020 = vmatpush1.bf16.msra.mxu0 0
        %1021 = vmatprep.subr.bf16.mxu0 0
        %1022 = vmatpush1.bf16.msra.mxu0 0
        %1023 = vmatprep.subr.bf16.mxu0 0
        %1024 = vmatpush1.bf16.msra.mxu0 0
        %1025 = vmatprep.subr.bf16.mxu0 0
        %1026 = vmatpush1.bf16.msra.mxu0 0
        %1027 = vmatprep.subr.bf16.mxu0 0
        %1028 = vmatpush1.bf16.msra.mxu0 0
        %1029 = vmatprep.subr.bf16.mxu0 0
        %1030 = vmatpush1.bf16.msra.mxu0 0
        %1031 = vmatprep.subr.bf16.mxu0 0
        %1032 = vmatpush1.bf16.msra.mxu0 0
        %1033 = vmatprep.subr.bf16.mxu0 0
        %1034 = vmatpush1.bf16.msra.mxu0 0
        %1035 = vmatprep.subr.bf16.mxu0 0
        %1036 = vmatpush1.bf16.msra.mxu0 0
        %1037 = vmatprep.subr.bf16.mxu0 0
        %1038 = vmatpush1.bf16.msra.mxu0 0
        %1039 = vmatprep.subr.bf16.mxu0 0
        %1040 = vmatpush1.bf16.msra.mxu0 0
        %1041 = vmatprep.mubr.bf16.mxu0 0
        %1042 = vmatmul.mubr.bf16.gmra.mrb[0].mxu0 %v1004
        %v1043 = vpop.f32.mrb[0].mxu0
        %v1044 = vadd.f32 0.0, %v1043
        %v1045 = vpop.f32.mrb[0].mxu0
        %v1046 = vpop.f32.mrb[0].mxu0
        %v1047 = vpop.f32.mrb[0].mxu0
        %1048 = vdwg.mxu0
        %v1049 = vpack.c.bf16 %v1044, %v1044
        %v1051 = vsel %vm825, %v1049, 0
        %v1054 = vsel %vm892, %v821, 0
        %1056 = vmatprep.subr.bf16.mxu0 0
        %1057 = vmatpush1.bf16.msra.mxu0 %v1054
        %1058 = vmatprep.subr.bf16.mxu0 0
        %1059 = vmatpush1.bf16.msra.mxu0 0
        %1060 = vmatprep.subr.bf16.mxu0 0
        %1061 = vmatpush1.bf16.msra.mxu0 0
        %1062 = vmatprep.subr.bf16.mxu0 0
        %1063 = vmatpush1.bf16.msra.mxu0 0
        %1064 = vmatprep.subr.bf16.mxu0 0
        %1065 = vmatpush1.bf16.msra.mxu0 0
        %1066 = vmatprep.subr.bf16.mxu0 0
        %1067 = vmatpush1.bf16.msra.mxu0 0
        %1068 = vmatprep.subr.bf16.mxu0 0
        %1069 = vmatpush1.bf16.msra.mxu0 0
        %1070 = vmatprep.subr.bf16.mxu0 0
        %1071 = vmatpush1.bf16.msra.mxu0 0
        %1072 = vmatprep.subr.bf16.mxu0 0
        %1073 = vmatpush1.bf16.msra.mxu0 0
        %1074 = vmatprep.subr.bf16.mxu0 0
        %1075 = vmatpush1.bf16.msra.mxu0 0
        %1076 = vmatprep.subr.bf16.mxu0 0
        %1077 = vmatpush1.bf16.msra.mxu0 0
        %1078 = vmatprep.subr.bf16.mxu0 0
        %1079 = vmatpush1.bf16.msra.mxu0 0
        %1080 = vmatprep.subr.bf16.mxu0 0
        %1081 = vmatpush1.bf16.msra.mxu0 0
        %1082 = vmatprep.subr.bf16.mxu0 0
        %1083 = vmatpush1.bf16.msra.mxu0 0
        %1084 = vmatprep.subr.bf16.mxu0 0
        %1085 = vmatpush1.bf16.msra.mxu0 0
        %1086 = vmatprep.subr.bf16.mxu0 0
        %1087 = vmatpush1.bf16.msra.mxu0 0
        %1088 = vmatprep.mubr.bf16.mxu0 0
        %1089 = vmatmul.mubr.bf16.gmra.mrb[0].mxu0 %v1051
        %v1090 = vpop.f32.mrb[0].mxu0
        %v1091 = vadd.f32 0.0, %v1090
        %v1092 = vpop.f32.mrb[0].mxu0
        %v1093 = vpop.f32.mrb[0].mxu0
        %v1094 = vpop.f32.mrb[0].mxu0
        %1095 = vdwg.mxu0
        %v1097 = vsel %vm825, %v936, 0
        %v1100 = vsel %vm892, %v820, 0
        %1102 = vmatprep.subr.bf16.mxu0 0
        %1103 = vmatpush1.bf16.msra.mxu0 %v1100
        %1104 = vmatprep.subr.bf16.mxu0 0
        %1105 = vmatpush1.bf16.msra.mxu0 0
        %1106 = vmatprep.subr.bf16.mxu0 0
        %1107 = vmatpush1.bf16.msra.mxu0 0
        %1108 = vmatprep.subr.bf16.mxu0 0
        %1109 = vmatpush1.bf16.msra.mxu0 0
        %1110 = vmatprep.subr.bf16.mxu0 0
        %1111 = vmatpush1.bf16.msra.mxu0 0
        %1112 = vmatprep.subr.bf16.mxu0 0
        %1113 = vmatpush1.bf16.msra.mxu0 0
        %1114 = vmatprep.subr.bf16.mxu0 0
        %1115 = vmatpush1.bf16.msra.mxu0 0
        %1116 = vmatprep.subr.bf16.mxu0 0
        %1117 = vmatpush1.bf16.msra.mxu0 0
        %1118 = vmatprep.subr.bf16.mxu0 0
        %1119 = vmatpush1.bf16.msra.mxu0 0
        %1120 = vmatprep.subr.bf16.mxu0 0
        %1121 = vmatpush1.bf16.msra.mxu0 0
        %1122 = vmatprep.subr.bf16.mxu0 0
        %1123 = vmatpush1.bf16.msra.mxu0 0
        %1124 = vmatprep.subr.bf16.mxu0 0
        %1125 = vmatpush1.bf16.msra.mxu0 0
        %1126 = vmatprep.subr.bf16.mxu0 0
        %1127 = vmatpush1.bf16.msra.mxu0 0
        %1128 = vmatprep.subr.bf16.mxu0 0
        %1129 = vmatpush1.bf16.msra.mxu0 0
        %1130 = vmatprep.subr.bf16.mxu0 0
        %1131 = vmatpush1.bf16.msra.mxu0 0
        %1132 = vmatprep.subr.bf16.mxu0 0
        %1133 = vmatpush1.bf16.msra.mxu0 0
        %1134 = vmatprep.mubr.bf16.mxu0 0
        %1135 = vmatmul.mubr.bf16.gmra.mrb[0].mxu0 %v1097
        %v1136 = vpop.f32.mrb[0].mxu0
        %v1137 = vadd.f32 %v1091, %v1136
        %v1138 = vpop.f32.mrb[0].mxu0
        %v1139 = vpop.f32.mrb[0].mxu0
        %v1140 = vpop.f32.mrb[0].mxu0
        %1141 = vdwg.mxu0
        %1142 = vrot.lane.b32.xlu0 %v752, 112
        %v1143 = vpop.permute.xlu0 %1142
        %1144 = vrot.lane.b32.xlu0 %v824, 112
        %v1145 = vpop.permute.xlu0 %1144
        %v1147 = vsel %vm825, %v1143, 0
        %v1150 = vsel %vm825, %v1145, 0
        %1152 = vmatprep.subr.bf16.mxu0 0
        %1153 = vmatpush1.bf16.xpose.msra.mxu0 %v1150
        %1154 = vmatprep.subr.bf16.mxu0 0
        %1155 = vmatpush1.bf16.xpose.msra.mxu0 0
        %1156 = vmatprep.subr.bf16.mxu0 0
        %1157 = vmatpush1.bf16.xpose.msra.mxu0 0
        %1158 = vmatprep.subr.bf16.mxu0 0
        %1159 = vmatpush1.bf16.xpose.msra.mxu0 0
        %1160 = vmatprep.subr.bf16.mxu0 0
        %1161 = vmatpush1.bf16.xpose.msra.mxu0 0
        %1162 = vmatprep.subr.bf16.mxu0 0
        %1163 = vmatpush1.bf16.xpose.msra.mxu0 0
        %1164 = vmatprep.subr.bf16.mxu0 0
        %1165 = vmatpush1.bf16.xpose.msra.mxu0 0
        %1166 = vmatprep.subr.bf16.mxu0 0
        %1167 = vmatpush1.bf16.xpose.msra.mxu0 0
        %1168 = vmatprep.subr.bf16.mxu0 0
        %1169 = vmatpush1.bf16.xpose.msra.mxu0 0
        %1170 = vmatprep.subr.bf16.mxu0 0
        %1171 = vmatpush1.bf16.xpose.msra.mxu0 0
        %1172 = vmatprep.subr.bf16.mxu0 0
        %1173 = vmatpush1.bf16.xpose.msra.mxu0 0
        %1174 = vmatprep.subr.bf16.mxu0 0
        %1175 = vmatpush1.bf16.xpose.msra.mxu0 0
        %1176 = vmatprep.subr.bf16.mxu0 0
        %1177 = vmatpush1.bf16.xpose.msra.mxu0 0
        %1178 = vmatprep.subr.bf16.mxu0 0
        %1179 = vmatpush1.bf16.xpose.msra.mxu0 0
        %1180 = vmatprep.subr.bf16.mxu0 0
        %1181 = vmatpush1.bf16.xpose.msra.mxu0 0
        %1182 = vmatprep.subr.bf16.mxu0 0
        %1183 = vmatpush1.bf16.xpose.msra.mxu0 0
        %1184 = vmatprep.mubr.bf16.mxu0 0
        %1185 = vmatmul.mubr.bf16.gmra.mrb[0].mxu0 %v1147
        %v1186 = vpop.f32.mrb[0].mxu0
        %v1187 = vadd.f32 0.0, %v1186
        %v1188 = vpop.f32.mrb[0].mxu0
        %v1189 = vpop.f32.mrb[0].mxu0
        %v1190 = vpop.f32.mrb[0].mxu0
        %1191 = vdwg.mxu0
        %v1192 = vmul.f32 %v1187, 0.35355338
        %v1193 = vsel %vm819, %v1192, -1e+30
        %v1194 = vsel %vm825, %v1193, -inf
        %1195 = vmax.xlane.f32.xlu0 %v1194
        %v1196 = vpop.xlane.xlu0 %1195
        %v1197 = vsub.f32 %v1193, %v1196
        %v1198 = vmul.f32 %v1197, 1.442695
        %v1199 = vpow.pop %v1198
        %v1200 = vsel %vm825, %v1199, 0.0
        %1201 = vadd.xlane.f32.xlu0 %v1200
        %v1202 = vpop.xlane.xlu0 %1201
        %v1203 = vrcp.pop %v1202
        %v1204 = vmul.f32 %v1199, %v1203
        %v1205 = vpack.c.bf16 %v1204, %v1204
        %1206 = vrot.lane.b32.xlu0 %v824, 80
        %v1207 = vpop.permute.xlu0 %1206
        %v1209 = vsel %vm825, %v1205, 0
        %v1212 = vsel %vm892, %v1207, 0
        %1214 = vmatprep.subr.bf16.mxu0 0
        %1215 = vmatpush1.bf16.msra.mxu0 %v1212
        %1216 = vmatprep.subr.bf16.mxu0 0
        %1217 = vmatpush1.bf16.msra.mxu0 0
        %1218 = vmatprep.subr.bf16.mxu0 0
        %1219 = vmatpush1.bf16.msra.mxu0 0
        %1220 = vmatprep.subr.bf16.mxu0 0
        %1221 = vmatpush1.bf16.msra.mxu0 0
        %1222 = vmatprep.subr.bf16.mxu0 0
        %1223 = vmatpush1.bf16.msra.mxu0 0
        %1224 = vmatprep.subr.bf16.mxu0 0
        %1225 = vmatpush1.bf16.msra.mxu0 0
        %1226 = vmatprep.subr.bf16.mxu0 0
        %1227 = vmatpush1.bf16.msra.mxu0 0
        %1228 = vmatprep.subr.bf16.mxu0 0
        %1229 = vmatpush1.bf16.msra.mxu0 0
        %1230 = vmatprep.subr.bf16.mxu0 0
        %1231 = vmatpush1.bf16.msra.mxu0 0
        %1232 = vmatprep.subr.bf16.mxu0 0
        %1233 = vmatpush1.bf16.msra.mxu0 0
        %1234 = vmatprep.subr.bf16.mxu0 0
        %1235 = vmatpush1.bf16.msra.mxu0 0
        %1236 = vmatprep.subr.bf16.mxu0 0
        %1237 = vmatpush1.bf16.msra.mxu0 0
        %1238 = vmatprep.subr.bf16.mxu0 0
        %1239 = vmatpush1.bf16.msra.mxu0 0
        %1240 = vmatprep.subr.bf16.mxu0 0
        %1241 = vmatpush1.bf16.msra.mxu0 0
        %1242 = vmatprep.subr.bf16.mxu0 0
        %1243 = vmatpush1.bf16.msra.mxu0 0
        %1244 = vmatprep.subr.bf16.mxu0 0
        %1245 = vmatpush1.bf16.msra.mxu0 0
        %1246 = vmatprep.mubr.bf16.mxu0 0
        %1247 = vmatmul.mubr.bf16.gmra.mrb[0].mxu0 %v1209
        %v1248 = vpop.f32.mrb[0].mxu0
        %v1249 = vadd.f32 0.0, %v1248
        %v1250 = vpop.f32.mrb[0].mxu0
        %v1251 = vpop.f32.mrb[0].mxu0
        %v1252 = vpop.f32.mrb[0].mxu0
        %1253 = vdwg.mxu0
        %v1254 = vpack.c.bf16 %v1249, %v1249
        %v1256 = vsel %vm825, %v1254, 0
        %v1259 = vsel %vm892, %v822, 0
        %1261 = vmatprep.subr.bf16.mxu0 0
        %1262 = vmatpush1.bf16.msra.mxu0 %v1259
        %1263 = vmatprep.subr.bf16.mxu0 0
        %1264 = vmatpush1.bf16.msra.mxu0 0
        %1265 = vmatprep.subr.bf16.mxu0 0
        %1266 = vmatpush1.bf16.msra.mxu0 0
        %1267 = vmatprep.subr.bf16.mxu0 0
        %1268 = vmatpush1.bf16.msra.mxu0 0
        %1269 = vmatprep.subr.bf16.mxu0 0
        %1270 = vmatpush1.bf16.msra.mxu0 0
        %1271 = vmatprep.subr.bf16.mxu0 0
        %1272 = vmatpush1.bf16.msra.mxu0 0
        %1273 = vmatprep.subr.bf16.mxu0 0
        %1274 = vmatpush1.bf16.msra.mxu0 0
        %1275 = vmatprep.subr.bf16.mxu0 0
        %1276 = vmatpush1.bf16.msra.mxu0 0
        %1277 = vmatprep.subr.bf16.mxu0 0
        %1278 = vmatpush1.bf16.msra.mxu0 0
        %1279 = vmatprep.subr.bf16.mxu0 0
        %1280 = vmatpush1.bf16.msra.mxu0 0
        %1281 = vmatprep.subr.bf16.mxu0 0
        %1282 = vmatpush1.bf16.msra.mxu0 0
        %1283 = vmatprep.subr.bf16.mxu0 0
        %1284 = vmatpush1.bf16.msra.mxu0 0
        %1285 = vmatprep.subr.bf16.mxu0 0
        %1286 = vmatpush1.bf16.msra.mxu0 0
        %1287 = vmatprep.subr.bf16.mxu0 0
        %1288 = vmatpush1.bf16.msra.mxu0 0
        %1289 = vmatprep.subr.bf16.mxu0 0
        %1290 = vmatpush1.bf16.msra.mxu0 0
        %1291 = vmatprep.subr.bf16.mxu0 0
        %1292 = vmatpush1.bf16.msra.mxu0 0
        %1293 = vmatprep.mubr.bf16.mxu0 0
        %1294 = vmatmul.mubr.bf16.gmra.mrb[0].mxu0 %v1256
        %v1295 = vpop.f32.mrb[0].mxu0
        %v1296 = vadd.f32 0.0, %v1295
        %v1297 = vpop.f32.mrb[0].mxu0
        %v1298 = vpop.f32.mrb[0].mxu0
        %v1299 = vpop.f32.mrb[0].mxu0
        %1300 = vdwg.mxu0
        %v1301 = vadd.f32 %v1137, %v1296
        %1302 = vrot.lane.b32.xlu0 %v752, 104
        %v1303 = vpop.permute.xlu0 %1302
        %1304 = vrot.lane.b32.xlu0 %v824, 104
        %v1305 = vpop.permute.xlu0 %1304
        %v1307 = vsel %vm825, %v1303, 0
        %v1310 = vsel %vm825, %v1305, 0
        %1312 = vmatprep.subr.bf16.mxu0 0
        %1313 = vmatpush1.bf16.xpose.msra.mxu0 %v1310
        %1314 = vmatprep.subr.bf16.mxu0 0
        %1315 = vmatpush1.bf16.xpose.msra.mxu0 0
        %1316 = vmatprep.subr.bf16.mxu0 0
        %1317 = vmatpush1.bf16.xpose.msra.mxu0 0
        %1318 = vmatprep.subr.bf16.mxu0 0
        %1319 = vmatpush1.bf16.xpose.msra.mxu0 0
        %1320 = vmatprep.subr.bf16.mxu0 0
        %1321 = vmatpush1.bf16.xpose.msra.mxu0 0
        %1322 = vmatprep.subr.bf16.mxu0 0
        %1323 = vmatpush1.bf16.xpose.msra.mxu0 0
        %1324 = vmatprep.subr.bf16.mxu0 0
        %1325 = vmatpush1.bf16.xpose.msra.mxu0 0
        %1326 = vmatprep.subr.bf16.mxu0 0
        %1327 = vmatpush1.bf16.xpose.msra.mxu0 0
        %1328 = vmatprep.subr.bf16.mxu0 0
        %1329 = vmatpush1.bf16.xpose.msra.mxu0 0
        %1330 = vmatprep.subr.bf16.mxu0 0
        %1331 = vmatpush1.bf16.xpose.msra.mxu0 0
        %1332 = vmatprep.subr.bf16.mxu0 0
        %1333 = vmatpush1.bf16.xpose.msra.mxu0 0
        %1334 = vmatprep.subr.bf16.mxu0 0
        %1335 = vmatpush1.bf16.xpose.msra.mxu0 0
        %1336 = vmatprep.subr.bf16.mxu0 0
        %1337 = vmatpush1.bf16.xpose.msra.mxu0 0
        %1338 = vmatprep.subr.bf16.mxu0 0
        %1339 = vmatpush1.bf16.xpose.msra.mxu0 0
        %1340 = vmatprep.subr.bf16.mxu0 0
        %1341 = vmatpush1.bf16.xpose.msra.mxu0 0
        %1342 = vmatprep.subr.bf16.mxu0 0
        %1343 = vmatpush1.bf16.xpose.msra.mxu0 0
        %1344 = vmatprep.mubr.bf16.mxu0 0
        %1345 = vmatmul.mubr.bf16.gmra.mrb[0].mxu0 %v1307
        %v1346 = vpop.f32.mrb[0].mxu0
        %v1347 = vadd.f32 0.0, %v1346
        %v1348 = vpop.f32.mrb[0].mxu0
        %v1349 = vpop.f32.mrb[0].mxu0
        %v1350 = vpop.f32.mrb[0].mxu0
        %1351 = vdwg.mxu0
        %v1352 = vmul.f32 %v1347, 0.35355338
        %v1353 = vsel %vm819, %v1352, -1e+30
        %v1354 = vsel %vm825, %v1353, -inf
        %1355 = vmax.xlane.f32.xlu0 %v1354
        %v1356 = vpop.xlane.xlu0 %1355
        %v1357 = vsub.f32 %v1353, %v1356
        %v1358 = vmul.f32 %v1357, 1.442695
        %v1359 = vpow.pop %v1358
        %v1360 = vsel %vm825, %v1359, 0.0
        %1361 = vadd.xlane.f32.xlu0 %v1360
        %v1362 = vpop.xlane.xlu0 %1361
        %v1363 = vrcp.pop %v1362
        %v1364 = vmul.f32 %v1359, %v1363
        %v1365 = vpack.c.bf16 %v1364, %v1364
        %1366 = vrot.lane.b32.xlu0 %v824, 72
        %v1367 = vpop.permute.xlu0 %1366
        %v1369 = vsel %vm825, %v1365, 0
        %v1372 = vsel %vm892, %v1367, 0
        %1374 = vmatprep.subr.bf16.mxu0 0
        %1375 = vmatpush1.bf16.msra.mxu0 %v1372
        %1376 = vmatprep.subr.bf16.mxu0 0
        %1377 = vmatpush1.bf16.msra.mxu0 0
        %1378 = vmatprep.subr.bf16.mxu0 0
        %1379 = vmatpush1.bf16.msra.mxu0 0
        %1380 = vmatprep.subr.bf16.mxu0 0
        %1381 = vmatpush1.bf16.msra.mxu0 0
        %1382 = vmatprep.subr.bf16.mxu0 0
        %1383 = vmatpush1.bf16.msra.mxu0 0
        %1384 = vmatprep.subr.bf16.mxu0 0
        %1385 = vmatpush1.bf16.msra.mxu0 0
        %1386 = vmatprep.subr.bf16.mxu0 0
        %1387 = vmatpush1.bf16.msra.mxu0 0
        %1388 = vmatprep.subr.bf16.mxu0 0
        %1389 = vmatpush1.bf16.msra.mxu0 0
        %1390 = vmatprep.subr.bf16.mxu0 0
        %1391 = vmatpush1.bf16.msra.mxu0 0
        %1392 = vmatprep.subr.bf16.mxu0 0
        %1393 = vmatpush1.bf16.msra.mxu0 0
        %1394 = vmatprep.subr.bf16.mxu0 0
        %1395 = vmatpush1.bf16.msra.mxu0 0
        %1396 = vmatprep.subr.bf16.mxu0 0
        %1397 = vmatpush1.bf16.msra.mxu0 0
        %1398 = vmatprep.subr.bf16.mxu0 0
        %1399 = vmatpush1.bf16.msra.mxu0 0
        %1400 = vmatprep.subr.bf16.mxu0 0
        %1401 = vmatpush1.bf16.msra.mxu0 0
        %1402 = vmatprep.subr.bf16.mxu0 0
        %1403 = vmatpush1.bf16.msra.mxu0 0
        %1404 = vmatprep.subr.bf16.mxu0 0
        %1405 = vmatpush1.bf16.msra.mxu0 0
        %1406 = vmatprep.mubr.bf16.mxu0 0
        %1407 = vmatmul.mubr.bf16.gmra.mrb[0].mxu0 %v1369
        %v1408 = vpop.f32.mrb[0].mxu0
        %v1409 = vadd.f32 0.0, %v1408
        %v1410 = vpop.f32.mrb[0].mxu0
        %v1411 = vpop.f32.mrb[0].mxu0
        %v1412 = vpop.f32.mrb[0].mxu0
        %1413 = vdwg.mxu0
        %v1414 = vpack.c.bf16 %v1409, %v1409
        %v1416 = vsel %vm825, %v1414, 0
        %v1419 = vsel %vm892, %v823, 0
        %1421 = vmatprep.subr.bf16.mxu0 0
        %1422 = vmatpush1.bf16.msra.mxu0 %v1419
        %1423 = vmatprep.subr.bf16.mxu0 0
        %1424 = vmatpush1.bf16.msra.mxu0 0
        %1425 = vmatprep.subr.bf16.mxu0 0
        %1426 = vmatpush1.bf16.msra.mxu0 0
        %1427 = vmatprep.subr.bf16.mxu0 0
        %1428 = vmatpush1.bf16.msra.mxu0 0
        %1429 = vmatprep.subr.bf16.mxu0 0
        %1430 = vmatpush1.bf16.msra.mxu0 0
        %1431 = vmatprep.subr.bf16.mxu0 0
        %1432 = vmatpush1.bf16.msra.mxu0 0
        %1433 = vmatprep.subr.bf16.mxu0 0
        %1434 = vmatpush1.bf16.msra.mxu0 0
        %1435 = vmatprep.subr.bf16.mxu0 0
        %1436 = vmatpush1.bf16.msra.mxu0 0
        %1437 = vmatprep.subr.bf16.mxu0 0
        %1438 = vmatpush1.bf16.msra.mxu0 0
        %1439 = vmatprep.subr.bf16.mxu0 0
        %1440 = vmatpush1.bf16.msra.mxu0 0
        %1441 = vmatprep.subr.bf16.mxu0 0
        %1442 = vmatpush1.bf16.msra.mxu0 0
        %1443 = vmatprep.subr.bf16.mxu0 0
        %1444 = vmatpush1.bf16.msra.mxu0 0
        %1445 = vmatprep.subr.bf16.mxu0 0
        %1446 = vmatpush1.bf16.msra.mxu0 0
        %1447 = vmatprep.subr.bf16.mxu0 0
        %1448 = vmatpush1.bf16.msra.mxu0 0
        %1449 = vmatprep.subr.bf16.mxu0 0
        %1450 = vmatpush1.bf16.msra.mxu0 0
        %1451 = vmatprep.subr.bf16.mxu0 0
        %1452 = vmatpush1.bf16.msra.mxu0 0
        %1453 = vmatprep.mubr.bf16.mxu0 0
        %1454 = vmatmul.mubr.bf16.gmra.mrb[0].mxu0 %v1416
        %v1455 = vpop.f32.mrb[0].mxu0
        %v1456 = vadd.f32 0.0, %v1455
        %v1457 = vpop.f32.mrb[0].mxu0
        %v1458 = vpop.f32.mrb[0].mxu0
        %v1459 = vpop.f32.mrb[0].mxu0
        %1460 = vdwg.mxu0
        %v1461 = vadd.f32 %v1301, %v1456
        %v1462 = vadd.f32 %v653, %v1461
        %v1463 = vld [vmem:[%s8] sm:$0x1]
        %v1465 = vlaneseq
        %v1466 = vshrl.u32 %v1465, 7
        %v1467 = vsub.s32 0, %v1466
        %v1468 = vrot.slane %v1463, %v1467
        %v1470 = vadd.f32 %v1462, %v1468
        %v1471 = vld [vmem:[%s9] sm:$0x1]
        %v1472 = vld [vmem:[%s10] sm:$0x1]
        %v1473 = vsel %vm656, %v1470, 0.0
        %1474 = vadd.xlane.f32.xlu0 %v1473
        %v1475 = vpop.xlane.xlu0 %1474
        %v1476 = vmul.f32 %v1475, %v660
        %v1477 = vsub.f32 %v1470, %v1476
        %v1478 = vmul.f32 %v1477, %v1477
        %v1479 = vsel %vm656, %v1478, 0.0
        %1480 = vadd.xlane.f32.xlu0 %v1479
        %v1481 = vpop.xlane.xlu0 %1480
        %v1482 = vmul.f32 %v1481, %v660
        %v1483 = vadd.f32 %v1482, 1e-05
        %v1484 = vrsqrt.pop %v1483
        %v1485 = vmul.f32 %v1477, %v1484
        %v1487 = vlaneseq
        %v1488 = vshrl.u32 %v1487, 7
        %v1489 = vsub.s32 0, %v1488
        %v1490 = vrot.slane %v1471, %v1489
        %v1492 = vmul.f32 %v1485, %v1490
        %v1494 = vlaneseq
        %v1495 = vshrl.u32 %v1494, 7
        %v1496 = vsub.s32 0, %v1495
        %v1497 = vrot.slane %v1472, %v1496
        %v1499 = vadd.f32 %v1492, %v1497
        %v1500 = vpack.c.bf16 %v1499, %v1499
        %v1501 = vld [vmem:[%s13] sm:$0xf]
        %v1502 = vld [vmem:[%s13 + $0x4] sm:$0xf]
        %v1503 = vld [vmem:[%s13 + $0x8] sm:$0xf]
        %v1504 = vld [vmem:[%s13 + $0xc] sm:$0xf]
        %v1505 = vld [vmem:[%s14] sm:$0x1]
        %v1507 = vlaneseq
        %v1508 = vshrl.u32 %v1507, 7
        %v1509 = vsub.s32 0, %v1508
        %v1510 = vrot.slane %v1505, %v1509
        %v1516 = vunpack.c.l.b16 %v1501
        %v1517 = vunpack.c.l.b16 %v1502
        %v1518 = vunpack.c.l.b16 %v1503
        %v1519 = vunpack.c.l.b16 %v1504
        %v1520 = vpack.c.b16 %v1517, %v1516
        %v1521 = vpack.c.b16 %v1519, %v1518
        %v1525 = vsel %vm656, %v1500, 0
        %1527 = vmatprep.subr.bf16.mxu0 0
        %1528 = vmatpush1.bf16.msra.mxu0 %v1520
        %1529 = vmatprep.subr.bf16.mxu0 0
        %1530 = vmatpush1.bf16.msra.mxu0 %v1521
        %1531 = vmatprep.subr.bf16.mxu0 0
        %1532 = vmatpush1.bf16.msra.mxu0 0
        %1533 = vmatprep.subr.bf16.mxu0 0
        %1534 = vmatpush1.bf16.msra.mxu0 0
        %1535 = vmatprep.subr.bf16.mxu0 0
        %1536 = vmatpush1.bf16.msra.mxu0 0
        %1537 = vmatprep.subr.bf16.mxu0 0
        %1538 = vmatpush1.bf16.msra.mxu0 0
        %1539 = vmatprep.subr.bf16.mxu0 0
        %1540 = vmatpush1.bf16.msra.mxu0 0
        %1541 = vmatprep.subr.bf16.mxu0 0
        %1542 = vmatpush1.bf16.msra.mxu0 0
        %1543 = vmatprep.subr.bf16.mxu0 0
        %1544 = vmatpush1.bf16.msra.mxu0 0
        %1545 = vmatprep.subr.bf16.mxu0 0
        %1546 = vmatpush1.bf16.msra.mxu0 0
        %1547 = vmatprep.subr.bf16.mxu0 0
        %1548 = vmatpush1.bf16.msra.mxu0 0
        %1549 = vmatprep.subr.bf16.mxu0 0
        %1550 = vmatpush1.bf16.msra.mxu0 0
        %1551 = vmatprep.subr.bf16.mxu0 0
        %1552 = vmatpush1.bf16.msra.mxu0 0
        %1553 = vmatprep.subr.bf16.mxu0 0
        %1554 = vmatpush1.bf16.msra.mxu0 0
        %1555 = vmatprep.subr.bf16.mxu0 0
        %1556 = vmatpush1.bf16.msra.mxu0 0
        %1557 = vmatprep.subr.bf16.mxu0 0
        %1558 = vmatpush1.bf16.msra.mxu0 0
        %1559 = vmatprep.mubr.bf16.mxu0 0
        %1560 = vmatmul.mubr.bf16.gmra.mrb[0].mxu0 %v1525
        %v1561 = vpop.f32.mrb[0].mxu0
        %v1562 = vadd.f32 %v1510, %v1561
        %v1563 = vpop.f32.mrb[0].mxu0
        %v1564 = vpop.f32.mrb[0].mxu0
        %v1565 = vpop.f32.mrb[0].mxu0
        %1566 = vdwg.mxu0
        %v1567 = vmul.f32 %v1562, %v1562
        %v1568 = vmul.f32 %v1562, %v1567
        %v1569 = vmul.f32 %v1568, 0.044715
        %v1570 = vadd.f32 %v1562, %v1569
        %v1571 = vmul.f32 %v1570, 0.7978846
        %v1572 = vtanh.pop %v1571
        %v1573 = vadd.f32 %v1572, 1.0
        %v1574 = vmul.f32 %v1573, 0.5
        %v1575 = vmul.f32 %v1562, %v1574
        %v1576 = vpack.c.bf16 %v1575, %v1575
        %v1577 = vld [vmem:[%s15] sm:$0xf]
        %v1578 = vld [vmem:[%s15 + $0x4] sm:$0xf]
        %v1579 = vld [vmem:[%s15 + $0x8] sm:$0xf]
        %v1580 = vld [vmem:[%s15 + $0xc] sm:$0xf]
        %v1581 = vld [vmem:[%s15 + $0x10] sm:$0xf]
        %v1582 = vld [vmem:[%s15 + $0x14] sm:$0xf]
        %v1583 = vld [vmem:[%s15 + $0x18] sm:$0xf]
        %v1584 = vld [vmem:[%s15 + $0x1c] sm:$0xf]
        %v1585 = vld [vmem:[%s15 + $0x20] sm:$0xf]
        %v1586 = vld [vmem:[%s15 + $0x24] sm:$0xf]
        %v1587 = vld [vmem:[%s15 + $0x28] sm:$0xf]
        %v1588 = vld [vmem:[%s15 + $0x2c] sm:$0xf]
        %v1589 = vld [vmem:[%s15 + $0x30] sm:$0xf]
        %v1590 = vld [vmem:[%s15 + $0x34] sm:$0xf]
        %v1591 = vld [vmem:[%s15 + $0x38] sm:$0xf]
        %v1592 = vld [vmem:[%s15 + $0x3c] sm:$0xf]
        %v1593 = vld [vmem:[%s16] sm:$0x1]
        %v1595 = vlaneseq
        %v1596 = vshrl.u32 %v1595, 7
        %v1597 = vsub.s32 0, %v1596
        %v1598 = vrot.slane %v1593, %v1597
        %v1616 = vunpack.c.l.b16 %v1577
        %v1617 = vunpack.c.l.b16 %v1578
        %v1618 = vunpack.c.l.b16 %v1579
        %v1619 = vunpack.c.l.b16 %v1580
        %v1620 = vunpack.c.l.b16 %v1581
        %v1621 = vunpack.c.l.b16 %v1582
        %v1622 = vunpack.c.l.b16 %v1583
        %v1623 = vunpack.c.l.b16 %v1584
        %v1624 = vunpack.c.l.b16 %v1585
        %v1625 = vunpack.c.l.b16 %v1586
        %v1626 = vunpack.c.l.b16 %v1587
        %v1627 = vunpack.c.l.b16 %v1588
        %v1628 = vunpack.c.l.b16 %v1589
        %v1629 = vunpack.c.l.b16 %v1590
        %v1630 = vunpack.c.l.b16 %v1591
        %v1631 = vunpack.c.l.b16 %v1592
        %v1632 = vpack.c.b16 %v1617, %v1616
        %v1633 = vpack.c.b16 %v1619, %v1618
        %v1634 = vpack.c.b16 %v1621, %v1620
        %v1635 = vpack.c.b16 %v1623, %v1622
        %v1636 = vpack.c.b16 %v1625, %v1624
        %v1637 = vpack.c.b16 %v1627, %v1626
        %v1638 = vpack.c.b16 %v1629, %v1628
        %v1639 = vpack.c.b16 %v1631, %v1630
        %1648 = vmatprep.subr.bf16.mxu0 0
        %1649 = vmatpush1.bf16.msra.mxu0 %v1632
        %1650 = vmatprep.subr.bf16.mxu0 0
        %1651 = vmatpush1.bf16.msra.mxu0 %v1633
        %1652 = vmatprep.subr.bf16.mxu0 0
        %1653 = vmatpush1.bf16.msra.mxu0 %v1634
        %1654 = vmatprep.subr.bf16.mxu0 0
        %1655 = vmatpush1.bf16.msra.mxu0 %v1635
        %1656 = vmatprep.subr.bf16.mxu0 0
        %1657 = vmatpush1.bf16.msra.mxu0 %v1636
        %1658 = vmatprep.subr.bf16.mxu0 0
        %1659 = vmatpush1.bf16.msra.mxu0 %v1637
        %1660 = vmatprep.subr.bf16.mxu0 0
        %1661 = vmatpush1.bf16.msra.mxu0 %v1638
        %1662 = vmatprep.subr.bf16.mxu0 0
        %1663 = vmatpush1.bf16.msra.mxu0 %v1639
        %1664 = vmatprep.subr.bf16.mxu0 0
        %1665 = vmatpush1.bf16.msra.mxu0 0
        %1666 = vmatprep.subr.bf16.mxu0 0
        %1667 = vmatpush1.bf16.msra.mxu0 0
        %1668 = vmatprep.subr.bf16.mxu0 0
        %1669 = vmatpush1.bf16.msra.mxu0 0
        %1670 = vmatprep.subr.bf16.mxu0 0
        %1671 = vmatpush1.bf16.msra.mxu0 0
        %1672 = vmatprep.subr.bf16.mxu0 0
        %1673 = vmatpush1.bf16.msra.mxu0 0
        %1674 = vmatprep.subr.bf16.mxu0 0
        %1675 = vmatpush1.bf16.msra.mxu0 0
        %1676 = vmatprep.subr.bf16.mxu0 0
        %1677 = vmatpush1.bf16.msra.mxu0 0
        %1678 = vmatprep.subr.bf16.mxu0 0
        %1679 = vmatpush1.bf16.msra.mxu0 0
        %1680 = vmatprep.mubr.bf16.mxu0 0
        %1681 = vmatmul.mubr.bf16.gmra.mrb[0].mxu0 %v1576
        %v1682 = vpop.f32.mrb[0].mxu0
        %v1683 = vadd.f32 %v1598, %v1682
        %v1684 = vpop.f32.mrb[0].mxu0
        %v1685 = vpop.f32.mrb[0].mxu0
        %v1686 = vpop.f32.mrb[0].mxu0
        %1687 = vdwg.mxu0
        %v1688 = vld [vmem:[%s11] sm:$0xf]
        %v1689 = vld [vmem:[%s11 + $0x4] sm:$0xf]
        %v1690 = vld [vmem:[%s11 + $0x8] sm:$0xf]
        %v1691 = vld [vmem:[%s11 + $0xc] sm:$0xf]
        %v1692 = vld [vmem:[%s12] sm:$0x1]
        %v1694 = vlaneseq
        %v1695 = vshrl.u32 %v1694, 7
        %v1696 = vsub.s32 0, %v1695
        %v1697 = vrot.slane %v1692, %v1696
        %v1703 = vunpack.c.l.b16 %v1688
        %v1704 = vunpack.c.l.b16 %v1689
        %v1705 = vunpack.c.l.b16 %v1690
        %v1706 = vunpack.c.l.b16 %v1691
        %v1707 = vpack.c.b16 %v1704, %v1703
        %v1708 = vpack.c.b16 %v1706, %v1705
        %1711 = vmatprep.subr.bf16.mxu0 0
        %1712 = vmatpush1.bf16.msra.mxu0 %v1707
        %1713 = vmatprep.subr.bf16.mxu0 0
        %1714 = vmatpush1.bf16.msra.mxu0 %v1708
        %1715 = vmatprep.subr.bf16.mxu0 0
        %1716 = vmatpush1.bf16.msra.mxu0 0
        %1717 = vmatprep.subr.bf16.mxu0 0
        %1718 = vmatpush1.bf16.msra.mxu0 0
        %1719 = vmatprep.subr.bf16.mxu0 0
        %1720 = vmatpush1.bf16.msra.mxu0 0
        %1721 = vmatprep.subr.bf16.mxu0 0
        %1722 = vmatpush1.bf16.msra.mxu0 0
        %1723 = vmatprep.subr.bf16.mxu0 0
        %1724 = vmatpush1.bf16.msra.mxu0 0
        %1725 = vmatprep.subr.bf16.mxu0 0
        %1726 = vmatpush1.bf16.msra.mxu0 0
        %1727 = vmatprep.subr.bf16.mxu0 0
        %1728 = vmatpush1.bf16.msra.mxu0 0
        %1729 = vmatprep.subr.bf16.mxu0 0
        %1730 = vmatpush1.bf16.msra.mxu0 0
        %1731 = vmatprep.subr.bf16.mxu0 0
        %1732 = vmatpush1.bf16.msra.mxu0 0
        %1733 = vmatprep.subr.bf16.mxu0 0
        %1734 = vmatpush1.bf16.msra.mxu0 0
        %1735 = vmatprep.subr.bf16.mxu0 0
        %1736 = vmatpush1.bf16.msra.mxu0 0
        %1737 = vmatprep.subr.bf16.mxu0 0
        %1738 = vmatpush1.bf16.msra.mxu0 0
        %1739 = vmatprep.subr.bf16.mxu0 0
        %1740 = vmatpush1.bf16.msra.mxu0 0
        %1741 = vmatprep.subr.bf16.mxu0 0
        %1742 = vmatpush1.bf16.msra.mxu0 0
        %1743 = vmatprep.mubr.bf16.mxu0 0
        %1744 = vmatmul.mubr.bf16.gmra.mrb[0].mxu0 %v1525
        %v1745 = vpop.f32.mrb[0].mxu0
        %v1746 = vadd.f32 %v1697, %v1745
        %v1747 = vpop.f32.mrb[0].mxu0
        %v1748 = vpop.f32.mrb[0].mxu0
        %v1749 = vpop.f32.mrb[0].mxu0
        %1750 = vdwg.mxu0
        %vm1751 = vcmask 31744
        %v1752 = vsel %vm1751, %v1746, -inf
        %1753 = vmax.xlane.f32.xlu0 %v1752
        %v1754 = vpop.xlane.xlu0 %1753
        %v1755 = vsub.f32 %v1746, %v1754
        %v1756 = vmul.f32 %v1755, 1.442695
        %v1757 = vpow.pop %v1756
        %v1758 = vsel %vm1751, %v1757, 0.0
        %1759 = vadd.xlane.f32.xlu0 %v1758
        %v1760 = vpop.xlane.xlu0 %1759
        %v1761 = vrcp.pop %v1760
        %v1762 = vmul.f32 %v1757, %v1761
        %v1763 = vcvt.s32.f32 %v818
        %v1764 = vsel %vm1751, %v1762, -inf
        %1765 = vmax.xlane.f32.xlu0 %v1764
        %v1766 = vpop.xlane.xlu0 %1765
        %vm1767 = vcmp.ge.f32.partialorder %v1762, %v1766
        %v1768 = vsel %vm1767, %v1763, 4.0
        %v1769 = vsel %vm1751, %v1768, inf
        %1770 = vmin.xlane.f32.xlu0 %v1769
        %v1771 = vpop.xlane.xlu0 %1770
        %vm1772 = vcmp.eq.f32.partialorder %v1763, %v1771
        %v1773 = vsel %vm1772, %v1762, 0.0
        %v1774 = vadd.f32 %v1773, 0.0
        %v1775 = vsel %vm1772, -1e+30, %v1762
        %v1776 = vsel %vm1751, %v1775, -inf
        %1777 = vmax.xlane.f32.xlu0 %v1776
        %v1778 = vpop.xlane.xlu0 %1777
        %vm1779 = vcmp.ge.f32.partialorder %v1775, %v1778
        %v1780 = vsel %vm1779, %v1763, 4.0
        %v1781 = vsel %vm1751, %v1780, inf
        %1782 = vmin.xlane.f32.xlu0 %v1781
        %v1783 = vpop.xlane.xlu0 %1782
        %vm1784 = vcmp.eq.f32.partialorder %v1763, %v1783
        %v1785 = vsel %vm1784, %v1762, 0.0
        %v1786 = vadd.f32 %v1774, %v1785
        %v1787 = vsel %vm1751, %v1786, 0.0
        %1788 = vadd.xlane.f32.xlu0 %v1787
        %v1789 = vpop.xlane.xlu0 %1788
        %v1790 = vrcp.pop %v1789
        %v1791 = vmul.f32 %v1786, %v1790
        %v1792 = vld [vmem:[%s17] sm:$0xf]
        %v1793 = vld [vmem:[%s17 + $0x4] sm:$0xf]
        %v1794 = vld [vmem:[%s17 + $0x8] sm:$0xf]
        %v1795 = vld [vmem:[%s17 + $0xc] sm:$0xf]
        %v1796 = vld [vmem:[%s18] sm:$0x1]
        %v1798 = vlaneseq
        %v1799 = vshrl.u32 %v1798, 7
        %v1800 = vsub.s32 0, %v1799
        %v1801 = vrot.slane %v1796, %v1800
        %v1807 = vunpack.c.l.b16 %v1792
        %v1808 = vunpack.c.l.b16 %v1793
        %v1809 = vunpack.c.l.b16 %v1794
        %v1810 = vunpack.c.l.b16 %v1795
        %v1811 = vpack.c.b16 %v1808, %v1807
        %v1812 = vpack.c.b16 %v1810, %v1809
        %1815 = vmatprep.subr.bf16.mxu0 0
        %1816 = vmatpush1.bf16.msra.mxu0 %v1811
        %1817 = vmatprep.subr.bf16.mxu0 0
        %1818 = vmatpush1.bf16.msra.mxu0 %v1812
        %1819 = vmatprep.subr.bf16.mxu0 0
        %1820 = vmatpush1.bf16.msra.mxu0 0
        %1821 = vmatprep.subr.bf16.mxu0 0
        %1822 = vmatpush1.bf16.msra.mxu0 0
        %1823 = vmatprep.subr.bf16.mxu0 0
        %1824 = vmatpush1.bf16.msra.mxu0 0
        %1825 = vmatprep.subr.bf16.mxu0 0
        %1826 = vmatpush1.bf16.msra.mxu0 0
        %1827 = vmatprep.subr.bf16.mxu0 0
        %1828 = vmatpush1.bf16.msra.mxu0 0
        %1829 = vmatprep.subr.bf16.mxu0 0
        %1830 = vmatpush1.bf16.msra.mxu0 0
        %1831 = vmatprep.subr.bf16.mxu0 0
        %1832 = vmatpush1.bf16.msra.mxu0 0
        %1833 = vmatprep.subr.bf16.mxu0 0
        %1834 = vmatpush1.bf16.msra.mxu0 0
        %1835 = vmatprep.subr.bf16.mxu0 0
        %1836 = vmatpush1.bf16.msra.mxu0 0
        %1837 = vmatprep.subr.bf16.mxu0 0
        %1838 = vmatpush1.bf16.msra.mxu0 0
        %1839 = vmatprep.subr.bf16.mxu0 0
        %1840 = vmatpush1.bf16.msra.mxu0 0
        %1841 = vmatprep.subr.bf16.mxu0 0
        %1842 = vmatpush1.bf16.msra.mxu0 0
        %1843 = vmatprep.subr.bf16.mxu0 0
        %1844 = vmatpush1.bf16.msra.mxu0 0
        %1845 = vmatprep.subr.bf16.mxu0 0
        %1846 = vmatpush1.bf16.msra.mxu0 0
        %1847 = vmatprep.mubr.bf16.mxu0 0
        %1848 = vmatmul.mubr.bf16.gmra.mrb[0].mxu0 %v1525
        %v1849 = vpop.f32.mrb[0].mxu0
        %v1850 = vadd.f32 %v1801, %v1849
        %v1851 = vpop.f32.mrb[0].mxu0
        %v1852 = vpop.f32.mrb[0].mxu0
        %v1853 = vpop.f32.mrb[0].mxu0
        %1854 = vdwg.mxu0
        %v1855 = vmul.f32 %v1850, %v1850
        %v1856 = vmul.f32 %v1850, %v1855
        %v1857 = vmul.f32 %v1856, 0.044715
        %v1858 = vadd.f32 %v1850, %v1857
        %v1859 = vmul.f32 %v1858, 0.7978846
        %v1860 = vtanh.pop %v1859
        %v1861 = vadd.f32 %v1860, 1.0
        %v1862 = vmul.f32 %v1861, 0.5
        %v1863 = vmul.f32 %v1850, %v1862
        %v1864 = vpack.c.bf16 %v1863, %v1863
        %v1865 = vld [vmem:[%s19] sm:$0xf]
        %v1866 = vld [vmem:[%s19 + $0x4] sm:$0xf]
        %v1867 = vld [vmem:[%s19 + $0x8] sm:$0xf]
        %v1868 = vld [vmem:[%s19 + $0xc] sm:$0xf]
        %v1869 = vld [vmem:[%s19 + $0x10] sm:$0xf]
        %v1870 = vld [vmem:[%s19 + $0x14] sm:$0xf]
        %v1871 = vld [vmem:[%s19 + $0x18] sm:$0xf]
        %v1872 = vld [vmem:[%s19 + $0x1c] sm:$0xf]
        %v1873 = vld [vmem:[%s20] sm:$0x1]
        %v1875 = vlaneseq
        %v1876 = vshrl.u32 %v1875, 7
        %v1877 = vsub.s32 0, %v1876
        %v1878 = vrot.slane %v1873, %v1877
        %v1888 = vunpack.c.l.b16 %v1865
        %v1889 = vunpack.c.l.b16 %v1866
        %v1890 = vunpack.c.l.b16 %v1867
        %v1891 = vunpack.c.l.b16 %v1868
        %v1892 = vunpack.c.l.b16 %v1869
        %v1893 = vunpack.c.l.b16 %v1870
        %v1894 = vunpack.c.l.b16 %v1871
        %v1895 = vunpack.c.l.b16 %v1872
        %v1896 = vpack.c.b16 %v1889, %v1888
        %v1897 = vpack.c.b16 %v1891, %v1890
        %v1898 = vpack.c.b16 %v1893, %v1892
        %v1899 = vpack.c.b16 %v1895, %v1894
        %vm1904 = vcmask 523264
        %v1906 = vsel %vm1904, %v1864, 0
        %1908 = vmatprep.subr.bf16.mxu0 0
        %1909 = vmatpush1.bf16.msra.mxu0 %v1896
        %1910 = vmatprep.subr.bf16.mxu0 0
        %1911 = vmatpush1.bf16.msra.mxu0 %v1897
        %1912 = vmatprep.subr.bf16.mxu0 0
        %1913 = vmatpush1.bf16.msra.mxu0 %v1898
        %1914 = vmatprep.subr.bf16.mxu0 0
        %1915 = vmatpush1.bf16.msra.mxu0 %v1899
        %1916 = vmatprep.subr.bf16.mxu0 0
        %1917 = vmatpush1.bf16.msra.mxu0 0
        %1918 = vmatprep.subr.bf16.mxu0 0
        %1919 = vmatpush1.bf16.msra.mxu0 0
        %1920 = vmatprep.subr.bf16.mxu0 0
        %1921 = vmatpush1.bf16.msra.mxu0 0
        %1922 = vmatprep.subr.bf16.mxu0 0
        %1923 = vmatpush1.bf16.msra.mxu0 0
        %1924 = vmatprep.subr.bf16.mxu0 0
        %1925 = vmatpush1.bf16.msra.mxu0 0
        %1926 = vmatprep.subr.bf16.mxu0 0
        %1927 = vmatpush1.bf16.msra.mxu0 0
        %1928 = vmatprep.subr.bf16.mxu0 0
        %1929 = vmatpush1.bf16.msra.mxu0 0
        %1930 = vmatprep.subr.bf16.mxu0 0
        %1931 = vmatpush1.bf16.msra.mxu0 0
        %1932 = vmatprep.subr.bf16.mxu0 0
        %1933 = vmatpush1.bf16.msra.mxu0 0
        %1934 = vmatprep.subr.bf16.mxu0 0
        %1935 = vmatpush1.bf16.msra.mxu0 0
        %1936 = vmatprep.subr.bf16.mxu0 0
        %1937 = vmatpush1.bf16.msra.mxu0 0
        %1938 = vmatprep.subr.bf16.mxu0 0
        %1939 = vmatpush1.bf16.msra.mxu0 0
        %1940 = vmatprep.mubr.bf16.mxu0 0
        %1941 = vmatmul.mubr.bf16.gmra.mrb[0].mxu0 %v1906
        %v1942 = vpop.f32.mrb[0].mxu0
        %v1943 = vadd.f32 %v1878, %v1942
        %v1944 = vpop.f32.mrb[0].mxu0
        %v1945 = vpop.f32.mrb[0].mxu0
        %v1946 = vpop.f32.mrb[0].mxu0
        %1947 = vdwg.mxu0
        %1949 = vset.pattern.permute.xlu0 0
        %1950 = vperm.xlu0 %1949, %v1791
        %v1951 = vpop.permute.xlu0 %1950
        %v1953 = vmul.f32 %v1951, %v1943
        %v1954 = vadd.f32 %v1683, %v1953
        %s1955 = scalar_lea.vmem %s17, 16
        %v1956 = vld [vmem:[%s1955] sm:$0xf]
        %v1957 = vld [vmem:[%s1955 + $0x4] sm:$0xf]
        %v1958 = vld [vmem:[%s1955 + $0x8] sm:$0xf]
        %v1959 = vld [vmem:[%s1955 + $0xc] sm:$0xf]
        %s1960 = scalar_lea.vmem %s18, 1
        %v1961 = vld [vmem:[%s1960] sm:$0x1]
        %v1963 = vlaneseq
        %v1964 = vshrl.u32 %v1963, 7
        %v1965 = vsub.s32 0, %v1964
        %v1966 = vrot.slane %v1961, %v1965
        %v1972 = vunpack.c.l.b16 %v1956
        %v1973 = vunpack.c.l.b16 %v1957
        %v1974 = vunpack.c.l.b16 %v1958
        %v1975 = vunpack.c.l.b16 %v1959
        %v1976 = vpack.c.b16 %v1973, %v1972
        %v1977 = vpack.c.b16 %v1975, %v1974
        %1980 = vmatprep.subr.bf16.mxu0 0
        %1981 = vmatpush1.bf16.msra.mxu0 %v1976
        %1982 = vmatprep.subr.bf16.mxu0 0
        %1983 = vmatpush1.bf16.msra.mxu0 %v1977
        %1984 = vmatprep.subr.bf16.mxu0 0
        %1985 = vmatpush1.bf16.msra.mxu0 0
        %1986 = vmatprep.subr.bf16.mxu0 0
        %1987 = vmatpush1.bf16.msra.mxu0 0
        %1988 = vmatprep.subr.bf16.mxu0 0
        %1989 = vmatpush1.bf16.msra.mxu0 0
        %1990 = vmatprep.subr.bf16.mxu0 0
        %1991 = vmatpush1.bf16.msra.mxu0 0
        %1992 = vmatprep.subr.bf16.mxu0 0
        %1993 = vmatpush1.bf16.msra.mxu0 0
        %1994 = vmatprep.subr.bf16.mxu0 0
        %1995 = vmatpush1.bf16.msra.mxu0 0
        %1996 = vmatprep.subr.bf16.mxu0 0
        %1997 = vmatpush1.bf16.msra.mxu0 0
        %1998 = vmatprep.subr.bf16.mxu0 0
        %1999 = vmatpush1.bf16.msra.mxu0 0
        %2000 = vmatprep.subr.bf16.mxu0 0
        %2001 = vmatpush1.bf16.msra.mxu0 0
        %2002 = vmatprep.subr.bf16.mxu0 0
        %2003 = vmatpush1.bf16.msra.mxu0 0
        %2004 = vmatprep.subr.bf16.mxu0 0
        %2005 = vmatpush1.bf16.msra.mxu0 0
        %2006 = vmatprep.subr.bf16.mxu0 0
        %2007 = vmatpush1.bf16.msra.mxu0 0
        %2008 = vmatprep.subr.bf16.mxu0 0
        %2009 = vmatpush1.bf16.msra.mxu0 0
        %2010 = vmatprep.subr.bf16.mxu0 0
        %2011 = vmatpush1.bf16.msra.mxu0 0
        %2012 = vmatprep.mubr.bf16.mxu0 0
        %2013 = vmatmul.mubr.bf16.gmra.mrb[0].mxu0 %v1525
        %v2014 = vpop.f32.mrb[0].mxu0
        %v2015 = vadd.f32 %v1966, %v2014
        %v2016 = vpop.f32.mrb[0].mxu0
        %v2017 = vpop.f32.mrb[0].mxu0
        %v2018 = vpop.f32.mrb[0].mxu0
        %2019 = vdwg.mxu0
        %v2020 = vmul.f32 %v2015, %v2015
        %v2021 = vmul.f32 %v2015, %v2020
        %v2022 = vmul.f32 %v2021, 0.044715
        %v2023 = vadd.f32 %v2015, %v2022
        %v2024 = vmul.f32 %v2023, 0.7978846
        %v2025 = vtanh.pop %v2024
        %v2026 = vadd.f32 %v2025, 1.0
        %v2027 = vmul.f32 %v2026, 0.5
        %v2028 = vmul.f32 %v2015, %v2027
        %v2029 = vpack.c.bf16 %v2028, %v2028
        %s2030 = scalar_lea.vmem %s19, 32
        %v2031 = vld [vmem:[%s2030] sm:$0xf]
        %v2032 = vld [vmem:[%s2030 + $0x4] sm:$0xf]
        %v2033 = vld [vmem:[%s2030 + $0x8] sm:$0xf]
        %v2034 = vld [vmem:[%s2030 + $0xc] sm:$0xf]
        %v2035 = vld [vmem:[%s2030 + $0x10] sm:$0xf]
        %v2036 = vld [vmem:[%s2030 + $0x14] sm:$0xf]
        %v2037 = vld [vmem:[%s2030 + $0x18] sm:$0xf]
        %v2038 = vld [vmem:[%s2030 + $0x1c] sm:$0xf]
        %s2039 = scalar_lea.vmem %s20, 1
        %v2040 = vld [vmem:[%s2039] sm:$0x1]
        %v2042 = vlaneseq
        %v2043 = vshrl.u32 %v2042, 7
        %v2044 = vsub.s32 0, %v2043
        %v2045 = vrot.slane %v2040, %v2044
        %v2055 = vunpack.c.l.b16 %v2031
        %v2056 = vunpack.c.l.b16 %v2032
        %v2057 = vunpack.c.l.b16 %v2033
        %v2058 = vunpack.c.l.b16 %v2034
        %v2059 = vunpack.c.l.b16 %v2035
        %v2060 = vunpack.c.l.b16 %v2036
        %v2061 = vunpack.c.l.b16 %v2037
        %v2062 = vunpack.c.l.b16 %v2038
        %v2063 = vpack.c.b16 %v2056, %v2055
        %v2064 = vpack.c.b16 %v2058, %v2057
        %v2065 = vpack.c.b16 %v2060, %v2059
        %v2066 = vpack.c.b16 %v2062, %v2061
        %v2072 = vsel %vm1904, %v2029, 0
        %2074 = vmatprep.subr.bf16.mxu0 0
        %2075 = vmatpush1.bf16.msra.mxu0 %v2063
        %2076 = vmatprep.subr.bf16.mxu0 0
        %2077 = vmatpush1.bf16.msra.mxu0 %v2064
        %2078 = vmatprep.subr.bf16.mxu0 0
        %2079 = vmatpush1.bf16.msra.mxu0 %v2065
        %2080 = vmatprep.subr.bf16.mxu0 0
        %2081 = vmatpush1.bf16.msra.mxu0 %v2066
        %2082 = vmatprep.subr.bf16.mxu0 0
        %2083 = vmatpush1.bf16.msra.mxu0 0
        %2084 = vmatprep.subr.bf16.mxu0 0
        %2085 = vmatpush1.bf16.msra.mxu0 0
        %2086 = vmatprep.subr.bf16.mxu0 0
        %2087 = vmatpush1.bf16.msra.mxu0 0
        %2088 = vmatprep.subr.bf16.mxu0 0
        %2089 = vmatpush1.bf16.msra.mxu0 0
        %2090 = vmatprep.subr.bf16.mxu0 0
        %2091 = vmatpush1.bf16.msra.mxu0 0
        %2092 = vmatprep.subr.bf16.mxu0 0
        %2093 = vmatpush1.bf16.msra.mxu0 0
        %2094 = vmatprep.subr.bf16.mxu0 0
        %2095 = vmatpush1.bf16.msra.mxu0 0
        %2096 = vmatprep.subr.bf16.mxu0 0
        %2097 = vmatpush1.bf16.msra.mxu0 0
        %2098 = vmatprep.subr.bf16.mxu0 0
        %2099 = vmatpush1.bf16.msra.mxu0 0
        %2100 = vmatprep.subr.bf16.mxu0 0
        %2101 = vmatpush1.bf16.msra.mxu0 0
        %2102 = vmatprep.subr.bf16.mxu0 0
        %2103 = vmatpush1.bf16.msra.mxu0 0
        %2104 = vmatprep.subr.bf16.mxu0 0
        %2105 = vmatpush1.bf16.msra.mxu0 0
        %2106 = vmatprep.mubr.bf16.mxu0 0
        %2107 = vmatmul.mubr.bf16.gmra.mrb[0].mxu0 %v2072
        %v2108 = vpop.f32.mrb[0].mxu0
        %v2109 = vadd.f32 %v2045, %v2108
        %v2110 = vpop.f32.mrb[0].mxu0
        %v2111 = vpop.f32.mrb[0].mxu0
        %v2112 = vpop.f32.mrb[0].mxu0
        %2113 = vdwg.mxu0
        %2114 = vset.pattern.permute.xlu0 1
        %2115 = vperm.xlu0 %2114, %v1791
        %v2116 = vpop.permute.xlu0 %2115
        %v2118 = vmul.f32 %v2116, %v2109
        %v2119 = vadd.f32 %v1954, %v2118
        %s2120 = scalar_lea.vmem %s17, 32
        %v2121 = vld [vmem:[%s2120] sm:$0xf]
        %v2122 = vld [vmem:[%s2120 + $0x4] sm:$0xf]
        %v2123 = vld [vmem:[%s2120 + $0x8] sm:$0xf]
        %v2124 = vld [vmem:[%s2120 + $0xc] sm:$0xf]
        %s2125 = scalar_lea.vmem %s18, 2
        %v2126 = vld [vmem:[%s2125] sm:$0x1]
        %v2128 = vlaneseq
        %v2129 = vshrl.u32 %v2128, 7
        %v2130 = vsub.s32 0, %v2129
        %v2131 = vrot.slane %v2126, %v2130
        %v2137 = vunpack.c.l.b16 %v2121
        %v2138 = vunpack.c.l.b16 %v2122
        %v2139 = vunpack.c.l.b16 %v2123
        %v2140 = vunpack.c.l.b16 %v2124
        %v2141 = vpack.c.b16 %v2138, %v2137
        %v2142 = vpack.c.b16 %v2140, %v2139
        %2145 = vmatprep.subr.bf16.mxu0 0
        %2146 = vmatpush1.bf16.msra.mxu0 %v2141
        %2147 = vmatprep.subr.bf16.mxu0 0
        %2148 = vmatpush1.bf16.msra.mxu0 %v2142
        %2149 = vmatprep.subr.bf16.mxu0 0
        %2150 = vmatpush1.bf16.msra.mxu0 0
        %2151 = vmatprep.subr.bf16.mxu0 0
        %2152 = vmatpush1.bf16.msra.mxu0 0
        %2153 = vmatprep.subr.bf16.mxu0 0
        %2154 = vmatpush1.bf16.msra.mxu0 0
        %2155 = vmatprep.subr.bf16.mxu0 0
        %2156 = vmatpush1.bf16.msra.mxu0 0
        %2157 = vmatprep.subr.bf16.mxu0 0
        %2158 = vmatpush1.bf16.msra.mxu0 0
        %2159 = vmatprep.subr.bf16.mxu0 0
        %2160 = vmatpush1.bf16.msra.mxu0 0
        %2161 = vmatprep.subr.bf16.mxu0 0
        %2162 = vmatpush1.bf16.msra.mxu0 0
        %2163 = vmatprep.subr.bf16.mxu0 0
        %2164 = vmatpush1.bf16.msra.mxu0 0
        %2165 = vmatprep.subr.bf16.mxu0 0
        %2166 = vmatpush1.bf16.msra.mxu0 0
        %2167 = vmatprep.subr.bf16.mxu0 0
        %2168 = vmatpush1.bf16.msra.mxu0 0
        %2169 = vmatprep.subr.bf16.mxu0 0
        %2170 = vmatpush1.bf16.msra.mxu0 0
        %2171 = vmatprep.subr.bf16.mxu0 0
        %2172 = vmatpush1.bf16.msra.mxu0 0
        %2173 = vmatprep.subr.bf16.mxu0 0
        %2174 = vmatpush1.bf16.msra.mxu0 0
        %2175 = vmatprep.subr.bf16.mxu0 0
        %2176 = vmatpush1.bf16.msra.mxu0 0
        %2177 = vmatprep.mubr.bf16.mxu0 0
        %2178 = vmatmul.mubr.bf16.gmra.mrb[0].mxu0 %v1525
        %v2179 = vpop.f32.mrb[0].mxu0
        %v2180 = vadd.f32 %v2131, %v2179
        %v2181 = vpop.f32.mrb[0].mxu0
        %v2182 = vpop.f32.mrb[0].mxu0
        %v2183 = vpop.f32.mrb[0].mxu0
        %2184 = vdwg.mxu0
        %v2185 = vmul.f32 %v2180, %v2180
        %v2186 = vmul.f32 %v2180, %v2185
        %v2187 = vmul.f32 %v2186, 0.044715
        %v2188 = vadd.f32 %v2180, %v2187
        %v2189 = vmul.f32 %v2188, 0.7978846
        %v2190 = vtanh.pop %v2189
        %v2191 = vadd.f32 %v2190, 1.0
        %v2192 = vmul.f32 %v2191, 0.5
        %v2193 = vmul.f32 %v2180, %v2192
        %v2194 = vpack.c.bf16 %v2193, %v2193
        %s2195 = scalar_lea.vmem %s19, 64
        %v2196 = vld [vmem:[%s2195] sm:$0xf]
        %v2197 = vld [vmem:[%s2195 + $0x4] sm:$0xf]
        %v2198 = vld [vmem:[%s2195 + $0x8] sm:$0xf]
        %v2199 = vld [vmem:[%s2195 + $0xc] sm:$0xf]
        %v2200 = vld [vmem:[%s2195 + $0x10] sm:$0xf]
        %v2201 = vld [vmem:[%s2195 + $0x14] sm:$0xf]
        %v2202 = vld [vmem:[%s2195 + $0x18] sm:$0xf]
        %v2203 = vld [vmem:[%s2195 + $0x1c] sm:$0xf]
        %s2204 = scalar_lea.vmem %s20, 2
        %v2205 = vld [vmem:[%s2204] sm:$0x1]
        %v2207 = vlaneseq
        %v2208 = vshrl.u32 %v2207, 7
        %v2209 = vsub.s32 0, %v2208
        %v2210 = vrot.slane %v2205, %v2209
        %v2220 = vunpack.c.l.b16 %v2196
        %v2221 = vunpack.c.l.b16 %v2197
        %v2222 = vunpack.c.l.b16 %v2198
        %v2223 = vunpack.c.l.b16 %v2199
        %v2224 = vunpack.c.l.b16 %v2200
        %v2225 = vunpack.c.l.b16 %v2201
        %v2226 = vunpack.c.l.b16 %v2202
        %v2227 = vunpack.c.l.b16 %v2203
        %v2228 = vpack.c.b16 %v2221, %v2220
        %v2229 = vpack.c.b16 %v2223, %v2222
        %v2230 = vpack.c.b16 %v2225, %v2224
        %v2231 = vpack.c.b16 %v2227, %v2226
        %v2237 = vsel %vm1904, %v2194, 0
        %2239 = vmatprep.subr.bf16.mxu0 0
        %2240 = vmatpush1.bf16.msra.mxu0 %v2228
        %2241 = vmatprep.subr.bf16.mxu0 0
        %2242 = vmatpush1.bf16.msra.mxu0 %v2229
        %2243 = vmatprep.subr.bf16.mxu0 0
        %2244 = vmatpush1.bf16.msra.mxu0 %v2230
        %2245 = vmatprep.subr.bf16.mxu0 0
        %2246 = vmatpush1.bf16.msra.mxu0 %v2231
        %2247 = vmatprep.subr.bf16.mxu0 0
        %2248 = vmatpush1.bf16.msra.mxu0 0
        %2249 = vmatprep.subr.bf16.mxu0 0
        %2250 = vmatpush1.bf16.msra.mxu0 0
        %2251 = vmatprep.subr.bf16.mxu0 0
        %2252 = vmatpush1.bf16.msra.mxu0 0
        %2253 = vmatprep.subr.bf16.mxu0 0
        %2254 = vmatpush1.bf16.msra.mxu0 0
        %2255 = vmatprep.subr.bf16.mxu0 0
        %2256 = vmatpush1.bf16.msra.mxu0 0
        %2257 = vmatprep.subr.bf16.mxu0 0
        %2258 = vmatpush1.bf16.msra.mxu0 0
        %2259 = vmatprep.subr.bf16.mxu0 0
        %2260 = vmatpush1.bf16.msra.mxu0 0
        %2261 = vmatprep.subr.bf16.mxu0 0
        %2262 = vmatpush1.bf16.msra.mxu0 0
        %2263 = vmatprep.subr.bf16.mxu0 0
        %2264 = vmatpush1.bf16.msra.mxu0 0
        %2265 = vmatprep.subr.bf16.mxu0 0
        %2266 = vmatpush1.bf16.msra.mxu0 0
        %2267 = vmatprep.subr.bf16.mxu0 0
        %2268 = vmatpush1.bf16.msra.mxu0 0
        %2269 = vmatprep.subr.bf16.mxu0 0
        %2270 = vmatpush1.bf16.msra.mxu0 0
        %2271 = vmatprep.mubr.bf16.mxu0 0
        %2272 = vmatmul.mubr.bf16.gmra.mrb[0].mxu0 %v2237
        %v2273 = vpop.f32.mrb[0].mxu0
        %v2274 = vadd.f32 %v2210, %v2273
        %v2275 = vpop.f32.mrb[0].mxu0
        %v2276 = vpop.f32.mrb[0].mxu0
        %v2277 = vpop.f32.mrb[0].mxu0
        %2278 = vdwg.mxu0
        %2279 = vset.pattern.permute.xlu0 2
        %2280 = vperm.xlu0 %2279, %v1791
        %v2281 = vpop.permute.xlu0 %2280
        %v2283 = vmul.f32 %v2281, %v2274
        %v2284 = vadd.f32 %v2119, %v2283
        %s2285 = scalar_lea.vmem %s17, 48
        %v2286 = vld [vmem:[%s2285] sm:$0xf]
        %v2287 = vld [vmem:[%s2285 + $0x4] sm:$0xf]
        %v2288 = vld [vmem:[%s2285 + $0x8] sm:$0xf]
        %v2289 = vld [vmem:[%s2285 + $0xc] sm:$0xf]
        %s2290 = scalar_lea.vmem %s18, 3
        %v2291 = vld [vmem:[%s2290] sm:$0x1]
        %v2293 = vlaneseq
        %v2294 = vshrl.u32 %v2293, 7
        %v2295 = vsub.s32 0, %v2294
        %v2296 = vrot.slane %v2291, %v2295
        %v2302 = vunpack.c.l.b16 %v2286
        %v2303 = vunpack.c.l.b16 %v2287
        %v2304 = vunpack.c.l.b16 %v2288
        %v2305 = vunpack.c.l.b16 %v2289
        %v2306 = vpack.c.b16 %v2303, %v2302
        %v2307 = vpack.c.b16 %v2305, %v2304
        %2310 = vmatprep.subr.bf16.mxu0 0
        %2311 = vmatpush1.bf16.msra.mxu0 %v2306
        %2312 = vmatprep.subr.bf16.mxu0 0
        %2313 = vmatpush1.bf16.msra.mxu0 %v2307
        %2314 = vmatprep.subr.bf16.mxu0 0
        %2315 = vmatpush1.bf16.msra.mxu0 0
        %2316 = vmatprep.subr.bf16.mxu0 0
        %2317 = vmatpush1.bf16.msra.mxu0 0
        %2318 = vmatprep.subr.bf16.mxu0 0
        %2319 = vmatpush1.bf16.msra.mxu0 0
        %2320 = vmatprep.subr.bf16.mxu0 0
        %2321 = vmatpush1.bf16.msra.mxu0 0
        %2322 = vmatprep.subr.bf16.mxu0 0
        %2323 = vmatpush1.bf16.msra.mxu0 0
        %2324 = vmatprep.subr.bf16.mxu0 0
        %2325 = vmatpush1.bf16.msra.mxu0 0
        %2326 = vmatprep.subr.bf16.mxu0 0
        %2327 = vmatpush1.bf16.msra.mxu0 0
        %2328 = vmatprep.subr.bf16.mxu0 0
        %2329 = vmatpush1.bf16.msra.mxu0 0
        %2330 = vmatprep.subr.bf16.mxu0 0
        %2331 = vmatpush1.bf16.msra.mxu0 0
        %2332 = vmatprep.subr.bf16.mxu0 0
        %2333 = vmatpush1.bf16.msra.mxu0 0
        %2334 = vmatprep.subr.bf16.mxu0 0
        %2335 = vmatpush1.bf16.msra.mxu0 0
        %2336 = vmatprep.subr.bf16.mxu0 0
        %2337 = vmatpush1.bf16.msra.mxu0 0
        %2338 = vmatprep.subr.bf16.mxu0 0
        %2339 = vmatpush1.bf16.msra.mxu0 0
        %2340 = vmatprep.subr.bf16.mxu0 0
        %2341 = vmatpush1.bf16.msra.mxu0 0
        %2342 = vmatprep.mubr.bf16.mxu0 0
        %2343 = vmatmul.mubr.bf16.gmra.mrb[0].mxu0 %v1525
        %v2344 = vpop.f32.mrb[0].mxu0
        %v2345 = vadd.f32 %v2296, %v2344
        %v2346 = vpop.f32.mrb[0].mxu0
        %v2347 = vpop.f32.mrb[0].mxu0
        %v2348 = vpop.f32.mrb[0].mxu0
        %2349 = vdwg.mxu0
        %v2350 = vmul.f32 %v2345, %v2345
        %v2351 = vmul.f32 %v2345, %v2350
        %v2352 = vmul.f32 %v2351, 0.044715
        %v2353 = vadd.f32 %v2345, %v2352
        %v2354 = vmul.f32 %v2353, 0.7978846
        %v2355 = vtanh.pop %v2354
        %v2356 = vadd.f32 %v2355, 1.0
        %v2357 = vmul.f32 %v2356, 0.5
        %v2358 = vmul.f32 %v2345, %v2357
        %v2359 = vpack.c.bf16 %v2358, %v2358
        %s2360 = scalar_lea.vmem %s19, 96
        %v2361 = vld [vmem:[%s2360] sm:$0xf]
        %v2362 = vld [vmem:[%s2360 + $0x4] sm:$0xf]
        %v2363 = vld [vmem:[%s2360 + $0x8] sm:$0xf]
        %v2364 = vld [vmem:[%s2360 + $0xc] sm:$0xf]
        %v2365 = vld [vmem:[%s2360 + $0x10] sm:$0xf]
        %v2366 = vld [vmem:[%s2360 + $0x14] sm:$0xf]
        %v2367 = vld [vmem:[%s2360 + $0x18] sm:$0xf]
        %v2368 = vld [vmem:[%s2360 + $0x1c] sm:$0xf]
        %s2369 = scalar_lea.vmem %s20, 3
        %v2370 = vld [vmem:[%s2369] sm:$0x1]
        %v2372 = vlaneseq
        %v2373 = vshrl.u32 %v2372, 7
        %v2374 = vsub.s32 0, %v2373
        %v2375 = vrot.slane %v2370, %v2374
        %v2385 = vunpack.c.l.b16 %v2361
        %v2386 = vunpack.c.l.b16 %v2362
        %v2387 = vunpack.c.l.b16 %v2363
        %v2388 = vunpack.c.l.b16 %v2364
        %v2389 = vunpack.c.l.b16 %v2365
        %v2390 = vunpack.c.l.b16 %v2366
        %v2391 = vunpack.c.l.b16 %v2367
        %v2392 = vunpack.c.l.b16 %v2368
        %v2393 = vpack.c.b16 %v2386, %v2385
        %v2394 = vpack.c.b16 %v2388, %v2387
        %v2395 = vpack.c.b16 %v2390, %v2389
        %v2396 = vpack.c.b16 %v2392, %v2391
        %v2402 = vsel %vm1904, %v2359, 0
        %2404 = vmatprep.subr.bf16.mxu0 0
        %2405 = vmatpush1.bf16.msra.mxu0 %v2393
        %2406 = vmatprep.subr.bf16.mxu0 0
        %2407 = vmatpush1.bf16.msra.mxu0 %v2394
        %2408 = vmatprep.subr.bf16.mxu0 0
        %2409 = vmatpush1.bf16.msra.mxu0 %v2395
        %2410 = vmatprep.subr.bf16.mxu0 0
        %2411 = vmatpush1.bf16.msra.mxu0 %v2396
        %2412 = vmatprep.subr.bf16.mxu0 0
        %2413 = vmatpush1.bf16.msra.mxu0 0
        %2414 = vmatprep.subr.bf16.mxu0 0
        %2415 = vmatpush1.bf16.msra.mxu0 0
        %2416 = vmatprep.subr.bf16.mxu0 0
        %2417 = vmatpush1.bf16.msra.mxu0 0
        %2418 = vmatprep.subr.bf16.mxu0 0
        %2419 = vmatpush1.bf16.msra.mxu0 0
        %2420 = vmatprep.subr.bf16.mxu0 0
        %2421 = vmatpush1.bf16.msra.mxu0 0
        %2422 = vmatprep.subr.bf16.mxu0 0
        %2423 = vmatpush1.bf16.msra.mxu0 0
        %2424 = vmatprep.subr.bf16.mxu0 0
        %2425 = vmatpush1.bf16.msra.mxu0 0
        %2426 = vmatprep.subr.bf16.mxu0 0
        %2427 = vmatpush1.bf16.msra.mxu0 0
        %2428 = vmatprep.subr.bf16.mxu0 0
        %2429 = vmatpush1.bf16.msra.mxu0 0
        %2430 = vmatprep.subr.bf16.mxu0 0
        %2431 = vmatpush1.bf16.msra.mxu0 0
        %2432 = vmatprep.subr.bf16.mxu0 0
        %2433 = vmatpush1.bf16.msra.mxu0 0
        %2434 = vmatprep.subr.bf16.mxu0 0
        %2435 = vmatpush1.bf16.msra.mxu0 0
        %2436 = vmatprep.mubr.bf16.mxu0 0
        %2437 = vmatmul.mubr.bf16.gmra.mrb[0].mxu0 %v2402
        %v2438 = vpop.f32.mrb[0].mxu0
        %v2439 = vadd.f32 %v2375, %v2438
        %v2440 = vpop.f32.mrb[0].mxu0
        %v2441 = vpop.f32.mrb[0].mxu0
        %v2442 = vpop.f32.mrb[0].mxu0
        %2443 = vdwg.mxu0
        %2444 = vset.pattern.permute.xlu0 3
        %2445 = vperm.xlu0 %2444, %v1791
        %v2446 = vpop.permute.xlu0 %2445
        %v2448 = vmul.f32 %v2446, %v2439
        %v2449 = vadd.f32 %v2284, %v2448
        %v2450 = vadd.f32 %v1470, %v2449
        %2451 = vst.msk [vmem:[%s647] sm:$0xff] %vm656, %v2450
        %s2452 = sand.u32 %s489, 1
        %s2453 = scalar_lea.sflag [#allocation3], %s2452
        %s2454 = sand.u32 %s489, 1
        %s2455 = smul.addr %s2454, 8
        %s2456 = scalar_lea.vmem [#allocation2], %s2455
        // Predicated region
        $region105: #{tpu_custom_call.1} parent=103 // pred_check
          %p2457 = pneg %p499
        $region106: #{tpu_custom_call.1} parent=103 // pred_check_branch
          %2459 = sbr.rel (%p2457) target = $region108
        $region107: #{tpu_custom_call.1} parent=103 // pred_region
          %s2461 = ssub.s32 128, 128
          %2462 = vsyncadd %s2453, %s2461
          %s2463 = smul.addr %s35, 128
          %s2464 = scalar_lea.hbm %s21, %s2463
          %s2466 = sshll.u32 %s2456, 4
          %s2467 = int_to_ptr.vmem [resolvable:$true] %s2466
          %2469 = dma.vmem_to_hbm [thread:$0]  %s2467, 128, %s2464, %s2453
        $region108: #{tpu_custom_call.1} parent=103 // pred_fallthru
          _
      $region104: #{tpu_custom_call.1} parent=5 // pred_fallthru
        _
      %p2470 = scmp.le.s32.totalorder 2, %s30
      // Predicated region
      $region109: #{tpu_custom_call.1} parent=5 // pred_check
        %p2471 = pneg %p2470
      $region110: #{tpu_custom_call.1} parent=5 // pred_check_branch
        %2473 = sbr.rel (%p2471) target = $region112
      $region111: #{tpu_custom_call.1} parent=5 // pred_region
        %s2474 = ssub.s32 %s30, 2
        // Predicated region
        $region113: #{tpu_custom_call.1} parent=111 // pred_check
          %p2475 = pneg %p505
        $region114: #{tpu_custom_call.1} parent=111 // pred_check_branch
          %2477 = sbr.rel (%p2475) target = $region116
        $region115: #{tpu_custom_call.1} parent=111 // pred_region
          %s2478 = sand.u32 %s490, 1
          %s2479 = scalar_lea.sflag [#allocation3], %s2478
          %s2480 = sand.u32 %s490, 1
          %s2481 = smul.addr %s2480, 8
          %s2482 = scalar_lea.vmem [#allocation2], %s2481
          %2483 = dma.done %s2479, 128
        $region116: #{tpu_custom_call.1} parent=111 // pred_fallthru
          _
      $region112: #{tpu_custom_call.1} parent=5 // pred_fallthru
        _
    $region6: #{tpu_custom_call.1} parent=1 // loop_footer
      %s34 = sadd.s32 1, %s30
    $region7: #{tpu_custom_call.1} parent=1 // loop_footer_branch
      %29 = sbr.rel target = $region3
    $region8: #{tpu_custom_call.1} parent=1 // loop_exit
      _
    %2484 = vsyncpa [#allocation3], 1
    %s2485 = scalar_lea.sflag [#allocation3], 1
    %2486 = vsyncpa %s2485, 1

</llo_original>
